<compile_context>
chip_gen: v5e
topology: v5e:2x2
jax: 0.10.0
libtpu: 0.0.40
codegen_flags: <defaults>
</compile_context>

<pallas_src>
import jax
import jax.numpy as jnp
from jax.experimental import pallas as pl
from jax.experimental.pallas import tpu as pltpu


def _mutation_energy_kernel(wt_ref, mut_ref, mask_ref,
                            wS_ref, wD_ref, b1_ref,
                            w2_ref, b2_ref, w3_ref, b3_ref,
                            w4we_ref, o_ref, acc_ref):
    li = pl.program_id(1)
    cdt = w2_ref.dtype                       # MXU input dtype (bf16 or f32)
    TL = wt_ref.shape[1]

    @pl.when(li == 0)
    def _():
        acc_ref[...] = jnp.zeros_like(acc_ref)

    wt = wt_ref[0]                           # (TL, D) f32
    mut = mut_ref[0]                         # (TL, D) f32

    # Symmetric / antisymmetric layer-1 inputs.  d = mut - wt is computed in
    # f32 first (cancellation-safe), then cast for the MXU.
    s = (mut + wt).astype(cdt)
    d = (mut - wt).astype(cdt)

    Sc = jnp.dot(s, wS_ref[...], preferred_element_type=jnp.float32)   # (TL, D)
    Dc = jnp.dot(d, wD_ref[...], preferred_element_type=jnp.float32)   # (TL, D)
    b1 = b1_ref[...]                                                    # (1, D)
    pre_a = Sc + Dc + b1        # layer-1 preact of mlp(mut, wt)
    pre_b = Sc - Dc + b1        # layer-1 preact of mlp(wt, mut)

    # Row-stack the two orderings along sublanes -> one fat chain for layers 2/3.
    h = jnp.maximum(jnp.concatenate([pre_a, pre_b], axis=0), 0.0)       # (2TL, D)
    h = jnp.dot(h.astype(cdt), w2_ref[...],
                preferred_element_type=jnp.float32) + b2_ref[...]
    h = jnp.maximum(h, 0.0)
    h = jnp.dot(h.astype(cdt), w3_ref[...],
                preferred_element_type=jnp.float32) + b3_ref[...]
    h = jnp.maximum(h, 0.0)

    diff = h[:TL] - h[TL:]                                               # (TL, D) f32

    # Masked L-reduction as an MXU contraction: (1, TL) @ (TL, D) -> (1, D),
    # accumulated across L grid steps in f32 scratch (single full-block update).
    acc_ref[...] += jnp.dot(mask_ref[0], diff,
                            preferred_element_type=jnp.float32)

    @pl.when(li == pl.num_programs(1) - 1)
    def _():
        # Deferred energy head: b4 cancels and w4 is folded into w4we = w4 @ we,
        # so a single (1, D) @ (D, E) projection per batch row, written once.
        o_ref[0] = jnp.dot(acc_ref[...], w4we_ref[...],
                           preferred_element_type=jnp.float32)


def _pick_tile_l(L, D, vmem_budget_bytes=8 * 1024 * 1024):
    """VMEM-budget-derived L tile (fewer, fatter grid steps; overhead-bound).

    Rough per-row cost: 2 f32 feat inputs x 2 pipeline buffers plus ~6 f32
    row-stacked intermediates of the 3-layer chain, all x D lanes.  The 8 MiB
    budget stays below every chip's default scoped VMEM (16 MiB on v5e,
    32 MiB on v6e/v7x)."""
    bytes_per_row = D * 4 * (2 * 2 + 2 * 6)
    t = int(vmem_budget_bytes // max(bytes_per_row, 1))
    if t >= L:
        return L
    t = max(128, (t // 128) * 128)
    while t > 128 and L % t != 0:
        t -= 128
    return t if L % t == 0 else L


def mutation_energy_forward(feat_wt, feat_mut, mask, params, energy_list,
                            tile_l=None, compute_dtype=jnp.bfloat16):
    """Returns {term: (N,) energy} like MutationEnergyOutputs.forward (get_loss=False)."""
    N, L, D = feat_wt.shape
    E = len(energy_list)

    if tile_l is None:
        tile_l = _pick_tile_l(L, D)
    assert L % tile_l == 0, (L, tile_l)
    assert tile_l % 8 == 0, tile_l   # sublane alignment for the ordering stack

    if mask is None:
        mask_row = jnp.ones((N, 1, L), jnp.float32)
    else:
        mask_row = mask.astype(jnp.float32).reshape(N, 1, L)

    w1, b1, w2, b2, w3, b3, w4, b4, we = params

    # Host-side algebraic preprocessing (tiny, done once):
    #   * split w1 and take sym/antisym halves -> layer 1 is 2 matmuls on (s, d)
    #   * b4 cancels in mlp(mut,wt)-mlp(wt,mut); fold w4 into the energy head
    w1a = w1[:D]
    w1b = w1[D:]
    wS = (0.5 * (w1a + w1b)).astype(compute_dtype)       # (D, D)
    wD = (0.5 * (w1a - w1b)).astype(compute_dtype)       # (D, D)
    w2c = w2.astype(compute_dtype)
    w3c = w3.astype(compute_dtype)
    w4we = (w4 @ we).astype(jnp.float32)                 # (D, E)
    b1r = b1.reshape(1, D).astype(jnp.float32)
    b2r = b2.reshape(1, D).astype(jnp.float32)
    b3r = b3.reshape(1, D).astype(jnp.float32)

    grid = (N, L // tile_l)

    def wspec(shape):
        nd = len(shape)
        return pl.BlockSpec(shape, lambda n, li, _nd=nd: (0,) * _nd)

    # NOTE: for scaled-up configs, the constant weight specs could additionally
    # use pipeline_mode=pl.Buffered(1) to avoid double-buffering them; at D=32
    # the saving is negligible so we keep the default.
    out3 = pl.pallas_call(
        _mutation_energy_kernel,
        out_shape=jax.ShapeDtypeStruct((N, 1, E), jnp.float32),
        grid_spec=pltpu.PrefetchScalarGridSpec(
            num_scalar_prefetch=0,
            grid=grid,
            in_specs=[
                pl.BlockSpec((1, tile_l, D), lambda n, li: (n, li, 0)),   # feat_wt
                pl.BlockSpec((1, tile_l, D), lambda n, li: (n, li, 0)),   # feat_mut
                pl.BlockSpec((1, 1, tile_l), lambda n, li: (n, 0, li)),   # mask row
                wspec(wS.shape), wspec(wD.shape), wspec(b1r.shape),
                wspec(w2c.shape), wspec(b2r.shape),
                wspec(w3c.shape), wspec(b3r.shape),
                wspec(w4we.shape),
            ],
            out_specs=pl.BlockSpec((1, 1, E), lambda n, li: (n, 0, 0)),
            scratch_shapes=[pltpu.VMEM((1, D), jnp.float32)],
        ),
        compiler_params=pltpu.CompilerParams(
            dimension_semantics=("parallel", "arbitrary"),
            vmem_limit_bytes=32 * 1024 * 1024),
    )(feat_wt.astype(jnp.float32), feat_mut.astype(jnp.float32), mask_row,
      wS, wD, b1r, w2c, b2r, w3c, b3r, w4we)

    energy = out3[:, 0, :]
    return {term: energy[:, idx] for idx, term in enumerate(energy_list)}


def init_params(key, feat_dim, num_energies):
    """Deterministic synthetic parameters.

    Weight layout is (in, out) so the math is x @ W; this is the transpose of
    PyTorch's nn.Linear.weight (out, in)."""
    ks = jax.random.split(key, 9)
    scale = 0.1
    w1 = scale * jax.random.normal(ks[0], (2 * feat_dim, feat_dim), jnp.float32)
    b1 = scale * jax.random.normal(ks[1], (feat_dim,), jnp.float32)
    w2 = scale * jax.random.normal(ks[2], (feat_dim, feat_dim), jnp.float32)
    b2 = scale * jax.random.normal(ks[3], (feat_dim,), jnp.float32)
    w3 = scale * jax.random.normal(ks[4], (feat_dim, feat_dim), jnp.float32)
    b3 = scale * jax.random.normal(ks[5], (feat_dim,), jnp.float32)
    w4 = scale * jax.random.normal(ks[6], (feat_dim, feat_dim), jnp.float32)
    b4 = scale * jax.random.normal(ks[7], (feat_dim,), jnp.float32)
    we = scale * jax.random.normal(ks[8], (feat_dim, num_energies), jnp.float32)
    return (w1, b1, w2, b2, w3, b3, w4, b4, we)


def _reference_forward(feat_wt, feat_mut, mask, params, energy_list):
    """Pure-JAX f32 reference matching the PyTorch module exactly."""
    w1, b1, w2, b2, w3, b3, w4, b4, we = params

    def mlp(a, b):
        x = jnp.concatenate([a, b], axis=-1)
        h = jnp.maximum(x @ w1 + b1, 0.0)
        h = jnp.maximum(h @ w2 + b2, 0.0)
        h = jnp.maximum(h @ w3 + b3, 0.0)
        return h @ w4 + b4

    feat = mlp(feat_mut, feat_wt) - mlp(feat_wt, feat_mut)
    energy = feat @ we
    if mask is not None:
        energy = energy * mask[..., None]
    energy = energy.sum(axis=1)
    return {t: energy[:, i] for i, t in enumerate(energy_list)}


if __name__ == "__main__":
    N, L, D = 2, 512, 32
    energy_list = ["ddG", "dTm", "binding"]

    key = jax.random.PRNGKey(0)
    k_wt, k_mut, k_mask, k_par = jax.random.split(key, 4)

    feat_wt = jax.random.normal(k_wt, (N, L, D), jnp.float32)
    feat_mut = jax.random.normal(k_mut, (N, L, D), jnp.float32)
    mask = (jax.random.uniform(k_mask, (N, L)) > 0.3).astype(jnp.float32)
    params = init_params(k_par, D, len(energy_list))

    energy_dict = mutation_energy_forward(feat_wt, feat_mut, mask, params,
                                          energy_list)
    jax.block_until_ready(energy_dict)

    ref_dict = _reference_forward(feat_wt, feat_mut, mask, params, energy_list)

    # Scale-relative check (bf16 matmul inputs => ~1% expected error).
    max_err, scale = 0.0, 0.0
    for term in energy_list:
        max_err = max(max_err,
                      float(jnp.max(jnp.abs(energy_dict[term] - ref_dict[term]))))
        scale = max(scale, float(jnp.max(jnp.abs(ref_dict[term]))))
    assert max_err <= 0.05 * max(scale, 1.0), (max_err, scale)

    print("KERNEL_OK")
</pallas_src>

<mosaic_0001>
module attributes {stable_mosaic.version = 11 : i64} {
  func.func @_mutation_energy_kernel(%arg0: i32, %arg1: i32, %arg2: memref<1x512x32xf32, #tpu.memory_space<vmem>>, %arg3: memref<1x512x32xf32, #tpu.memory_space<vmem>>, %arg4: memref<1x1x512xf32, #tpu.memory_space<vmem>>, %arg5: memref<32x32xbf16, #tpu.memory_space<vmem>>, %arg6: memref<32x32xbf16, #tpu.memory_space<vmem>>, %arg7: memref<1x32xf32, #tpu.memory_space<vmem>>, %arg8: memref<32x32xbf16, #tpu.memory_space<vmem>>, %arg9: memref<1x32xf32, #tpu.memory_space<vmem>>, %arg10: memref<32x32xbf16, #tpu.memory_space<vmem>>, %arg11: memref<1x32xf32, #tpu.memory_space<vmem>>, %arg12: memref<32x3xf32, #tpu.memory_space<vmem>>, %arg13: memref<1x1x3xf32, #tpu.memory_space<vmem>>, %arg14: memref<1x32xf32, #tpu.memory_space<vmem>>) attributes {dimension_semantics = [#tpu.dimension_semantics<parallel>, #tpu.dimension_semantics<arbitrary>], iteration_bounds = array<i64: 2, 1>, scalar_prefetch = 0 : i64, scratch_operands = 1 : i64, tpu.core_type = #tpu.core_type<tc>, window_params = [{transform_indices = @transform_0, window_bounds = array<i64: 1, 512, 32>}, {transform_indices = @transform_1, window_bounds = array<i64: 1, 512, 32>}, {transform_indices = @transform_2, window_bounds = array<i64: 1, 1, 512>}, {pipeline_mode = #tpu.pipeline_mode<synchronous>, transform_indices = @transform_3, window_bounds = array<i64: 32, 32>}, {pipeline_mode = #tpu.pipeline_mode<synchronous>, transform_indices = @transform_4, window_bounds = array<i64: 32, 32>}, {pipeline_mode = #tpu.pipeline_mode<synchronous>, transform_indices = @transform_5, window_bounds = array<i64: 1, 32>}, {pipeline_mode = #tpu.pipeline_mode<synchronous>, transform_indices = @transform_6, window_bounds = array<i64: 32, 32>}, {pipeline_mode = #tpu.pipeline_mode<synchronous>, transform_indices = @transform_7, window_bounds = array<i64: 1, 32>}, {pipeline_mode = #tpu.pipeline_mode<synchronous>, transform_indices = @transform_8, window_bounds = array<i64: 32, 32>}, {pipeline_mode = #tpu.pipeline_mode<synchronous>, transform_indices = @transform_9, window_bounds = array<i64: 1, 32>}, {pipeline_mode = #tpu.pipeline_mode<synchronous>, transform_indices = @transform_10, window_bounds = array<i64: 32, 3>}, {transform_indices = @transform_11, window_bounds = array<i64: 1, 1, 3>}]} {
    %c0_i32 = arith.constant 0 : i32
    %0 = arith.cmpi eq, %arg1, %c0_i32 : i32
    %1 = arith.extui %0 : i1 to i32
    %c0_i32_0 = arith.constant 0 : i32
    %2 = arith.cmpi ne, %1, %c0_i32_0 : i32
    scf.if %2 {
      %cst_36 = arith.constant 0.000000e+00 : f32
      %53 = vector.broadcast %cst_36 : f32 to vector<1x32xf32>
      %c0_37 = arith.constant 0 : index
      %c0_38 = arith.constant 0 : index
      %54 = vector.load %arg14[%c0_37, %c0_38] : memref<1x32xf32, #tpu.memory_space<vmem>>, vector<1x32xf32>
      tpu.vector_store %arg14[%c0_37, %c0_38], %53 {strides = array<i32>} : memref<1x32xf32, #tpu.memory_space<vmem>>, vector<1x32xf32>,
    } else {
    }
    %c0 = arith.constant 0 : index
    %c0_1 = arith.constant 0 : index
    %c0_2 = arith.constant 0 : index
    %3 = vector.load %arg2[%c0, %c0_1, %c0_2] : memref<1x512x32xf32, #tpu.memory_space<vmem>>, vector<1x512x32xf32>
    %4 = vector.shape_cast %3 : vector<1x512x32xf32> to vector<512x32xf32>
    %c0_3 = arith.constant 0 : index
    %c0_4 = arith.constant 0 : index
    %c0_5 = arith.constant 0 : index
    %5 = vector.load %arg3[%c0_3, %c0_4, %c0_5] : memref<1x512x32xf32, #tpu.memory_space<vmem>>, vector<1x512x32xf32>
    %6 = vector.shape_cast %5 : vector<1x512x32xf32> to vector<512x32xf32>
    %7 = arith.addf %6, %4 : vector<512x32xf32>
    %8 = arith.truncf %7 : vector<512x32xf32> to vector<512x32xbf16>
    %9 = arith.subf %6, %4 : vector<512x32xf32>
    %10 = arith.truncf %9 : vector<512x32xf32> to vector<512x32xbf16>
    %c0_6 = arith.constant 0 : index
    %c0_7 = arith.constant 0 : index
    %11 = vector.load %arg5[%c0_6, %c0_7] : memref<32x32xbf16, #tpu.memory_space<vmem>>, vector<32x32xbf16>
    %cst = arith.constant dense<0.000000e+00> : vector<512x32xf32>
    %12 = tpu.matmul %8, %11, %cst {dimension_numbers = #tpu.dot_dimension_numbers<[1], [0], [0], [1], [0, 0, 1, 1], [], []>} : vector<512x32xbf16>, vector<32x32xbf16>, vector<512x32xf32> -> vector<512x32xf32>
    %c0_8 = arith.constant 0 : index
    %c0_9 = arith.constant 0 : index
    %13 = vector.load %arg6[%c0_8, %c0_9] : memref<32x32xbf16, #tpu.memory_space<vmem>>, vector<32x32xbf16>
    %cst_10 = arith.constant dense<0.000000e+00> : vector<512x32xf32>
    %14 = tpu.matmul %10, %13, %cst_10 {dimension_numbers = #tpu.dot_dimension_numbers<[1], [0], [0], [1], [0, 0, 1, 1], [], []>} : vector<512x32xbf16>, vector<32x32xbf16>, vector<512x32xf32> -> vector<512x32xf32>
    %c0_11 = arith.constant 0 : index
    %c0_12 = arith.constant 0 : index
    %15 = vector.load %arg7[%c0_11, %c0_12] : memref<1x32xf32, #tpu.memory_space<vmem>>, vector<1x32xf32>
    %16 = arith.addf %12, %14 : vector<512x32xf32>
    %17 = vector.broadcast %15 : vector<1x32xf32> to vector<512x32xf32>
    %18 = arith.addf %16, %17 : vector<512x32xf32>
    %19 = arith.subf %12, %14 : vector<512x32xf32>
    %20 = vector.broadcast %15 : vector<1x32xf32> to vector<512x32xf32>
    %21 = arith.addf %19, %20 : vector<512x32xf32>
    %22 = tpu.concatenate %18, %21 in 0 : vector<512x32xf32>, vector<512x32xf32> -> vector<1024x32xf32>
    %cst_13 = arith.constant 0.000000e+00 : f32
    %23 = vector.broadcast %cst_13 : f32 to vector<1024x32xf32>
    %24 = arith.maximumf %22, %23 : vector<1024x32xf32>
    %25 = arith.truncf %24 : vector<1024x32xf32> to vector<1024x32xbf16>
    %c0_14 = arith.constant 0 : index
    %c0_15 = arith.constant 0 : index
    %26 = vector.load %arg8[%c0_14, %c0_15] : memref<32x32xbf16, #tpu.memory_space<vmem>>, vector<32x32xbf16>
    %cst_16 = arith.constant dense<0.000000e+00> : vector<1024x32xf32>
    %27 = tpu.matmul %25, %26, %cst_16 {dimension_numbers = #tpu.dot_dimension_numbers<[1], [0], [0], [1], [0, 0, 1, 1], [], []>} : vector<1024x32xbf16>, vector<32x32xbf16>, vector<1024x32xf32> -> vector<1024x32xf32>
    %c0_17 = arith.constant 0 : index
    %c0_18 = arith.constant 0 : index
    %28 = vector.load %arg9[%c0_17, %c0_18] : memref<1x32xf32, #tpu.memory_space<vmem>>, vector<1x32xf32>
    %29 = vector.broadcast %28 : vector<1x32xf32> to vector<1024x32xf32>
    %30 = arith.addf %27, %29 : vector<1024x32xf32>
    %cst_19 = arith.constant 0.000000e+00 : f32
    %31 = vector.broadcast %cst_19 : f32 to vector<1024x32xf32>
    %32 = arith.maximumf %30, %31 : vector<1024x32xf32>
    %33 = arith.truncf %32 : vector<1024x32xf32> to vector<1024x32xbf16>
    %c0_20 = arith.constant 0 : index
    %c0_21 = arith.constant 0 : index
    %34 = vector.load %arg10[%c0_20, %c0_21] : memref<32x32xbf16, #tpu.memory_space<vmem>>, vector<32x32xbf16>
    %cst_22 = arith.constant dense<0.000000e+00> : vector<1024x32xf32>
    %35 = tpu.matmul %33, %34, %cst_22 {dimension_numbers = #tpu.dot_dimension_numbers<[1], [0], [0], [1], [0, 0, 1, 1], [], []>} : vector<1024x32xbf16>, vector<32x32xbf16>, vector<1024x32xf32> -> vector<1024x32xf32>
    %c0_23 = arith.constant 0 : index
    %c0_24 = arith.constant 0 : index
    %36 = vector.load %arg11[%c0_23, %c0_24] : memref<1x32xf32, #tpu.memory_space<vmem>>, vector<1x32xf32>
    %37 = vector.broadcast %36 : vector<1x32xf32> to vector<1024x32xf32>
    %38 = arith.addf %35, %37 : vector<1024x32xf32>
    %cst_25 = arith.constant 0.000000e+00 : f32
    %39 = vector.broadcast %cst_25 : f32 to vector<1024x32xf32>
    %40 = arith.maximumf %38, %39 : vector<1024x32xf32>
    %41 = vector.extract_strided_slice %40 {offsets = [0, 0], sizes = [512, 32], strides = [1, 1]} : vector<1024x32xf32> to vector<512x32xf32>
    %42 = vector.extract_strided_slice %40 {offsets = [512, 0], sizes = [512, 32], strides = [1, 1]} : vector<1024x32xf32> to vector<512x32xf32>
    %43 = arith.subf %41, %42 : vector<512x32xf32>
    %c0_26 = arith.constant 0 : index
    %c0_27 = arith.constant 0 : index
    %44 = vector.load %arg14[%c0_26, %c0_27] : memref<1x32xf32, #tpu.memory_space<vmem>>, vector<1x32xf32>
    %c0_28 = arith.constant 0 : index
    %c0_29 = arith.constant 0 : index
    %c0_30 = arith.constant 0 : index
    %45 = vector.load %arg4[%c0_28, %c0_29, %c0_30] : memref<1x1x512xf32, #tpu.memory_space<vmem>>, vector<1x1x512xf32>
    %46 = vector.shape_cast %45 : vector<1x1x512xf32> to vector<1x512xf32>
    %cst_31 = arith.constant dense<0.000000e+00> : vector<1x32xf32>
    %47 = tpu.matmul %46, %43, %cst_31 {dimension_numbers = #tpu.dot_dimension_numbers<[1], [0], [0], [1], [0, 0, 1, 1], [], []>} : vector<1x512xf32>, vector<512x32xf32>, vector<1x32xf32> -> vector<1x32xf32>
    %48 = arith.addf %44, %47 : vector<1x32xf32>
    %c0_32 = arith.constant 0 : index
    %c0_33 = arith.constant 0 : index
    %49 = vector.load %arg14[%c0_32, %c0_33] : memref<1x32xf32, #tpu.memory_space<vmem>>, vector<1x32xf32>
    tpu.vector_store %arg14[%c0_32, %c0_33], %48 {strides = array<i32>} : memref<1x32xf32, #tpu.memory_space<vmem>>, vector<1x32xf32>,
    %c0_i32_34 = arith.constant 0 : i32
    %50 = arith.cmpi eq, %arg1, %c0_i32_34 : i32
    %51 = arith.extui %50 : i1 to i32
    %c0_i32_35 = arith.constant 0 : i32
    %52 = arith.cmpi ne, %51, %c0_i32_35 : i32
    scf.if %52 {
      %c0_36 = arith.constant 0 : index
      %c0_37 = arith.constant 0 : index
      %53 = vector.load %arg14[%c0_36, %c0_37] : memref<1x32xf32, #tpu.memory_space<vmem>>, vector<1x32xf32>
      %c0_38 = arith.constant 0 : index
      %c0_39 = arith.constant 0 : index
      %54 = vector.load %arg12[%c0_38, %c0_39] : memref<32x3xf32, #tpu.memory_space<vmem>>, vector<32x3xf32>
      %cst_40 = arith.constant dense<0.000000e+00> : vector<1x3xf32>
      %55 = tpu.matmul %53, %54, %cst_40 {dimension_numbers = #tpu.dot_dimension_numbers<[1], [0], [0], [1], [0, 0, 1, 1], [], []>} : vector<1x32xf32>, vector<32x3xf32>, vector<1x3xf32> -> vector<1x3xf32>
      %c0_41 = arith.constant 0 : index
      %c0_42 = arith.constant 0 : index
      %c0_43 = arith.constant 0 : index
      %56 = vector.load %arg13[%c0_41, %c0_42, %c0_43] : memref<1x1x3xf32, #tpu.memory_space<vmem>>, vector<1x1x3xf32>
      %57 = vector.shape_cast %56 : vector<1x1x3xf32> to vector<1x3xf32>
      %58 = vector.shape_cast %55 : vector<1x3xf32> to vector<1x1x3xf32>
      tpu.vector_store %arg13[%c0_41, %c0_42, %c0_43], %58 {strides = array<i32>} : memref<1x1x3xf32, #tpu.memory_space<vmem>>, vector<1x1x3xf32>,
    } else {
    }
    return
  }
  func.func @transform_0(%arg0: i32, %arg1: i32) -> (i32, i32, i32) {
    %c0_i32 = arith.constant 0 : i32
    %c0_i32_0 = arith.constant 0 : i32
    return %arg0, %arg1, %c0_i32 : i32, i32, i32
  }
  func.func @transform_1(%arg0: i32, %arg1: i32) -> (i32, i32, i32) {
    %c0_i32 = arith.constant 0 : i32
    %c0_i32_0 = arith.constant 0 : i32
    return %arg0, %arg1, %c0_i32 : i32, i32, i32
  }
  func.func @transform_2(%arg0: i32, %arg1: i32) -> (i32, i32, i32) {
    %c0_i32 = arith.constant 0 : i32
    %c0_i32_0 = arith.constant 0 : i32
    return %arg0, %c0_i32, %arg1 : i32, i32, i32
  }
  func.func @transform_3(%arg0: i32, %arg1: i32) -> (i32, i32) {
    %c0_i32 = arith.constant 0 : i32
    %c0_i32_0 = arith.constant 0 : i32
    %c0_i32_1 = arith.constant 0 : i32
    return %c0_i32, %c0_i32_0 : i32, i32
  }
  func.func @transform_4(%arg0: i32, %arg1: i32) -> (i32, i32) {
    %c0_i32 = arith.constant 0 : i32
    %c0_i32_0 = arith.constant 0 : i32
    %c0_i32_1 = arith.constant 0 : i32
    return %c0_i32, %c0_i32_0 : i32, i32
  }
  func.func @transform_5(%arg0: i32, %arg1: i32) -> (i32, i32) {
    %c0_i32 = arith.constant 0 : i32
    %c0_i32_0 = arith.constant 0 : i32
    %c0_i32_1 = arith.constant 0 : i32
    return %c0_i32, %c0_i32_0 : i32, i32
  }
  func.func @transform_6(%arg0: i32, %arg1: i32) -> (i32, i32) {
    %c0_i32 = arith.constant 0 : i32
    %c0_i32_0 = arith.constant 0 : i32
    %c0_i32_1 = arith.constant 0 : i32
    return %c0_i32, %c0_i32_0 : i32, i32
  }
  func.func @transform_7(%arg0: i32, %arg1: i32) -> (i32, i32) {
    %c0_i32 = arith.constant 0 : i32
    %c0_i32_0 = arith.constant 0 : i32
    %c0_i32_1 = arith.constant 0 : i32
    return %c0_i32, %c0_i32_0 : i32, i32
  }
  func.func @transform_8(%arg0: i32, %arg1: i32) -> (i32, i32) {
    %c0_i32 = arith.constant 0 : i32
    %c0_i32_0 = arith.constant 0 : i32
    %c0_i32_1 = arith.constant 0 : i32
    return %c0_i32, %c0_i32_0 : i32, i32
  }
  func.func @transform_9(%arg0: i32, %arg1: i32) -> (i32, i32) {
    %c0_i32 = arith.constant 0 : i32
    %c0_i32_0 = arith.constant 0 : i32
    %c0_i32_1 = arith.constant 0 : i32
    return %c0_i32, %c0_i32_0 : i32, i32
  }
  func.func @transform_10(%arg0: i32, %arg1: i32) -> (i32, i32) {
    %c0_i32 = arith.constant 0 : i32
    %c0_i32_0 = arith.constant 0 : i32
    %c0_i32_1 = arith.constant 0 : i32
    return %c0_i32, %c0_i32_0 : i32, i32
  }
  func.func @transform_11(%arg0: i32, %arg1: i32) -> (i32, i32, i32) {
    %c0_i32 = arith.constant 0 : i32
    %c0_i32_0 = arith.constant 0 : i32
    %c0_i32_1 = arith.constant 0 : i32
    return %arg0, %c0_i32, %c0_i32_0 : i32, i32, i32
  }
}

</mosaic_0001>

<llo_original>
// kernel: tpu_custom_call.1
$region0: #{tpu_custom_call.1}
  #allocation0 [shape = 'u32[]', space=smem, size = 0x4, offset = 0x4, fixed_abs, tag = 'smem constant byte address 0x4 - core index']
  #allocation1 [shape = 'u32[72,128]{1,0:T(1,128)}', space=vmem, size = 0x9000, scoped, tag = 'internal scratch']
  #allocation2 [shape = 'f32[1,32]{1,0:T(1,128)}', space=vmem, size = 0x200, scoped, tag = 'scratch operand']
  %s0 = inlined_call_operand.vmem [shape: f32[2,512,32], index: 0, kind: input, shape index: {}]
  %s1 = inlined_call_operand.vmem [shape: f32[2,512,32], index: 1, kind: input, shape index: {}]
  %s2 = inlined_call_operand.vmem [shape: f32[2,1,512], index: 2, kind: input, shape index: {}]
  %s3 = inlined_call_operand.vmem [shape: bf16[32,32], index: 3, kind: input, shape index: {}]
  %s4 = inlined_call_operand.vmem [shape: bf16[32,32], index: 4, kind: input, shape index: {}]
  %s5 = inlined_call_operand.vmem [shape: f32[1,32], index: 5, kind: input, shape index: {}]
  %s6 = inlined_call_operand.vmem [shape: bf16[32,32], index: 6, kind: input, shape index: {}]
  %s7 = inlined_call_operand.vmem [shape: f32[1,32], index: 7, kind: input, shape index: {}]
  %s8 = inlined_call_operand.vmem [shape: bf16[32,32], index: 8, kind: input, shape index: {}]
  %s9 = inlined_call_operand.vmem [shape: f32[1,32], index: 9, kind: input, shape index: {}]
  %s10 = inlined_call_operand.vmem [shape: f32[32,3], index: 10, kind: input, shape index: {}]
  %s11 = inlined_call_operand.hbm [shape: f32[2,1,3], index: 11, kind: output, shape index: {}]
  %s12 = sld [smem:[#allocation0]]
  $region85: #{tpu_custom_call.1} parent=0
    _
  %s14 = ssub.s32 1, %s12
  %s15 = scalar_select 0, %s14, %s12
  $region1: #{tpu_custom_call.1} parent=0
    #allocation3 [shape = 'u8[1024]{0}', space=vmem, size = 0x400, scoped, tag = 'output window, operand 0']
    #allocation4 [shape = 's32[2]{0}', space=sflag, size = 0x8, scoped, tag = 'scoped memory for tpu_custom_call.1']
    %16 = vsyncpa [#allocation4], 0
    %s17 = scalar_lea.sflag [#allocation4], 1
    %18 = vsyncpa %s17, 0
    loop: start=0, step=1, limit=4
    $region2: #{tpu_custom_call.1} parent=1 // loop_pre_header
      _
    $region3: #{tpu_custom_call.1} parent=1 // loop_header
      %s20 = sphi 0, %s24
      %p21 = scmp.ge.s32.totalorder %s20, 4
      %s27 = sphi 0, %s39
      %s28 = sphi 0, %s35
      %s29 = sphi 0, %s27
      %s30 = sphi 0, %s28
      %s31 = sphi 0, %s29
      %s32 = sphi 0, %s30
      %s44 = sphi 0, %s46
      %s47 = sphi 0, %s44
      %s48 = sphi 0, %s47
      %s64 = sphi 0, %s48
      %s72 = sphi 0, %s74
      %s75 = sphi 0, %s72
      %s76 = sphi 0, %s75
      %s92 = sphi 0, %s76
      %s100 = sphi 0, %s102
      %s103 = sphi 0, %s100
      %s104 = sphi 0, %s103
      %s120 = sphi 0, %s104
      %s124 = sphi 0, %s124
      %s126 = sphi 0, %s124
      %s127 = sphi 0, %s126
      %s141 = sphi 0, %s127
      %s145 = sphi 0, %s145
      %s147 = sphi 0, %s145
      %s148 = sphi 0, %s147
      %s162 = sphi 0, %s148
      %s166 = sphi 0, %s166
      %s168 = sphi 0, %s166
      %s169 = sphi 0, %s168
      %s183 = sphi 0, %s169
      %s187 = sphi 0, %s187
      %s189 = sphi 0, %s187
      %s190 = sphi 0, %s189
      %s204 = sphi 0, %s190
      %s208 = sphi 0, %s208
      %s210 = sphi 0, %s208
      %s211 = sphi 0, %s210
      %s225 = sphi 0, %s211
      %s229 = sphi 0, %s229
      %s231 = sphi 0, %s229
      %s232 = sphi 0, %s231
      %s246 = sphi 0, %s232
      %s250 = sphi 0, %s250
      %s252 = sphi 0, %s250
      %s253 = sphi 0, %s252
      %s267 = sphi 0, %s253
      %s271 = sphi 0, %s271
      %s273 = sphi 0, %s271
      %s274 = sphi 0, %s273
      %s288 = sphi 0, %s274
      %s294 = sphi 0, %s296
      %s297 = sphi 0, %s294
      %s298 = sphi 0, %s297
      %s314 = sphi 0, %s298
    $region4: #{tpu_custom_call.1} parent=1 // loop_header_branch
      %23 = sbr.rel (%p21) target = $region8
    $region5: #{tpu_custom_call.1} parent=1 // loop_body
      %s25 = ssub.s32 %s20, 1
      %s26 = ssub.s32 %s20, 2
      %s33 = sadd.s32 1, %s28
      %p34 = scmp.ge.s32.totalorder %s33, 1
      %s35 = scalar_select %p34, 0, %s33
      %s36 = sadd.s32 1, %s27
      %s37 = scalar_select %p34, %s36, %s27
      %p38 = scmp.ge.s32.totalorder %s37, 2
      %s39 = scalar_select %p38, 0, %s37
      %s40 = ssub.s32 %s27, %s39
      %s41 = ssub.s32 %s28, %s35
      %s42 = sor.u32 %s40, %s41
      %p43 = scmp.eq.s32.totalorder %s42, 0
      %s45 = sadd.s32 %s44, 1
      %s46 = scalar_select %p43, %s44, %s45
      %p49 = pneg %p43
      %p50 = scmp.eq.s32.totalorder %s20, 1
      %p51 = por %p49, %p50
      %p52 = scmp.ne.s32.totalorder %s44, %s47
      %p53 = scmp.eq.s32.totalorder %s20, 0
      %p54 = por %p52, %p53
      %p55 = scmp.ne.s32.totalorder %s44, %s47
      %p56 = scmp.eq.s32.totalorder %s25, 1
      %p57 = por %p55, %p56
      %p58 = scmp.ne.s32.totalorder %s47, %s48
      %p59 = scmp.eq.s32.totalorder %s25, 0
      %p60 = por %p58, %p59
      %p61 = scmp.ne.s32.totalorder %s47, %s48
      %p62 = scmp.eq.s32.totalorder %s26, 1
      %p63 = por %p61, %p62
      %p65 = scmp.ne.s32.totalorder %s48, %s64
      %p66 = scmp.eq.s32.totalorder %s26, 0
      %p67 = por %p65, %p66
      %s68 = ssub.s32 %s27, %s39
      %s69 = ssub.s32 %s28, %s35
      %s70 = sor.u32 %s68, %s69
      %p71 = scmp.eq.s32.totalorder %s70, 0
      %s73 = sadd.s32 %s72, 1
      %s74 = scalar_select %p71, %s72, %s73
      %p77 = pneg %p71
      %p78 = scmp.eq.s32.totalorder %s20, 1
      %p79 = por %p77, %p78
      %p80 = scmp.ne.s32.totalorder %s72, %s75
      %p81 = scmp.eq.s32.totalorder %s20, 0
      %p82 = por %p80, %p81
      %p83 = scmp.ne.s32.totalorder %s72, %s75
      %p84 = scmp.eq.s32.totalorder %s25, 1
      %p85 = por %p83, %p84
      %p86 = scmp.ne.s32.totalorder %s75, %s76
      %p87 = scmp.eq.s32.totalorder %s25, 0
      %p88 = por %p86, %p87
      %p89 = scmp.ne.s32.totalorder %s75, %s76
      %p90 = scmp.eq.s32.totalorder %s26, 1
      %p91 = por %p89, %p90
      %p93 = scmp.ne.s32.totalorder %s76, %s92
      %p94 = scmp.eq.s32.totalorder %s26, 0
      %p95 = por %p93, %p94
      %s96 = ssub.s32 %s27, %s39
      %s97 = ssub.s32 %s28, %s35
      %s98 = sor.u32 %s96, %s97
      %p99 = scmp.eq.s32.totalorder %s98, 0
      %s101 = sadd.s32 %s100, 1
      %s102 = scalar_select %p99, %s100, %s101
      %p105 = pneg %p99
      %p106 = scmp.eq.s32.totalorder %s20, 1
      %p107 = por %p105, %p106
      %p108 = scmp.ne.s32.totalorder %s100, %s103
      %p109 = scmp.eq.s32.totalorder %s20, 0
      %p110 = por %p108, %p109
      %p111 = scmp.ne.s32.totalorder %s100, %s103
      %p112 = scmp.eq.s32.totalorder %s25, 1
      %p113 = por %p111, %p112
      %p114 = scmp.ne.s32.totalorder %s103, %s104
      %p115 = scmp.eq.s32.totalorder %s25, 0
      %p116 = por %p114, %p115
      %p117 = scmp.ne.s32.totalorder %s103, %s104
      %p118 = scmp.eq.s32.totalorder %s26, 1
      %p119 = por %p117, %p118
      %p121 = scmp.ne.s32.totalorder %s104, %s120
      %p122 = scmp.eq.s32.totalorder %s26, 0
      %p123 = por %p121, %p122
      %s125 = sadd.s32 %s124, 1
      %p128 = scmp.eq.s32.totalorder %s20, 1
      %p129 = scmp.ne.s32.totalorder %s124, %s126
      %p130 = scmp.eq.s32.totalorder %s20, 0
      %p131 = por %p129, %p130
      %p132 = scmp.ne.s32.totalorder %s124, %s126
      %p133 = scmp.eq.s32.totalorder %s25, 1
      %p134 = por %p132, %p133
      %p135 = scmp.ne.s32.totalorder %s126, %s127
      %p136 = scmp.eq.s32.totalorder %s25, 0
      %p137 = por %p135, %p136
      %p138 = scmp.ne.s32.totalorder %s126, %s127
      %p139 = scmp.eq.s32.totalorder %s26, 1
      %p140 = por %p138, %p139
      %p142 = scmp.ne.s32.totalorder %s127, %s141
      %p143 = scmp.eq.s32.totalorder %s26, 0
      %p144 = por %p142, %p143
      %s146 = sadd.s32 %s145, 1
      %p149 = scmp.eq.s32.totalorder %s20, 1
      %p150 = scmp.ne.s32.totalorder %s145, %s147
      %p151 = scmp.eq.s32.totalorder %s20, 0
      %p152 = por %p150, %p151
      %p153 = scmp.ne.s32.totalorder %s145, %s147
      %p154 = scmp.eq.s32.totalorder %s25, 1
      %p155 = por %p153, %p154
      %p156 = scmp.ne.s32.totalorder %s147, %s148
      %p157 = scmp.eq.s32.totalorder %s25, 0
      %p158 = por %p156, %p157
      %p159 = scmp.ne.s32.totalorder %s147, %s148
      %p160 = scmp.eq.s32.totalorder %s26, 1
      %p161 = por %p159, %p160
      %p163 = scmp.ne.s32.totalorder %s148, %s162
      %p164 = scmp.eq.s32.totalorder %s26, 0
      %p165 = por %p163, %p164
      %s167 = sadd.s32 %s166, 1
      %p170 = scmp.eq.s32.totalorder %s20, 1
      %p171 = scmp.ne.s32.totalorder %s166, %s168
      %p172 = scmp.eq.s32.totalorder %s20, 0
      %p173 = por %p171, %p172
      %p174 = scmp.ne.s32.totalorder %s166, %s168
      %p175 = scmp.eq.s32.totalorder %s25, 1
      %p176 = por %p174, %p175
      %p177 = scmp.ne.s32.totalorder %s168, %s169
      %p178 = scmp.eq.s32.totalorder %s25, 0
      %p179 = por %p177, %p178
      %p180 = scmp.ne.s32.totalorder %s168, %s169
      %p181 = scmp.eq.s32.totalorder %s26, 1
      %p182 = por %p180, %p181
      %p184 = scmp.ne.s32.totalorder %s169, %s183
      %p185 = scmp.eq.s32.totalorder %s26, 0
      %p186 = por %p184, %p185
      %s188 = sadd.s32 %s187, 1
      %p191 = scmp.eq.s32.totalorder %s20, 1
      %p192 = scmp.ne.s32.totalorder %s187, %s189
      %p193 = scmp.eq.s32.totalorder %s20, 0
      %p194 = por %p192, %p193
      %p195 = scmp.ne.s32.totalorder %s187, %s189
      %p196 = scmp.eq.s32.totalorder %s25, 1
      %p197 = por %p195, %p196
      %p198 = scmp.ne.s32.totalorder %s189, %s190
      %p199 = scmp.eq.s32.totalorder %s25, 0
      %p200 = por %p198, %p199
      %p201 = scmp.ne.s32.totalorder %s189, %s190
      %p202 = scmp.eq.s32.totalorder %s26, 1
      %p203 = por %p201, %p202
      %p205 = scmp.ne.s32.totalorder %s190, %s204
      %p206 = scmp.eq.s32.totalorder %s26, 0
      %p207 = por %p205, %p206
      %s209 = sadd.s32 %s208, 1
      %p212 = scmp.eq.s32.totalorder %s20, 1
      %p213 = scmp.ne.s32.totalorder %s208, %s210
      %p214 = scmp.eq.s32.totalorder %s20, 0
      %p215 = por %p213, %p214
      %p216 = scmp.ne.s32.totalorder %s208, %s210
      %p217 = scmp.eq.s32.totalorder %s25, 1
      %p218 = por %p216, %p217
      %p219 = scmp.ne.s32.totalorder %s210, %s211
      %p220 = scmp.eq.s32.totalorder %s25, 0
      %p221 = por %p219, %p220
      %p222 = scmp.ne.s32.totalorder %s210, %s211
      %p223 = scmp.eq.s32.totalorder %s26, 1
      %p224 = por %p222, %p223
      %p226 = scmp.ne.s32.totalorder %s211, %s225
      %p227 = scmp.eq.s32.totalorder %s26, 0
      %p228 = por %p226, %p227
      %s230 = sadd.s32 %s229, 1
      %p233 = scmp.eq.s32.totalorder %s20, 1
      %p234 = scmp.ne.s32.totalorder %s229, %s231
      %p235 = scmp.eq.s32.totalorder %s20, 0
      %p236 = por %p234, %p235
      %p237 = scmp.ne.s32.totalorder %s229, %s231
      %p238 = scmp.eq.s32.totalorder %s25, 1
      %p239 = por %p237, %p238
      %p240 = scmp.ne.s32.totalorder %s231, %s232
      %p241 = scmp.eq.s32.totalorder %s25, 0
      %p242 = por %p240, %p241
      %p243 = scmp.ne.s32.totalorder %s231, %s232
      %p244 = scmp.eq.s32.totalorder %s26, 1
      %p245 = por %p243, %p244
      %p247 = scmp.ne.s32.totalorder %s232, %s246
      %p248 = scmp.eq.s32.totalorder %s26, 0
      %p249 = por %p247, %p248
      %s251 = sadd.s32 %s250, 1
      %p254 = scmp.eq.s32.totalorder %s20, 1
      %p255 = scmp.ne.s32.totalorder %s250, %s252
      %p256 = scmp.eq.s32.totalorder %s20, 0
      %p257 = por %p255, %p256
      %p258 = scmp.ne.s32.totalorder %s250, %s252
      %p259 = scmp.eq.s32.totalorder %s25, 1
      %p260 = por %p258, %p259
      %p261 = scmp.ne.s32.totalorder %s252, %s253
      %p262 = scmp.eq.s32.totalorder %s25, 0
      %p263 = por %p261, %p262
      %p264 = scmp.ne.s32.totalorder %s252, %s253
      %p265 = scmp.eq.s32.totalorder %s26, 1
      %p266 = por %p264, %p265
      %p268 = scmp.ne.s32.totalorder %s253, %s267
      %p269 = scmp.eq.s32.totalorder %s26, 0
      %p270 = por %p268, %p269
      %s272 = sadd.s32 %s271, 1
      %p275 = scmp.eq.s32.totalorder %s20, 1
      %p276 = scmp.ne.s32.totalorder %s271, %s273
      %p277 = scmp.eq.s32.totalorder %s20, 0
      %p278 = por %p276, %p277
      %p279 = scmp.ne.s32.totalorder %s271, %s273
      %p280 = scmp.eq.s32.totalorder %s25, 1
      %p281 = por %p279, %p280
      %p282 = scmp.ne.s32.totalorder %s273, %s274
      %p283 = scmp.eq.s32.totalorder %s25, 0
      %p284 = por %p282, %p283
      %p285 = scmp.ne.s32.totalorder %s273, %s274
      %p286 = scmp.eq.s32.totalorder %s26, 1
      %p287 = por %p285, %p286
      %p289 = scmp.ne.s32.totalorder %s274, %s288
      %p290 = scmp.eq.s32.totalorder %s26, 0
      %p291 = por %p289, %p290
      %s292 = ssub.s32 %s27, %s39
      %p293 = scmp.eq.s32.totalorder %s292, 0
      %s295 = sadd.s32 %s294, 1
      %s296 = scalar_select %p293, %s294, %s295
      %p299 = pneg %p293
      %p300 = scmp.eq.s32.totalorder %s20, 1
      %p301 = por %p299, %p300
      %p302 = scmp.ne.s32.totalorder %s294, %s297
      %p303 = scmp.eq.s32.totalorder %s20, 0
      %p304 = por %p302, %p303
      %p305 = scmp.ne.s32.totalorder %s294, %s297
      %p306 = scmp.eq.s32.totalorder %s25, 1
      %p307 = por %p305, %p306
      %p308 = scmp.ne.s32.totalorder %s297, %s298
      %p309 = scmp.eq.s32.totalorder %s25, 0
      %p310 = por %p308, %p309
      %p311 = scmp.ne.s32.totalorder %s297, %s298
      %p312 = scmp.eq.s32.totalorder %s26, 1
      %p313 = por %p311, %p312
      %p315 = scmp.ne.s32.totalorder %s298, %s314
      %p316 = scmp.eq.s32.totalorder %s26, 0
      %p317 = por %p315, %p316
      %p318 = scmp.le.s32.totalorder 1, %s20
      %p319 = scmp.lt.s32.totalorder %s20, 3
      %p320 = pnand %p318, %p319
      %p321 = pneg %p320
      // Predicated region
      $region9: #{tpu_custom_call.1} parent=5 // pred_check
        _
      $region10: #{tpu_custom_call.1} parent=5 // pred_check_branch
        %323 = sbr.rel (%p320) target = $region12
      $region11: #{tpu_custom_call.1} parent=5 // pred_region
        %s324 = ssub.s32 %s20, 1
        // Predicated region
        $region13: #{tpu_custom_call.1} parent=11 // pred_check
          %p325 = pneg %p137
        $region14: #{tpu_custom_call.1} parent=11 // pred_check_branch
          %327 = sbr.rel (%p325) target = $region16
        $region15: #{tpu_custom_call.1} parent=11 // pred_region
          _
        $region16: #{tpu_custom_call.1} parent=11 // pred_fallthru
          _
        // Predicated region
        $region17: #{tpu_custom_call.1} parent=11 // pred_check
          %p328 = pneg %p158
        $region18: #{tpu_custom_call.1} parent=11 // pred_check_branch
          %330 = sbr.rel (%p328) target = $region20
        $region19: #{tpu_custom_call.1} parent=11 // pred_region
          _
        $region20: #{tpu_custom_call.1} parent=11 // pred_fallthru
          _
        // Predicated region
        $region21: #{tpu_custom_call.1} parent=11 // pred_check
          %p331 = pneg %p179
        $region22: #{tpu_custom_call.1} parent=11 // pred_check_branch
          %333 = sbr.rel (%p331) target = $region24
        $region23: #{tpu_custom_call.1} parent=11 // pred_region
          _
        $region24: #{tpu_custom_call.1} parent=11 // pred_fallthru
          _
        // Predicated region
        $region25: #{tpu_custom_call.1} parent=11 // pred_check
          %p334 = pneg %p200
        $region26: #{tpu_custom_call.1} parent=11 // pred_check_branch
          %336 = sbr.rel (%p334) target = $region28
        $region27: #{tpu_custom_call.1} parent=11 // pred_region
          _
        $region28: #{tpu_custom_call.1} parent=11 // pred_fallthru
          _
        // Predicated region
        $region29: #{tpu_custom_call.1} parent=11 // pred_check
          %p337 = pneg %p221
        $region30: #{tpu_custom_call.1} parent=11 // pred_check_branch
          %339 = sbr.rel (%p337) target = $region32
        $region31: #{tpu_custom_call.1} parent=11 // pred_region
          _
        $region32: #{tpu_custom_call.1} parent=11 // pred_fallthru
          _
        // Predicated region
        $region33: #{tpu_custom_call.1} parent=11 // pred_check
          %p340 = pneg %p242
        $region34: #{tpu_custom_call.1} parent=11 // pred_check_branch
          %342 = sbr.rel (%p340) target = $region36
        $region35: #{tpu_custom_call.1} parent=11 // pred_region
          _
        $region36: #{tpu_custom_call.1} parent=11 // pred_fallthru
          _
        // Predicated region
        $region37: #{tpu_custom_call.1} parent=11 // pred_check
          %p343 = pneg %p263
        $region38: #{tpu_custom_call.1} parent=11 // pred_check_branch
          %345 = sbr.rel (%p343) target = $region40
        $region39: #{tpu_custom_call.1} parent=11 // pred_region
          _
        $region40: #{tpu_custom_call.1} parent=11 // pred_fallthru
          _
        // Predicated region
        $region41: #{tpu_custom_call.1} parent=11 // pred_check
          %p346 = pneg %p284
        $region42: #{tpu_custom_call.1} parent=11 // pred_check_branch
          %348 = sbr.rel (%p346) target = $region44
        $region43: #{tpu_custom_call.1} parent=11 // pred_region
          _
        $region44: #{tpu_custom_call.1} parent=11 // pred_fallthru
          _
      $region12: #{tpu_custom_call.1} parent=5 // pred_fallthru
        _
      %p349 = scmp.lt.s32.totalorder %s20, 2
      // Predicated region
      $region45: #{tpu_custom_call.1} parent=5 // pred_check
        %p350 = pneg %p349
      $region46: #{tpu_custom_call.1} parent=5 // pred_check_branch
        %352 = sbr.rel (%p350) target = $region48
      $region47: #{tpu_custom_call.1} parent=5 // pred_region
        // Predicated region
        $region49: #{tpu_custom_call.1} parent=47 // pred_check
          %p353 = pneg %p54
        $region50: #{tpu_custom_call.1} parent=47 // pred_check_branch
          %355 = sbr.rel (%p353) target = $region52
        $region51: #{tpu_custom_call.1} parent=47 // pred_region
          %s356 = smul.u32 64, %s28
          %p357 = scmp.lt.s32.totalorder %s27, 1
          %s358 = scalar_select %p357, %s27, 1
          %p359 = scmp.lt.s32.totalorder %s356, 63
          %s360 = scalar_select %p359, %s356, 63
          %s361 = smul.addr %s358, 64
          %s362 = sadd.s32 %s360, %s361
          %s363 = smul.addr %s362, 8
          %s364 = scalar_lea.vmem %s0, %s363
          %s365 = smul.u32 64, %s28
        $region52: #{tpu_custom_call.1} parent=47 // pred_fallthru
          _
        // Predicated region
        $region53: #{tpu_custom_call.1} parent=47 // pred_check
          %p366 = pneg %p82
        $region54: #{tpu_custom_call.1} parent=47 // pred_check_branch
          %368 = sbr.rel (%p366) target = $region56
        $region55: #{tpu_custom_call.1} parent=47 // pred_region
          %s369 = smul.u32 64, %s28
          %p370 = scmp.lt.s32.totalorder %s27, 1
          %s371 = scalar_select %p370, %s27, 1
          %p372 = scmp.lt.s32.totalorder %s369, 63
          %s373 = scalar_select %p372, %s369, 63
          %s374 = smul.addr %s371, 64
          %s375 = sadd.s32 %s373, %s374
          %s376 = smul.addr %s375, 8
          %s377 = scalar_lea.vmem %s1, %s376
          %s378 = smul.u32 64, %s28
        $region56: #{tpu_custom_call.1} parent=47 // pred_fallthru
          _
        // Predicated region
        $region57: #{tpu_custom_call.1} parent=47 // pred_check
          %p379 = pneg %p110
        $region58: #{tpu_custom_call.1} parent=47 // pred_check_branch
          %381 = sbr.rel (%p379) target = $region60
        $region59: #{tpu_custom_call.1} parent=47 // pred_region
          %s382 = smul.u32 4, %s28
          %p383 = scmp.lt.s32.totalorder %s27, 1
          %s384 = scalar_select %p383, %s27, 1
          %p385 = scmp.lt.s32.totalorder %s382, 3
          %s386 = scalar_select %p385, %s382, 3
          %s387 = smul.addr %s384, 4
          %s388 = sadd.s32 %s386, %s387
          %s389 = scalar_lea.vmem %s2, %s388
          %s390 = smul.u32 4, %s28
        $region60: #{tpu_custom_call.1} parent=47 // pred_fallthru
          _
      $region48: #{tpu_custom_call.1} parent=5 // pred_fallthru
        _
      %p391 = scmp.le.s32.totalorder 1, %s20
      %p392 = scmp.lt.s32.totalorder %s20, 3
      %p393 = pnand %p391, %p392
      %p394 = pneg %p393
      // Predicated region
      $region61: #{tpu_custom_call.1} parent=5 // pred_check
        _
      $region62: #{tpu_custom_call.1} parent=5 // pred_check_branch
        %396 = sbr.rel (%p393) target = $region64
      $region63: #{tpu_custom_call.1} parent=5 // pred_region
        %s397 = ssub.s32 %s20, 1
        %s398 = smul.u32 64, %s30
        %p399 = scmp.lt.s32.totalorder %s29, 1
        %s400 = scalar_select %p399, %s29, 1
        %p401 = scmp.lt.s32.totalorder %s398, 63
        %s402 = scalar_select %p401, %s398, 63
        %s403 = smul.addr %s400, 64
        %s404 = sadd.s32 %s402, %s403
        %s405 = smul.addr %s404, 8
        %s406 = scalar_lea.vmem %s0, %s405
        %p407 = pneg %p60
        %p408 = pneg %p57
        %s409 = smul.u32 64, %s30
        %p410 = scmp.lt.s32.totalorder %s29, 1
        %s411 = scalar_select %p410, %s29, 1
        %p412 = scmp.lt.s32.totalorder %s409, 63
        %s413 = scalar_select %p412, %s409, 63
        %s414 = smul.addr %s411, 64
        %s415 = sadd.s32 %s413, %s414
        %s416 = smul.addr %s415, 8
        %s417 = scalar_lea.vmem %s1, %s416
        %p418 = pneg %p88
        %p419 = pneg %p85
        %s420 = smul.u32 4, %s30
        %p421 = scmp.lt.s32.totalorder %s29, 1
        %s422 = scalar_select %p421, %s29, 1
        %p423 = scmp.lt.s32.totalorder %s420, 3
        %s424 = scalar_select %p423, %s420, 3
        %s425 = smul.addr %s422, 4
        %s426 = sadd.s32 %s424, %s425
        %s427 = scalar_lea.vmem %s2, %s426
        %p428 = pneg %p116
        %p429 = pneg %p113
        %p430 = pneg %p137
        %p431 = pneg %p134
        %p432 = pneg %p158
        %p433 = pneg %p155
        %p434 = pneg %p179
        %p435 = pneg %p176
        %p436 = pneg %p200
        %p437 = pneg %p197
        %p438 = pneg %p221
        %p439 = pneg %p218
        %p440 = pneg %p242
        %p441 = pneg %p239
        %p442 = pneg %p263
        %p443 = pneg %p260
        %p444 = pneg %p284
        %p445 = pneg %p281
        %p446 = pneg %p310
        %p447 = pneg %p307
        %s448 = sand.u32 %s297, 1
        %s449 = scalar_lea.sflag [#allocation4], %s448
        %s450 = sand.u32 %s297, 1
        %s451 = scalar_lea.vmem [#allocation3], %s450
        %s452 = smul.u32 64, %s30
        %p453 = scmp.lt.s32.totalorder %s29, 1
        %s454 = scalar_select %p453, %s29, 1
        %p455 = scmp.lt.s32.totalorder %s452, 63
        %s456 = scalar_select %p455, %s452, 63
        %s457 = smul.addr %s454, 64
        %s458 = sadd.s32 %s456, %s457
        %s459 = smul.addr %s458, 8
        %s460 = scalar_lea.vmem %s0, %s459
        %s461 = smul.u32 64, %s30
        %s462 = smul.u32 64, %s30
        %p463 = scmp.lt.s32.totalorder %s29, 1
        %s464 = scalar_select %p463, %s29, 1
        %p465 = scmp.lt.s32.totalorder %s462, 63
        %s466 = scalar_select %p465, %s462, 63
        %s467 = smul.addr %s464, 64
        %s468 = sadd.s32 %s466, %s467
        %s469 = smul.addr %s468, 8
        %s470 = scalar_lea.vmem %s1, %s469
        %s471 = smul.u32 64, %s30
        %s472 = smul.u32 4, %s30
        %p473 = scmp.lt.s32.totalorder %s29, 1
        %s474 = scalar_select %p473, %s29, 1
        %p475 = scmp.lt.s32.totalorder %s472, 3
        %s476 = scalar_select %p475, %s472, 3
        %s477 = smul.addr %s474, 4
        %s478 = sadd.s32 %s476, %s477
        %s479 = scalar_lea.vmem %s2, %s478
        %s480 = smul.u32 4, %s30
        %p482 = scmp.eq.s32.totalorder %s30, 0
        // Predicated region
        $region65: #{tpu_custom_call.1} parent=63 // pred_check
          %p483 = pneg %p482
        $region66: #{tpu_custom_call.1} parent=63 // pred_check_branch
          %485 = sbr.rel (%p483) target = $region68
        $region67: #{tpu_custom_call.1} parent=63 // pred_region
          %vm486 = vcmask 253952
          %487 = vst.msk [vmem:[#allocation2] sm:$0x1] %vm486, 0.0
        $region68: #{tpu_custom_call.1} parent=63 // pred_fallthru
          _
        %v488 = vld [vmem:[%s460] sm:$0xff]
        %v489 = vld [vmem:[%s460 + $0x8] sm:$0xff]
        %v490 = vld [vmem:[%s460 + $0x10] sm:$0xff]
        %v491 = vld [vmem:[%s460 + $0x18] sm:$0xff]
        %v492 = vld [vmem:[%s460 + $0x20] sm:$0xff]
        %v493 = vld [vmem:[%s460 + $0x28] sm:$0xff]
        %v494 = vld [vmem:[%s460 + $0x30] sm:$0xff]
        %v495 = vld [vmem:[%s460 + $0x38] sm:$0xff]
        %v496 = vld [vmem:[%s460 + $0x40] sm:$0xff]
        %v497 = vld [vmem:[%s460 + $0x48] sm:$0xff]
        %v498 = vld [vmem:[%s460 + $0x50] sm:$0xff]
        %v499 = vld [vmem:[%s460 + $0x58] sm:$0xff]
        %v500 = vld [vmem:[%s460 + $0x60] sm:$0xff]
        %v501 = vld [vmem:[%s460 + $0x68] sm:$0xff]
        %v502 = vld [vmem:[%s460 + $0x70] sm:$0xff]
        %v503 = vld [vmem:[%s460 + $0x78] sm:$0xff]
        %v504 = vld [vmem:[%s460 + $0x80] sm:$0xff]
        %v505 = vld [vmem:[%s460 + $0x88] sm:$0xff]
        %v506 = vld [vmem:[%s460 + $0x90] sm:$0xff]
        %v507 = vld [vmem:[%s460 + $0x98] sm:$0xff]
        %v508 = vld [vmem:[%s460 + $0xa0] sm:$0xff]
        %v509 = vld [vmem:[%s460 + $0xa8] sm:$0xff]
        %v510 = vld [vmem:[%s460 + $0xb0] sm:$0xff]
        %v511 = vld [vmem:[%s460 + $0xb8] sm:$0xff]
        %v512 = vld [vmem:[%s460 + $0xc0] sm:$0xff]
        %v513 = vld [vmem:[%s460 + $0xc8] sm:$0xff]
        %v514 = vld [vmem:[%s460 + $0xd0] sm:$0xff]
        %v515 = vld [vmem:[%s460 + $0xd8] sm:$0xff]
        %v516 = vld [vmem:[%s460 + $0xe0] sm:$0xff]
        %v517 = vld [vmem:[%s460 + $0xe8] sm:$0xff]
        %v518 = vld [vmem:[%s460 + $0xf0] sm:$0xff]
        %v519 = vld [vmem:[%s460 + $0xf8] sm:$0xff]
        %v520 = vld [vmem:[%s460 + $0x100] sm:$0xff]
        %v521 = vld [vmem:[%s460 + $0x108] sm:$0xff]
        %v522 = vld [vmem:[%s460 + $0x110] sm:$0xff]
        %v523 = vld [vmem:[%s460 + $0x118] sm:$0xff]
        %v524 = vld [vmem:[%s460 + $0x120] sm:$0xff]
        %v525 = vld [vmem:[%s460 + $0x128] sm:$0xff]
        %v526 = vld [vmem:[%s460 + $0x130] sm:$0xff]
        %v527 = vld [vmem:[%s460 + $0x138] sm:$0xff]
        %v528 = vld [vmem:[%s460 + $0x140] sm:$0xff]
        %v529 = vld [vmem:[%s460 + $0x148] sm:$0xff]
        %v530 = vld [vmem:[%s460 + $0x150] sm:$0xff]
        %v531 = vld [vmem:[%s460 + $0x158] sm:$0xff]
        %v532 = vld [vmem:[%s460 + $0x160] sm:$0xff]
        %v533 = vld [vmem:[%s460 + $0x168] sm:$0xff]
        %v534 = vld [vmem:[%s460 + $0x170] sm:$0xff]
        %v535 = vld [vmem:[%s460 + $0x178] sm:$0xff]
        %v536 = vld [vmem:[%s460 + $0x180] sm:$0xff]
        %v537 = vld [vmem:[%s460 + $0x188] sm:$0xff]
        %v538 = vld [vmem:[%s460 + $0x190] sm:$0xff]
        %v539 = vld [vmem:[%s460 + $0x198] sm:$0xff]
        %v540 = vld [vmem:[%s460 + $0x1a0] sm:$0xff]
        %v541 = vld [vmem:[%s460 + $0x1a8] sm:$0xff]
        %v542 = vld [vmem:[%s460 + $0x1b0] sm:$0xff]
        %v543 = vld [vmem:[%s460 + $0x1b8] sm:$0xff]
        %v544 = vld [vmem:[%s460 + $0x1c0] sm:$0xff]
        %v545 = vld [vmem:[%s460 + $0x1c8] sm:$0xff]
        %v546 = vld [vmem:[%s460 + $0x1d0] sm:$0xff]
        %v547 = vld [vmem:[%s460 + $0x1d8] sm:$0xff]
        %v548 = vld [vmem:[%s460 + $0x1e0] sm:$0xff]
        %v549 = vld [vmem:[%s460 + $0x1e8] sm:$0xff]
        %v550 = vld [vmem:[%s460 + $0x1f0] sm:$0xff]
        %v551 = vld [vmem:[%s460 + $0x1f8] sm:$0xff]
        %v552 = vld [vmem:[%s470] sm:$0xff]
        %v553 = vld [vmem:[%s470 + $0x8] sm:$0xff]
        %v554 = vld [vmem:[%s470 + $0x10] sm:$0xff]
        %v555 = vld [vmem:[%s470 + $0x18] sm:$0xff]
        %v556 = vld [vmem:[%s470 + $0x20] sm:$0xff]
        %v557 = vld [vmem:[%s470 + $0x28] sm:$0xff]
        %v558 = vld [vmem:[%s470 + $0x30] sm:$0xff]
        %v559 = vld [vmem:[%s470 + $0x38] sm:$0xff]
        %v560 = vld [vmem:[%s470 + $0x40] sm:$0xff]
        %v561 = vld [vmem:[%s470 + $0x48] sm:$0xff]
        %v562 = vld [vmem:[%s470 + $0x50] sm:$0xff]
        %v563 = vld [vmem:[%s470 + $0x58] sm:$0xff]
        %v564 = vld [vmem:[%s470 + $0x60] sm:$0xff]
        %v565 = vld [vmem:[%s470 + $0x68] sm:$0xff]
        %v566 = vld [vmem:[%s470 + $0x70] sm:$0xff]
        %v567 = vld [vmem:[%s470 + $0x78] sm:$0xff]
        %v568 = vld [vmem:[%s470 + $0x80] sm:$0xff]
        %v569 = vld [vmem:[%s470 + $0x88] sm:$0xff]
        %v570 = vld [vmem:[%s470 + $0x90] sm:$0xff]
        %v571 = vld [vmem:[%s470 + $0x98] sm:$0xff]
        %v572 = vld [vmem:[%s470 + $0xa0] sm:$0xff]
        %v573 = vld [vmem:[%s470 + $0xa8] sm:$0xff]
        %v574 = vld [vmem:[%s470 + $0xb0] sm:$0xff]
        %v575 = vld [vmem:[%s470 + $0xb8] sm:$0xff]
        %v576 = vld [vmem:[%s470 + $0xc0] sm:$0xff]
        %v577 = vld [vmem:[%s470 + $0xc8] sm:$0xff]
        %v578 = vld [vmem:[%s470 + $0xd0] sm:$0xff]
        %v579 = vld [vmem:[%s470 + $0xd8] sm:$0xff]
        %v580 = vld [vmem:[%s470 + $0xe0] sm:$0xff]
        %v581 = vld [vmem:[%s470 + $0xe8] sm:$0xff]
        %v582 = vld [vmem:[%s470 + $0xf0] sm:$0xff]
        %v583 = vld [vmem:[%s470 + $0xf8] sm:$0xff]
        %v584 = vld [vmem:[%s470 + $0x100] sm:$0xff]
        %v585 = vld [vmem:[%s470 + $0x108] sm:$0xff]
        %v586 = vld [vmem:[%s470 + $0x110] sm:$0xff]
        %v587 = vld [vmem:[%s470 + $0x118] sm:$0xff]
        %v588 = vld [vmem:[%s470 + $0x120] sm:$0xff]
        %v589 = vld [vmem:[%s470 + $0x128] sm:$0xff]
        %v590 = vld [vmem:[%s470 + $0x130] sm:$0xff]
        %v591 = vld [vmem:[%s470 + $0x138] sm:$0xff]
        %v592 = vld [vmem:[%s470 + $0x140] sm:$0xff]
        %v593 = vld [vmem:[%s470 + $0x148] sm:$0xff]
        %v594 = vld [vmem:[%s470 + $0x150] sm:$0xff]
        %v595 = vld [vmem:[%s470 + $0x158] sm:$0xff]
        %v596 = vld [vmem:[%s470 + $0x160] sm:$0xff]
        %v597 = vld [vmem:[%s470 + $0x168] sm:$0xff]
        %v598 = vld [vmem:[%s470 + $0x170] sm:$0xff]
        %v599 = vld [vmem:[%s470 + $0x178] sm:$0xff]
        %v600 = vld [vmem:[%s470 + $0x180] sm:$0xff]
        %v601 = vld [vmem:[%s470 + $0x188] sm:$0xff]
        %v602 = vld [vmem:[%s470 + $0x190] sm:$0xff]
        %v603 = vld [vmem:[%s470 + $0x198] sm:$0xff]
        %v604 = vld [vmem:[%s470 + $0x1a0] sm:$0xff]
        %v605 = vld [vmem:[%s470 + $0x1a8] sm:$0xff]
        %v606 = vld [vmem:[%s470 + $0x1b0] sm:$0xff]
        %v607 = vld [vmem:[%s470 + $0x1b8] sm:$0xff]
        %v608 = vld [vmem:[%s470 + $0x1c0] sm:$0xff]
        %v609 = vld [vmem:[%s470 + $0x1c8] sm:$0xff]
        %v610 = vld [vmem:[%s470 + $0x1d0] sm:$0xff]
        %v611 = vld [vmem:[%s470 + $0x1d8] sm:$0xff]
        %v612 = vld [vmem:[%s470 + $0x1e0] sm:$0xff]
        %v613 = vld [vmem:[%s470 + $0x1e8] sm:$0xff]
        %v614 = vld [vmem:[%s470 + $0x1f0] sm:$0xff]
        %v615 = vld [vmem:[%s470 + $0x1f8] sm:$0xff]
        %v616 = vadd.f32 %v552, %v488
        %v617 = vadd.f32 %v553, %v489
        %v618 = vadd.f32 %v554, %v490
        %v619 = vadd.f32 %v555, %v491
        %v620 = vadd.f32 %v556, %v492
        %v621 = vadd.f32 %v557, %v493
        %v622 = vadd.f32 %v558, %v494
        %v623 = vadd.f32 %v559, %v495
        %v624 = vadd.f32 %v560, %v496
        %v625 = vadd.f32 %v561, %v497
        %v626 = vadd.f32 %v562, %v498
        %v627 = vadd.f32 %v563, %v499
        %v628 = vadd.f32 %v564, %v500
        %v629 = vadd.f32 %v565, %v501
        %v630 = vadd.f32 %v566, %v502
        %v631 = vadd.f32 %v567, %v503
        %v632 = vadd.f32 %v568, %v504
        %v633 = vadd.f32 %v569, %v505
        %v634 = vadd.f32 %v570, %v506
        %v635 = vadd.f32 %v571, %v507
        %v636 = vadd.f32 %v572, %v508
        %v637 = vadd.f32 %v573, %v509
        %v638 = vadd.f32 %v574, %v510
        %v639 = vadd.f32 %v575, %v511
        %v640 = vadd.f32 %v576, %v512
        %v641 = vadd.f32 %v577, %v513
        %v642 = vadd.f32 %v578, %v514
        %v643 = vadd.f32 %v579, %v515
        %v644 = vadd.f32 %v580, %v516
        %v645 = vadd.f32 %v581, %v517
        %v646 = vadd.f32 %v582, %v518
        %v647 = vadd.f32 %v583, %v519
        %v648 = vadd.f32 %v584, %v520
        %v649 = vadd.f32 %v585, %v521
        %v650 = vadd.f32 %v586, %v522
        %v651 = vadd.f32 %v587, %v523
        %v652 = vadd.f32 %v588, %v524
        %v653 = vadd.f32 %v589, %v525
        %v654 = vadd.f32 %v590, %v526
        %v655 = vadd.f32 %v591, %v527
        %v656 = vadd.f32 %v592, %v528
        %v657 = vadd.f32 %v593, %v529
        %v658 = vadd.f32 %v594, %v530
        %v659 = vadd.f32 %v595, %v531
        %v660 = vadd.f32 %v596, %v532
        %v661 = vadd.f32 %v597, %v533
        %v662 = vadd.f32 %v598, %v534
        %v663 = vadd.f32 %v599, %v535
        %v664 = vadd.f32 %v600, %v536
        %v665 = vadd.f32 %v601, %v537
        %v666 = vadd.f32 %v602, %v538
        %v667 = vadd.f32 %v603, %v539
        %v668 = vadd.f32 %v604, %v540
        %v669 = vadd.f32 %v605, %v541
        %v670 = vadd.f32 %v606, %v542
        %v671 = vadd.f32 %v607, %v543
        %v672 = vadd.f32 %v608, %v544
        %v673 = vadd.f32 %v609, %v545
        %v674 = vadd.f32 %v610, %v546
        %v675 = vadd.f32 %v611, %v547
        %v676 = vadd.f32 %v612, %v548
        %v677 = vadd.f32 %v613, %v549
        %v678 = vadd.f32 %v614, %v550
        %v679 = vadd.f32 %v615, %v551
        %v680 = vpack.c.bf16 %v617, %v616
        %v681 = vpack.c.bf16 %v619, %v618
        %v682 = vpack.c.bf16 %v621, %v620
        %v683 = vpack.c.bf16 %v623, %v622
        %v684 = vpack.c.bf16 %v625, %v624
        %v685 = vpack.c.bf16 %v627, %v626
        %v686 = vpack.c.bf16 %v629, %v628
        %v687 = vpack.c.bf16 %v631, %v630
        %v688 = vpack.c.bf16 %v633, %v632
        %v689 = vpack.c.bf16 %v635, %v634
        %v690 = vpack.c.bf16 %v637, %v636
        %v691 = vpack.c.bf16 %v639, %v638
        %v692 = vpack.c.bf16 %v641, %v640
        %v693 = vpack.c.bf16 %v643, %v642
        %v694 = vpack.c.bf16 %v645, %v644
        %v695 = vpack.c.bf16 %v647, %v646
        %v696 = vpack.c.bf16 %v649, %v648
        %v697 = vpack.c.bf16 %v651, %v650
        %v698 = vpack.c.bf16 %v653, %v652
        %v699 = vpack.c.bf16 %v655, %v654
        %v700 = vpack.c.bf16 %v657, %v656
        %v701 = vpack.c.bf16 %v659, %v658
        %v702 = vpack.c.bf16 %v661, %v660
        %v703 = vpack.c.bf16 %v663, %v662
        %v704 = vpack.c.bf16 %v665, %v664
        %v705 = vpack.c.bf16 %v667, %v666
        %v706 = vpack.c.bf16 %v669, %v668
        %v707 = vpack.c.bf16 %v671, %v670
        %v708 = vpack.c.bf16 %v673, %v672
        %v709 = vpack.c.bf16 %v675, %v674
        %v710 = vpack.c.bf16 %v677, %v676
        %v711 = vpack.c.bf16 %v679, %v678
        %v712 = vsub.f32 %v552, %v488
        %v713 = vsub.f32 %v553, %v489
        %v714 = vsub.f32 %v554, %v490
        %v715 = vsub.f32 %v555, %v491
        %v716 = vsub.f32 %v556, %v492
        %v717 = vsub.f32 %v557, %v493
        %v718 = vsub.f32 %v558, %v494
        %v719 = vsub.f32 %v559, %v495
        %v720 = vsub.f32 %v560, %v496
        %v721 = vsub.f32 %v561, %v497
        %v722 = vsub.f32 %v562, %v498
        %v723 = vsub.f32 %v563, %v499
        %v724 = vsub.f32 %v564, %v500
        %v725 = vsub.f32 %v565, %v501
        %v726 = vsub.f32 %v566, %v502
        %v727 = vsub.f32 %v567, %v503
        %v728 = vsub.f32 %v568, %v504
        %v729 = vsub.f32 %v569, %v505
        %v730 = vsub.f32 %v570, %v506
        %v731 = vsub.f32 %v571, %v507
        %v732 = vsub.f32 %v572, %v508
        %v733 = vsub.f32 %v573, %v509
        %v734 = vsub.f32 %v574, %v510
        %v735 = vsub.f32 %v575, %v511
        %v736 = vsub.f32 %v576, %v512
        %v737 = vsub.f32 %v577, %v513
        %v738 = vsub.f32 %v578, %v514
        %v739 = vsub.f32 %v579, %v515
        %v740 = vsub.f32 %v580, %v516
        %v741 = vsub.f32 %v581, %v517
        %v742 = vsub.f32 %v582, %v518
        %v743 = vsub.f32 %v583, %v519
        %v744 = vsub.f32 %v584, %v520
        %v745 = vsub.f32 %v585, %v521
        %v746 = vsub.f32 %v586, %v522
        %v747 = vsub.f32 %v587, %v523
        %v748 = vsub.f32 %v588, %v524
        %v749 = vsub.f32 %v589, %v525
        %v750 = vsub.f32 %v590, %v526
        %v751 = vsub.f32 %v591, %v527
        %v752 = vsub.f32 %v592, %v528
        %v753 = vsub.f32 %v593, %v529
        %v754 = vsub.f32 %v594, %v530
        %v755 = vsub.f32 %v595, %v531
        %v756 = vsub.f32 %v596, %v532
        %v757 = vsub.f32 %v597, %v533
        %v758 = vsub.f32 %v598, %v534
        %v759 = vsub.f32 %v599, %v535
        %v760 = vsub.f32 %v600, %v536
        %v761 = vsub.f32 %v601, %v537
        %v762 = vsub.f32 %v602, %v538
        %v763 = vsub.f32 %v603, %v539
        %v764 = vsub.f32 %v604, %v540
        %v765 = vsub.f32 %v605, %v541
        %v766 = vsub.f32 %v606, %v542
        %v767 = vsub.f32 %v607, %v543
        %v768 = vsub.f32 %v608, %v544
        %v769 = vsub.f32 %v609, %v545
        %v770 = vsub.f32 %v610, %v546
        %v771 = vsub.f32 %v611, %v547
        %v772 = vsub.f32 %v612, %v548
        %v773 = vsub.f32 %v613, %v549
        %v774 = vsub.f32 %v614, %v550
        %v775 = vsub.f32 %v615, %v551
        %v776 = vpack.c.bf16 %v713, %v712
        %v777 = vpack.c.bf16 %v715, %v714
        %v778 = vpack.c.bf16 %v717, %v716
        %v779 = vpack.c.bf16 %v719, %v718
        %v780 = vpack.c.bf16 %v721, %v720
        %v781 = vpack.c.bf16 %v723, %v722
        %v782 = vpack.c.bf16 %v725, %v724
        %v783 = vpack.c.bf16 %v727, %v726
        %v784 = vpack.c.bf16 %v729, %v728
        %v785 = vpack.c.bf16 %v731, %v730
        %v786 = vpack.c.bf16 %v733, %v732
        %v787 = vpack.c.bf16 %v735, %v734
        %v788 = vpack.c.bf16 %v737, %v736
        %v789 = vpack.c.bf16 %v739, %v738
        %v790 = vpack.c.bf16 %v741, %v740
        %v791 = vpack.c.bf16 %v743, %v742
        %v792 = vpack.c.bf16 %v745, %v744
        %v793 = vpack.c.bf16 %v747, %v746
        %v794 = vpack.c.bf16 %v749, %v748
        %v795 = vpack.c.bf16 %v751, %v750
        %v796 = vpack.c.bf16 %v753, %v752
        %v797 = vpack.c.bf16 %v755, %v754
        %v798 = vpack.c.bf16 %v757, %v756
        %v799 = vpack.c.bf16 %v759, %v758
        %v800 = vpack.c.bf16 %v761, %v760
        %v801 = vpack.c.bf16 %v763, %v762
        %v802 = vpack.c.bf16 %v765, %v764
        %v803 = vpack.c.bf16 %v767, %v766
        %v804 = vpack.c.bf16 %v769, %v768
        %v805 = vpack.c.bf16 %v771, %v770
        %v806 = vpack.c.bf16 %v773, %v772
        %v807 = vpack.c.bf16 %v775, %v774
        %v808 = vld [vmem:[%s3] sm:$0xf]
        %v809 = vld [vmem:[%s3 + $0x4] sm:$0xf]
        %v810 = vld [vmem:[%s3 + $0x8] sm:$0xf]
        %v811 = vld [vmem:[%s3 + $0xc] sm:$0xf]
        %v816 = vunpack.c.l.b16 %v808
        %v817 = vunpack.c.l.b16 %v809
        %v818 = vunpack.c.l.b16 %v810
        %v819 = vunpack.c.l.b16 %v811
        %v820 = vpack.c.b16 %v817, %v816
        %v821 = vpack.c.b16 %v819, %v818
        %vm824 = vcmask 261120
        %v826 = vsel %vm824, %v680, 0
        %v829 = vsel %vm824, %v681, 0
        %v832 = vsel %vm824, %v682, 0
        %v835 = vsel %vm824, %v683, 0
        %v838 = vsel %vm824, %v684, 0
        %v841 = vsel %vm824, %v685, 0
        %v844 = vsel %vm824, %v686, 0
        %v847 = vsel %vm824, %v687, 0
        %v850 = vsel %vm824, %v688, 0
        %v853 = vsel %vm824, %v689, 0
        %v856 = vsel %vm824, %v690, 0
        %v859 = vsel %vm824, %v691, 0
        %v862 = vsel %vm824, %v692, 0
        %v865 = vsel %vm824, %v693, 0
        %v868 = vsel %vm824, %v694, 0
        %v871 = vsel %vm824, %v695, 0
        %v874 = vsel %vm824, %v696, 0
        %v877 = vsel %vm824, %v697, 0
        %v880 = vsel %vm824, %v698, 0
        %v883 = vsel %vm824, %v699, 0
        %v886 = vsel %vm824, %v700, 0
        %v889 = vsel %vm824, %v701, 0
        %v892 = vsel %vm824, %v702, 0
        %v895 = vsel %vm824, %v703, 0
        %v898 = vsel %vm824, %v704, 0
        %v901 = vsel %vm824, %v705, 0
        %v904 = vsel %vm824, %v706, 0
        %v907 = vsel %vm824, %v707, 0
        %v910 = vsel %vm824, %v708, 0
        %v913 = vsel %vm824, %v709, 0
        %v916 = vsel %vm824, %v710, 0
        %v919 = vsel %vm824, %v711, 0
        %921 = vmatpush.bf16.msra.mxu0 0
        %922 = vmatpush.bf16.msra.mxu0 0
        %923 = vmatpush.bf16.msra.mxu0 0
        %924 = vmatpush.bf16.msra.mxu0 0
        %925 = vmatpush.bf16.msra.mxu0 0
        %926 = vmatpush.bf16.msra.mxu0 0
        %927 = vmatpush.bf16.msra.mxu0 %v821
        %928 = vmatpush.bf16.msra.mxu0 %v820
        %929 = vmatmul.bf16.gmra.mxu0 %v826
        %v930 = vpop.f32.mrf.mxu0
        %v931 = vadd.f32 0.0, %v930
        %v932 = vpop.f32.mrf.mxu0
        %v933 = vadd.f32 0.0, %v932
        %934 = vmatmul.bf16.gmra.mxu0 %v829
        %v935 = vpop.f32.mrf.mxu0
        %v936 = vadd.f32 0.0, %v935
        %v937 = vpop.f32.mrf.mxu0
        %v938 = vadd.f32 0.0, %v937
        %939 = vmatmul.bf16.gmra.mxu0 %v832
        %v940 = vpop.f32.mrf.mxu0
        %v941 = vadd.f32 0.0, %v940
        %v942 = vpop.f32.mrf.mxu0
        %v943 = vadd.f32 0.0, %v942
        %944 = vmatmul.bf16.gmra.mxu0 %v835
        %v945 = vpop.f32.mrf.mxu0
        %v946 = vadd.f32 0.0, %v945
        %v947 = vpop.f32.mrf.mxu0
        %v948 = vadd.f32 0.0, %v947
        %949 = vmatmul.bf16.gmra.mxu0 %v838
        %v950 = vpop.f32.mrf.mxu0
        %v951 = vadd.f32 0.0, %v950
        %v952 = vpop.f32.mrf.mxu0
        %v953 = vadd.f32 0.0, %v952
        %954 = vmatmul.bf16.gmra.mxu0 %v841
        %v955 = vpop.f32.mrf.mxu0
        %v956 = vadd.f32 0.0, %v955
        %v957 = vpop.f32.mrf.mxu0
        %v958 = vadd.f32 0.0, %v957
        %959 = vmatmul.bf16.gmra.mxu0 %v844
        %v960 = vpop.f32.mrf.mxu0
        %v961 = vadd.f32 0.0, %v960
        %v962 = vpop.f32.mrf.mxu0
        %v963 = vadd.f32 0.0, %v962
        %964 = vmatmul.bf16.gmra.mxu0 %v847
        %v965 = vpop.f32.mrf.mxu0
        %v966 = vadd.f32 0.0, %v965
        %v967 = vpop.f32.mrf.mxu0
        %v968 = vadd.f32 0.0, %v967
        %969 = vmatmul.bf16.gmra.mxu0 %v850
        %v970 = vpop.f32.mrf.mxu0
        %v971 = vadd.f32 0.0, %v970
        %v972 = vpop.f32.mrf.mxu0
        %v973 = vadd.f32 0.0, %v972
        %974 = vmatmul.bf16.gmra.mxu0 %v853
        %v975 = vpop.f32.mrf.mxu0
        %v976 = vadd.f32 0.0, %v975
        %v977 = vpop.f32.mrf.mxu0
        %v978 = vadd.f32 0.0, %v977
        %979 = vmatmul.bf16.gmra.mxu0 %v856
        %v980 = vpop.f32.mrf.mxu0
        %v981 = vadd.f32 0.0, %v980
        %v982 = vpop.f32.mrf.mxu0
        %v983 = vadd.f32 0.0, %v982
        %984 = vmatmul.bf16.gmra.mxu0 %v859
        %v985 = vpop.f32.mrf.mxu0
        %v986 = vadd.f32 0.0, %v985
        %v987 = vpop.f32.mrf.mxu0
        %v988 = vadd.f32 0.0, %v987
        %989 = vmatmul.bf16.gmra.mxu0 %v862
        %v990 = vpop.f32.mrf.mxu0
        %v991 = vadd.f32 0.0, %v990
        %v992 = vpop.f32.mrf.mxu0
        %v993 = vadd.f32 0.0, %v992
        %994 = vmatmul.bf16.gmra.mxu0 %v865
        %v995 = vpop.f32.mrf.mxu0
        %v996 = vadd.f32 0.0, %v995
        %v997 = vpop.f32.mrf.mxu0
        %v998 = vadd.f32 0.0, %v997
        %999 = vmatmul.bf16.gmra.mxu0 %v868
        %v1000 = vpop.f32.mrf.mxu0
        %v1001 = vadd.f32 0.0, %v1000
        %v1002 = vpop.f32.mrf.mxu0
        %v1003 = vadd.f32 0.0, %v1002
        %1004 = vmatmul.bf16.gmra.mxu0 %v871
        %v1005 = vpop.f32.mrf.mxu0
        %v1006 = vadd.f32 0.0, %v1005
        %v1007 = vpop.f32.mrf.mxu0
        %v1008 = vadd.f32 0.0, %v1007
        %1009 = vmatmul.bf16.gmra.mxu0 %v874
        %v1010 = vpop.f32.mrf.mxu0
        %v1011 = vadd.f32 0.0, %v1010
        %v1012 = vpop.f32.mrf.mxu0
        %v1013 = vadd.f32 0.0, %v1012
        %1014 = vmatmul.bf16.gmra.mxu0 %v877
        %v1015 = vpop.f32.mrf.mxu0
        %v1016 = vadd.f32 0.0, %v1015
        %v1017 = vpop.f32.mrf.mxu0
        %v1018 = vadd.f32 0.0, %v1017
        %1019 = vmatmul.bf16.gmra.mxu0 %v880
        %v1020 = vpop.f32.mrf.mxu0
        %v1021 = vadd.f32 0.0, %v1020
        %v1022 = vpop.f32.mrf.mxu0
        %v1023 = vadd.f32 0.0, %v1022
        %1024 = vmatmul.bf16.gmra.mxu0 %v883
        %v1025 = vpop.f32.mrf.mxu0
        %v1026 = vadd.f32 0.0, %v1025
        %v1027 = vpop.f32.mrf.mxu0
        %v1028 = vadd.f32 0.0, %v1027
        %1029 = vmatmul.bf16.gmra.mxu0 %v886
        %v1030 = vpop.f32.mrf.mxu0
        %v1031 = vadd.f32 0.0, %v1030
        %v1032 = vpop.f32.mrf.mxu0
        %v1033 = vadd.f32 0.0, %v1032
        %1034 = vmatmul.bf16.gmra.mxu0 %v889
        %v1035 = vpop.f32.mrf.mxu0
        %v1036 = vadd.f32 0.0, %v1035
        %v1037 = vpop.f32.mrf.mxu0
        %v1038 = vadd.f32 0.0, %v1037
        %1039 = vmatmul.bf16.gmra.mxu0 %v892
        %v1040 = vpop.f32.mrf.mxu0
        %v1041 = vadd.f32 0.0, %v1040
        %v1042 = vpop.f32.mrf.mxu0
        %v1043 = vadd.f32 0.0, %v1042
        %1044 = vmatmul.bf16.gmra.mxu0 %v895
        %v1045 = vpop.f32.mrf.mxu0
        %v1046 = vadd.f32 0.0, %v1045
        %v1047 = vpop.f32.mrf.mxu0
        %v1048 = vadd.f32 0.0, %v1047
        %1049 = vmatmul.bf16.gmra.mxu0 %v898
        %v1050 = vpop.f32.mrf.mxu0
        %v1051 = vadd.f32 0.0, %v1050
        %v1052 = vpop.f32.mrf.mxu0
        %v1053 = vadd.f32 0.0, %v1052
        %1054 = vmatmul.bf16.gmra.mxu0 %v901
        %v1055 = vpop.f32.mrf.mxu0
        %v1056 = vadd.f32 0.0, %v1055
        %v1057 = vpop.f32.mrf.mxu0
        %v1058 = vadd.f32 0.0, %v1057
        %1059 = vmatmul.bf16.gmra.mxu0 %v904
        %v1060 = vpop.f32.mrf.mxu0
        %v1061 = vadd.f32 0.0, %v1060
        %v1062 = vpop.f32.mrf.mxu0
        %v1063 = vadd.f32 0.0, %v1062
        %1064 = vmatmul.bf16.gmra.mxu0 %v907
        %v1065 = vpop.f32.mrf.mxu0
        %v1066 = vadd.f32 0.0, %v1065
        %v1067 = vpop.f32.mrf.mxu0
        %v1068 = vadd.f32 0.0, %v1067
        %1069 = vmatmul.bf16.gmra.mxu0 %v910
        %v1070 = vpop.f32.mrf.mxu0
        %v1071 = vadd.f32 0.0, %v1070
        %v1072 = vpop.f32.mrf.mxu0
        %v1073 = vadd.f32 0.0, %v1072
        %1074 = vmatmul.bf16.gmra.mxu0 %v913
        %v1075 = vpop.f32.mrf.mxu0
        %v1076 = vadd.f32 0.0, %v1075
        %v1077 = vpop.f32.mrf.mxu0
        %v1078 = vadd.f32 0.0, %v1077
        %1079 = vmatmul.bf16.gmra.mxu0 %v916
        %v1080 = vpop.f32.mrf.mxu0
        %v1081 = vadd.f32 0.0, %v1080
        %v1082 = vpop.f32.mrf.mxu0
        %v1083 = vadd.f32 0.0, %v1082
        %1084 = vmatmul.bf16.gmra.mxu0 %v919
        %v1085 = vpop.f32.mrf.mxu0
        %v1086 = vadd.f32 0.0, %v1085
        %v1087 = vpop.f32.mrf.mxu0
        %v1088 = vadd.f32 0.0, %v1087
        %1089 = vdwg.mxu0
        %v1090 = vld [vmem:[%s4] sm:$0xf]
        %v1091 = vld [vmem:[%s4 + $0x4] sm:$0xf]
        %v1092 = vld [vmem:[%s4 + $0x8] sm:$0xf]
        %v1093 = vld [vmem:[%s4 + $0xc] sm:$0xf]
        %v1098 = vunpack.c.l.b16 %v1090
        %v1099 = vunpack.c.l.b16 %v1091
        %v1100 = vunpack.c.l.b16 %v1092
        %v1101 = vunpack.c.l.b16 %v1093
        %v1102 = vpack.c.b16 %v1099, %v1098
        %v1103 = vpack.c.b16 %v1101, %v1100
        %v1107 = vsel %vm824, %v776, 0
        %v1110 = vsel %vm824, %v777, 0
        %v1113 = vsel %vm824, %v778, 0
        %v1116 = vsel %vm824, %v779, 0
        %v1119 = vsel %vm824, %v780, 0
        %v1122 = vsel %vm824, %v781, 0
        %v1125 = vsel %vm824, %v782, 0
        %v1128 = vsel %vm824, %v783, 0
        %v1131 = vsel %vm824, %v784, 0
        %v1134 = vsel %vm824, %v785, 0
        %v1137 = vsel %vm824, %v786, 0
        %v1140 = vsel %vm824, %v787, 0
        %v1143 = vsel %vm824, %v788, 0
        %v1146 = vsel %vm824, %v789, 0
        %v1149 = vsel %vm824, %v790, 0
        %v1152 = vsel %vm824, %v791, 0
        %v1155 = vsel %vm824, %v792, 0
        %v1158 = vsel %vm824, %v793, 0
        %v1161 = vsel %vm824, %v794, 0
        %v1164 = vsel %vm824, %v795, 0
        %v1167 = vsel %vm824, %v796, 0
        %v1170 = vsel %vm824, %v797, 0
        %v1173 = vsel %vm824, %v798, 0
        %v1176 = vsel %vm824, %v799, 0
        %v1179 = vsel %vm824, %v800, 0
        %v1182 = vsel %vm824, %v801, 0
        %v1185 = vsel %vm824, %v802, 0
        %v1188 = vsel %vm824, %v803, 0
        %v1191 = vsel %vm824, %v804, 0
        %v1194 = vsel %vm824, %v805, 0
        %v1197 = vsel %vm824, %v806, 0
        %v1200 = vsel %vm824, %v807, 0
        %1202 = vmatpush.bf16.msra.mxu0 0
        %1203 = vmatpush.bf16.msra.mxu0 0
        %1204 = vmatpush.bf16.msra.mxu0 0
        %1205 = vmatpush.bf16.msra.mxu0 0
        %1206 = vmatpush.bf16.msra.mxu0 0
        %1207 = vmatpush.bf16.msra.mxu0 0
        %1208 = vmatpush.bf16.msra.mxu0 %v1103
        %1209 = vmatpush.bf16.msra.mxu0 %v1102
        %1210 = vmatmul.bf16.gmra.mxu0 %v1107
        %v1211 = vpop.f32.mrf.mxu0
        %v1212 = vadd.f32 0.0, %v1211
        %v1213 = vpop.f32.mrf.mxu0
        %v1214 = vadd.f32 0.0, %v1213
        %1215 = vmatmul.bf16.gmra.mxu0 %v1110
        %v1216 = vpop.f32.mrf.mxu0
        %v1217 = vadd.f32 0.0, %v1216
        %v1218 = vpop.f32.mrf.mxu0
        %v1219 = vadd.f32 0.0, %v1218
        %1220 = vmatmul.bf16.gmra.mxu0 %v1113
        %v1221 = vpop.f32.mrf.mxu0
        %v1222 = vadd.f32 0.0, %v1221
        %v1223 = vpop.f32.mrf.mxu0
        %v1224 = vadd.f32 0.0, %v1223
        %1225 = vmatmul.bf16.gmra.mxu0 %v1116
        %v1226 = vpop.f32.mrf.mxu0
        %v1227 = vadd.f32 0.0, %v1226
        %v1228 = vpop.f32.mrf.mxu0
        %v1229 = vadd.f32 0.0, %v1228
        %1230 = vmatmul.bf16.gmra.mxu0 %v1119
        %v1231 = vpop.f32.mrf.mxu0
        %v1232 = vadd.f32 0.0, %v1231
        %v1233 = vpop.f32.mrf.mxu0
        %v1234 = vadd.f32 0.0, %v1233
        %1235 = vmatmul.bf16.gmra.mxu0 %v1122
        %v1236 = vpop.f32.mrf.mxu0
        %v1237 = vadd.f32 0.0, %v1236
        %v1238 = vpop.f32.mrf.mxu0
        %v1239 = vadd.f32 0.0, %v1238
        %1240 = vmatmul.bf16.gmra.mxu0 %v1125
        %v1241 = vpop.f32.mrf.mxu0
        %v1242 = vadd.f32 0.0, %v1241
        %v1243 = vpop.f32.mrf.mxu0
        %v1244 = vadd.f32 0.0, %v1243
        %1245 = vmatmul.bf16.gmra.mxu0 %v1128
        %v1246 = vpop.f32.mrf.mxu0
        %v1247 = vadd.f32 0.0, %v1246
        %v1248 = vpop.f32.mrf.mxu0
        %v1249 = vadd.f32 0.0, %v1248
        %1250 = vmatmul.bf16.gmra.mxu0 %v1131
        %v1251 = vpop.f32.mrf.mxu0
        %v1252 = vadd.f32 0.0, %v1251
        %v1253 = vpop.f32.mrf.mxu0
        %v1254 = vadd.f32 0.0, %v1253
        %1255 = vmatmul.bf16.gmra.mxu0 %v1134
        %v1256 = vpop.f32.mrf.mxu0
        %v1257 = vadd.f32 0.0, %v1256
        %v1258 = vpop.f32.mrf.mxu0
        %v1259 = vadd.f32 0.0, %v1258
        %1260 = vmatmul.bf16.gmra.mxu0 %v1137
        %v1261 = vpop.f32.mrf.mxu0
        %v1262 = vadd.f32 0.0, %v1261
        %v1263 = vpop.f32.mrf.mxu0
        %v1264 = vadd.f32 0.0, %v1263
        %1265 = vmatmul.bf16.gmra.mxu0 %v1140
        %v1266 = vpop.f32.mrf.mxu0
        %v1267 = vadd.f32 0.0, %v1266
        %v1268 = vpop.f32.mrf.mxu0
        %v1269 = vadd.f32 0.0, %v1268
        %1270 = vmatmul.bf16.gmra.mxu0 %v1143
        %v1271 = vpop.f32.mrf.mxu0
        %v1272 = vadd.f32 0.0, %v1271
        %v1273 = vpop.f32.mrf.mxu0
        %v1274 = vadd.f32 0.0, %v1273
        %1275 = vmatmul.bf16.gmra.mxu0 %v1146
        %v1276 = vpop.f32.mrf.mxu0
        %v1277 = vadd.f32 0.0, %v1276
        %v1278 = vpop.f32.mrf.mxu0
        %v1279 = vadd.f32 0.0, %v1278
        %1280 = vmatmul.bf16.gmra.mxu0 %v1149
        %v1281 = vpop.f32.mrf.mxu0
        %v1282 = vadd.f32 0.0, %v1281
        %v1283 = vpop.f32.mrf.mxu0
        %v1284 = vadd.f32 0.0, %v1283
        %1285 = vmatmul.bf16.gmra.mxu0 %v1152
        %v1286 = vpop.f32.mrf.mxu0
        %v1287 = vadd.f32 0.0, %v1286
        %v1288 = vpop.f32.mrf.mxu0
        %v1289 = vadd.f32 0.0, %v1288
        %1290 = vmatmul.bf16.gmra.mxu0 %v1155
        %v1291 = vpop.f32.mrf.mxu0
        %v1292 = vadd.f32 0.0, %v1291
        %v1293 = vpop.f32.mrf.mxu0
        %v1294 = vadd.f32 0.0, %v1293
        %1295 = vmatmul.bf16.gmra.mxu0 %v1158
        %v1296 = vpop.f32.mrf.mxu0
        %v1297 = vadd.f32 0.0, %v1296
        %v1298 = vpop.f32.mrf.mxu0
        %v1299 = vadd.f32 0.0, %v1298
        %1300 = vmatmul.bf16.gmra.mxu0 %v1161
        %v1301 = vpop.f32.mrf.mxu0
        %v1302 = vadd.f32 0.0, %v1301
        %v1303 = vpop.f32.mrf.mxu0
        %v1304 = vadd.f32 0.0, %v1303
        %1305 = vmatmul.bf16.gmra.mxu0 %v1164
        %v1306 = vpop.f32.mrf.mxu0
        %v1307 = vadd.f32 0.0, %v1306
        %v1308 = vpop.f32.mrf.mxu0
        %v1309 = vadd.f32 0.0, %v1308
        %1310 = vmatmul.bf16.gmra.mxu0 %v1167
        %v1311 = vpop.f32.mrf.mxu0
        %v1312 = vadd.f32 0.0, %v1311
        %v1313 = vpop.f32.mrf.mxu0
        %v1314 = vadd.f32 0.0, %v1313
        %1315 = vmatmul.bf16.gmra.mxu0 %v1170
        %v1316 = vpop.f32.mrf.mxu0
        %v1317 = vadd.f32 0.0, %v1316
        %v1318 = vpop.f32.mrf.mxu0
        %v1319 = vadd.f32 0.0, %v1318
        %1320 = vmatmul.bf16.gmra.mxu0 %v1173
        %v1321 = vpop.f32.mrf.mxu0
        %v1322 = vadd.f32 0.0, %v1321
        %v1323 = vpop.f32.mrf.mxu0
        %v1324 = vadd.f32 0.0, %v1323
        %1325 = vmatmul.bf16.gmra.mxu0 %v1176
        %v1326 = vpop.f32.mrf.mxu0
        %v1327 = vadd.f32 0.0, %v1326
        %v1328 = vpop.f32.mrf.mxu0
        %v1329 = vadd.f32 0.0, %v1328
        %1330 = vmatmul.bf16.gmra.mxu0 %v1179
        %v1331 = vpop.f32.mrf.mxu0
        %v1332 = vadd.f32 0.0, %v1331
        %v1333 = vpop.f32.mrf.mxu0
        %v1334 = vadd.f32 0.0, %v1333
        %1335 = vmatmul.bf16.gmra.mxu0 %v1182
        %v1336 = vpop.f32.mrf.mxu0
        %v1337 = vadd.f32 0.0, %v1336
        %v1338 = vpop.f32.mrf.mxu0
        %v1339 = vadd.f32 0.0, %v1338
        %1340 = vmatmul.bf16.gmra.mxu0 %v1185
        %v1341 = vpop.f32.mrf.mxu0
        %v1342 = vadd.f32 0.0, %v1341
        %v1343 = vpop.f32.mrf.mxu0
        %v1344 = vadd.f32 0.0, %v1343
        %1345 = vmatmul.bf16.gmra.mxu0 %v1188
        %v1346 = vpop.f32.mrf.mxu0
        %v1347 = vadd.f32 0.0, %v1346
        %v1348 = vpop.f32.mrf.mxu0
        %v1349 = vadd.f32 0.0, %v1348
        %1350 = vmatmul.bf16.gmra.mxu0 %v1191
        %v1351 = vpop.f32.mrf.mxu0
        %v1352 = vadd.f32 0.0, %v1351
        %v1353 = vpop.f32.mrf.mxu0
        %v1354 = vadd.f32 0.0, %v1353
        %1355 = vmatmul.bf16.gmra.mxu0 %v1194
        %v1356 = vpop.f32.mrf.mxu0
        %v1357 = vadd.f32 0.0, %v1356
        %v1358 = vpop.f32.mrf.mxu0
        %v1359 = vadd.f32 0.0, %v1358
        %1360 = vmatmul.bf16.gmra.mxu0 %v1197
        %v1361 = vpop.f32.mrf.mxu0
        %v1362 = vadd.f32 0.0, %v1361
        %v1363 = vpop.f32.mrf.mxu0
        %v1364 = vadd.f32 0.0, %v1363
        %1365 = vmatmul.bf16.gmra.mxu0 %v1200
        %v1366 = vpop.f32.mrf.mxu0
        %v1367 = vadd.f32 0.0, %v1366
        %v1368 = vpop.f32.mrf.mxu0
        %v1369 = vadd.f32 0.0, %v1368
        %1370 = vdwg.mxu0
        %v1371 = vld [vmem:[%s5] sm:$0x1]
        %v1372 = vadd.f32 %v931, %v1212
        %v1373 = vadd.f32 %v933, %v1214
        %v1374 = vadd.f32 %v936, %v1217
        %v1375 = vadd.f32 %v938, %v1219
        %v1376 = vadd.f32 %v941, %v1222
        %v1377 = vadd.f32 %v943, %v1224
        %v1378 = vadd.f32 %v946, %v1227
        %v1379 = vadd.f32 %v948, %v1229
        %v1380 = vadd.f32 %v951, %v1232
        %v1381 = vadd.f32 %v953, %v1234
        %v1382 = vadd.f32 %v956, %v1237
        %v1383 = vadd.f32 %v958, %v1239
        %v1384 = vadd.f32 %v961, %v1242
        %v1385 = vadd.f32 %v963, %v1244
        %v1386 = vadd.f32 %v966, %v1247
        %v1387 = vadd.f32 %v968, %v1249
        %v1388 = vadd.f32 %v971, %v1252
        %v1389 = vadd.f32 %v973, %v1254
        %v1390 = vadd.f32 %v976, %v1257
        %v1391 = vadd.f32 %v978, %v1259
        %v1392 = vadd.f32 %v981, %v1262
        %v1393 = vadd.f32 %v983, %v1264
        %v1394 = vadd.f32 %v986, %v1267
        %v1395 = vadd.f32 %v988, %v1269
        %v1396 = vadd.f32 %v991, %v1272
        %v1397 = vadd.f32 %v993, %v1274
        %v1398 = vadd.f32 %v996, %v1277
        %v1399 = vadd.f32 %v998, %v1279
        %v1400 = vadd.f32 %v1001, %v1282
        %v1401 = vadd.f32 %v1003, %v1284
        %v1402 = vadd.f32 %v1006, %v1287
        %v1403 = vadd.f32 %v1008, %v1289
        %v1404 = vadd.f32 %v1011, %v1292
        %v1405 = vadd.f32 %v1013, %v1294
        %v1406 = vadd.f32 %v1016, %v1297
        %v1407 = vadd.f32 %v1018, %v1299
        %v1408 = vadd.f32 %v1021, %v1302
        %v1409 = vadd.f32 %v1023, %v1304
        %v1410 = vadd.f32 %v1026, %v1307
        %v1411 = vadd.f32 %v1028, %v1309
        %v1412 = vadd.f32 %v1031, %v1312
        %v1413 = vadd.f32 %v1033, %v1314
        %v1414 = vadd.f32 %v1036, %v1317
        %v1415 = vadd.f32 %v1038, %v1319
        %v1416 = vadd.f32 %v1041, %v1322
        %v1417 = vadd.f32 %v1043, %v1324
        %v1418 = vadd.f32 %v1046, %v1327
        %v1419 = vadd.f32 %v1048, %v1329
        %v1420 = vadd.f32 %v1051, %v1332
        %v1421 = vadd.f32 %v1053, %v1334
        %v1422 = vadd.f32 %v1056, %v1337
        %v1423 = vadd.f32 %v1058, %v1339
        %v1424 = vadd.f32 %v1061, %v1342
        %v1425 = vadd.f32 %v1063, %v1344
        %v1426 = vadd.f32 %v1066, %v1347
        %v1427 = vadd.f32 %v1068, %v1349
        %v1428 = vadd.f32 %v1071, %v1352
        %v1429 = vadd.f32 %v1073, %v1354
        %v1430 = vadd.f32 %v1076, %v1357
        %v1431 = vadd.f32 %v1078, %v1359
        %v1432 = vadd.f32 %v1081, %v1362
        %v1433 = vadd.f32 %v1083, %v1364
        %v1434 = vadd.f32 %v1086, %v1367
        %v1435 = vadd.f32 %v1088, %v1369
        %v1437 = vperm.slane %v1371, 0
        %v1439 = vadd.f32 %v1372, %v1437
        %v1440 = vadd.f32 %v1373, %v1437
        %v1441 = vadd.f32 %v1374, %v1437
        %v1442 = vadd.f32 %v1375, %v1437
        %v1443 = vadd.f32 %v1376, %v1437
        %v1444 = vadd.f32 %v1377, %v1437
        %v1445 = vadd.f32 %v1378, %v1437
        %v1446 = vadd.f32 %v1379, %v1437
        %v1447 = vadd.f32 %v1380, %v1437
        %v1448 = vadd.f32 %v1381, %v1437
        %v1449 = vadd.f32 %v1382, %v1437
        %v1450 = vadd.f32 %v1383, %v1437
        %v1451 = vadd.f32 %v1384, %v1437
        %v1452 = vadd.f32 %v1385, %v1437
        %v1453 = vadd.f32 %v1386, %v1437
        %v1454 = vadd.f32 %v1387, %v1437
        %v1455 = vadd.f32 %v1388, %v1437
        %v1456 = vadd.f32 %v1389, %v1437
        %v1457 = vadd.f32 %v1390, %v1437
        %v1458 = vadd.f32 %v1391, %v1437
        %v1459 = vadd.f32 %v1392, %v1437
        %v1460 = vadd.f32 %v1393, %v1437
        %v1461 = vadd.f32 %v1394, %v1437
        %v1462 = vadd.f32 %v1395, %v1437
        %v1463 = vadd.f32 %v1396, %v1437
        %v1464 = vadd.f32 %v1397, %v1437
        %v1465 = vadd.f32 %v1398, %v1437
        %v1466 = vadd.f32 %v1399, %v1437
        %v1467 = vadd.f32 %v1400, %v1437
        %v1468 = vadd.f32 %v1401, %v1437
        %v1469 = vadd.f32 %v1402, %v1437
        %v1470 = vadd.f32 %v1403, %v1437
        %v1471 = vadd.f32 %v1404, %v1437
        %v1472 = vadd.f32 %v1405, %v1437
        %v1473 = vadd.f32 %v1406, %v1437
        %v1474 = vadd.f32 %v1407, %v1437
        %v1475 = vadd.f32 %v1408, %v1437
        %v1476 = vadd.f32 %v1409, %v1437
        %v1477 = vadd.f32 %v1410, %v1437
        %v1478 = vadd.f32 %v1411, %v1437
        %v1479 = vadd.f32 %v1412, %v1437
        %v1480 = vadd.f32 %v1413, %v1437
        %v1481 = vadd.f32 %v1414, %v1437
        %v1482 = vadd.f32 %v1415, %v1437
        %v1483 = vadd.f32 %v1416, %v1437
        %v1484 = vadd.f32 %v1417, %v1437
        %v1485 = vadd.f32 %v1418, %v1437
        %v1486 = vadd.f32 %v1419, %v1437
        %v1487 = vadd.f32 %v1420, %v1437
        %v1488 = vadd.f32 %v1421, %v1437
        %v1489 = vadd.f32 %v1422, %v1437
        %v1490 = vadd.f32 %v1423, %v1437
        %v1491 = vadd.f32 %v1424, %v1437
        %v1492 = vadd.f32 %v1425, %v1437
        %v1493 = vadd.f32 %v1426, %v1437
        %v1494 = vadd.f32 %v1427, %v1437
        %v1495 = vadd.f32 %v1428, %v1437
        %v1496 = vadd.f32 %v1429, %v1437
        %v1497 = vadd.f32 %v1430, %v1437
        %v1498 = vadd.f32 %v1431, %v1437
        %v1499 = vadd.f32 %v1432, %v1437
        %v1500 = vadd.f32 %v1433, %v1437
        %v1501 = vadd.f32 %v1434, %v1437
        %v1502 = vadd.f32 %v1435, %v1437
        %v1503 = vsub.f32 %v931, %v1212
        %v1504 = vsub.f32 %v933, %v1214
        %v1505 = vsub.f32 %v936, %v1217
        %v1506 = vsub.f32 %v938, %v1219
        %v1507 = vsub.f32 %v941, %v1222
        %v1508 = vsub.f32 %v943, %v1224
        %v1509 = vsub.f32 %v946, %v1227
        %v1510 = vsub.f32 %v948, %v1229
        %v1511 = vsub.f32 %v951, %v1232
        %v1512 = vsub.f32 %v953, %v1234
        %v1513 = vsub.f32 %v956, %v1237
        %v1514 = vsub.f32 %v958, %v1239
        %v1515 = vsub.f32 %v961, %v1242
        %v1516 = vsub.f32 %v963, %v1244
        %v1517 = vsub.f32 %v966, %v1247
        %v1518 = vsub.f32 %v968, %v1249
        %v1519 = vsub.f32 %v971, %v1252
        %v1520 = vsub.f32 %v973, %v1254
        %v1521 = vsub.f32 %v976, %v1257
        %v1522 = vsub.f32 %v978, %v1259
        %v1523 = vsub.f32 %v981, %v1262
        %v1524 = vsub.f32 %v983, %v1264
        %v1525 = vsub.f32 %v986, %v1267
        %v1526 = vsub.f32 %v988, %v1269
        %v1527 = vsub.f32 %v991, %v1272
        %v1528 = vsub.f32 %v993, %v1274
        %v1529 = vsub.f32 %v996, %v1277
        %v1530 = vsub.f32 %v998, %v1279
        %v1531 = vsub.f32 %v1001, %v1282
        %v1532 = vsub.f32 %v1003, %v1284
        %v1533 = vsub.f32 %v1006, %v1287
        %v1534 = vsub.f32 %v1008, %v1289
        %v1535 = vsub.f32 %v1011, %v1292
        %v1536 = vsub.f32 %v1013, %v1294
        %v1537 = vsub.f32 %v1016, %v1297
        %v1538 = vsub.f32 %v1018, %v1299
        %v1539 = vsub.f32 %v1021, %v1302
        %v1540 = vsub.f32 %v1023, %v1304
        %v1541 = vsub.f32 %v1026, %v1307
        %v1542 = vsub.f32 %v1028, %v1309
        %v1543 = vsub.f32 %v1031, %v1312
        %v1544 = vsub.f32 %v1033, %v1314
        %v1545 = vsub.f32 %v1036, %v1317
        %v1546 = vsub.f32 %v1038, %v1319
        %v1547 = vsub.f32 %v1041, %v1322
        %v1548 = vsub.f32 %v1043, %v1324
        %v1549 = vsub.f32 %v1046, %v1327
        %v1550 = vsub.f32 %v1048, %v1329
        %v1551 = vsub.f32 %v1051, %v1332
        %v1552 = vsub.f32 %v1053, %v1334
        %v1553 = vsub.f32 %v1056, %v1337
        %v1554 = vsub.f32 %v1058, %v1339
        %v1555 = vsub.f32 %v1061, %v1342
        %v1556 = vsub.f32 %v1063, %v1344
        %v1557 = vsub.f32 %v1066, %v1347
        %v1558 = vsub.f32 %v1068, %v1349
        %v1559 = vsub.f32 %v1071, %v1352
        %v1560 = vsub.f32 %v1073, %v1354
        %v1561 = vsub.f32 %v1076, %v1357
        %v1562 = vsub.f32 %v1078, %v1359
        %v1563 = vsub.f32 %v1081, %v1362
        %v1564 = vsub.f32 %v1083, %v1364
        %v1565 = vsub.f32 %v1086, %v1367
        %v1566 = vsub.f32 %v1088, %v1369
        %v1567 = vadd.f32 %v1503, %v1437
        %v1568 = vadd.f32 %v1504, %v1437
        %v1569 = vadd.f32 %v1505, %v1437
        %v1570 = vadd.f32 %v1506, %v1437
        %v1571 = vadd.f32 %v1507, %v1437
        %v1572 = vadd.f32 %v1508, %v1437
        %v1573 = vadd.f32 %v1509, %v1437
        %v1574 = vadd.f32 %v1510, %v1437
        %v1575 = vadd.f32 %v1511, %v1437
        %v1576 = vadd.f32 %v1512, %v1437
        %v1577 = vadd.f32 %v1513, %v1437
        %v1578 = vadd.f32 %v1514, %v1437
        %v1579 = vadd.f32 %v1515, %v1437
        %v1580 = vadd.f32 %v1516, %v1437
        %v1581 = vadd.f32 %v1517, %v1437
        %v1582 = vadd.f32 %v1518, %v1437
        %v1583 = vadd.f32 %v1519, %v1437
        %v1584 = vadd.f32 %v1520, %v1437
        %v1585 = vadd.f32 %v1521, %v1437
        %v1586 = vadd.f32 %v1522, %v1437
        %v1587 = vadd.f32 %v1523, %v1437
        %v1588 = vadd.f32 %v1524, %v1437
        %v1589 = vadd.f32 %v1525, %v1437
        %v1590 = vadd.f32 %v1526, %v1437
        %v1591 = vadd.f32 %v1527, %v1437
        %v1592 = vadd.f32 %v1528, %v1437
        %v1593 = vadd.f32 %v1529, %v1437
        %v1594 = vadd.f32 %v1530, %v1437
        %v1595 = vadd.f32 %v1531, %v1437
        %v1596 = vadd.f32 %v1532, %v1437
        %v1597 = vadd.f32 %v1533, %v1437
        %v1598 = vadd.f32 %v1534, %v1437
        %v1599 = vadd.f32 %v1535, %v1437
        %v1600 = vadd.f32 %v1536, %v1437
        %v1601 = vadd.f32 %v1537, %v1437
        %v1602 = vadd.f32 %v1538, %v1437
        %v1603 = vadd.f32 %v1539, %v1437
        %v1604 = vadd.f32 %v1540, %v1437
        %v1605 = vadd.f32 %v1541, %v1437
        %v1606 = vadd.f32 %v1542, %v1437
        %v1607 = vadd.f32 %v1543, %v1437
        %v1608 = vadd.f32 %v1544, %v1437
        %v1609 = vadd.f32 %v1545, %v1437
        %v1610 = vadd.f32 %v1546, %v1437
        %v1611 = vadd.f32 %v1547, %v1437
        %v1612 = vadd.f32 %v1548, %v1437
        %v1613 = vadd.f32 %v1549, %v1437
        %v1614 = vadd.f32 %v1550, %v1437
        %v1615 = vadd.f32 %v1551, %v1437
        %v1616 = vadd.f32 %v1552, %v1437
        %v1617 = vadd.f32 %v1553, %v1437
        %v1618 = vadd.f32 %v1554, %v1437
        %v1619 = vadd.f32 %v1555, %v1437
        %v1620 = vadd.f32 %v1556, %v1437
        %v1621 = vadd.f32 %v1557, %v1437
        %v1622 = vadd.f32 %v1558, %v1437
        %v1623 = vadd.f32 %v1559, %v1437
        %v1624 = vadd.f32 %v1560, %v1437
        %v1625 = vadd.f32 %v1561, %v1437
        %v1626 = vadd.f32 %v1562, %v1437
        %v1627 = vadd.f32 %v1563, %v1437
        %v1628 = vadd.f32 %v1564, %v1437
        %v1629 = vadd.f32 %v1565, %v1437
        %v1630 = vadd.f32 %v1566, %v1437
        %v1631 = vmax.f32 %v1439, 0.0
        %v1632 = vmax.f32 %v1440, 0.0
        %v1633 = vmax.f32 %v1441, 0.0
        %v1634 = vmax.f32 %v1442, 0.0
        %v1635 = vmax.f32 %v1443, 0.0
        %v1636 = vmax.f32 %v1444, 0.0
        %v1637 = vmax.f32 %v1445, 0.0
        %v1638 = vmax.f32 %v1446, 0.0
        %v1639 = vmax.f32 %v1447, 0.0
        %v1640 = vmax.f32 %v1448, 0.0
        %v1641 = vmax.f32 %v1449, 0.0
        %v1642 = vmax.f32 %v1450, 0.0
        %v1643 = vmax.f32 %v1451, 0.0
        %v1644 = vmax.f32 %v1452, 0.0
        %v1645 = vmax.f32 %v1453, 0.0
        %v1646 = vmax.f32 %v1454, 0.0
        %v1647 = vmax.f32 %v1455, 0.0
        %v1648 = vmax.f32 %v1456, 0.0
        %v1649 = vmax.f32 %v1457, 0.0
        %v1650 = vmax.f32 %v1458, 0.0
        %v1651 = vmax.f32 %v1459, 0.0
        %v1652 = vmax.f32 %v1460, 0.0
        %v1653 = vmax.f32 %v1461, 0.0
        %v1654 = vmax.f32 %v1462, 0.0
        %v1655 = vmax.f32 %v1463, 0.0
        %v1656 = vmax.f32 %v1464, 0.0
        %v1657 = vmax.f32 %v1465, 0.0
        %v1658 = vmax.f32 %v1466, 0.0
        %v1659 = vmax.f32 %v1467, 0.0
        %v1660 = vmax.f32 %v1468, 0.0
        %v1661 = vmax.f32 %v1469, 0.0
        %v1662 = vmax.f32 %v1470, 0.0
        %v1663 = vmax.f32 %v1471, 0.0
        %v1664 = vmax.f32 %v1472, 0.0
        %v1665 = vmax.f32 %v1473, 0.0
        %v1666 = vmax.f32 %v1474, 0.0
        %v1667 = vmax.f32 %v1475, 0.0
        %v1668 = vmax.f32 %v1476, 0.0
        %v1669 = vmax.f32 %v1477, 0.0
        %v1670 = vmax.f32 %v1478, 0.0
        %v1671 = vmax.f32 %v1479, 0.0
        %v1672 = vmax.f32 %v1480, 0.0
        %v1673 = vmax.f32 %v1481, 0.0
        %v1674 = vmax.f32 %v1482, 0.0
        %v1675 = vmax.f32 %v1483, 0.0
        %v1676 = vmax.f32 %v1484, 0.0
        %v1677 = vmax.f32 %v1485, 0.0
        %v1678 = vmax.f32 %v1486, 0.0
        %v1679 = vmax.f32 %v1487, 0.0
        %v1680 = vmax.f32 %v1488, 0.0
        %v1681 = vmax.f32 %v1489, 0.0
        %v1682 = vmax.f32 %v1490, 0.0
        %v1683 = vmax.f32 %v1491, 0.0
        %v1684 = vmax.f32 %v1492, 0.0
        %v1685 = vmax.f32 %v1493, 0.0
        %v1686 = vmax.f32 %v1494, 0.0
        %v1687 = vmax.f32 %v1495, 0.0
        %v1688 = vmax.f32 %v1496, 0.0
        %v1689 = vmax.f32 %v1497, 0.0
        %v1690 = vmax.f32 %v1498, 0.0
        %v1691 = vmax.f32 %v1499, 0.0
        %v1692 = vmax.f32 %v1500, 0.0
        %v1693 = vmax.f32 %v1501, 0.0
        %v1694 = vmax.f32 %v1502, 0.0
        %v1695 = vmax.f32 %v1567, 0.0
        %v1696 = vmax.f32 %v1568, 0.0
        %v1697 = vmax.f32 %v1569, 0.0
        %v1698 = vmax.f32 %v1570, 0.0
        %v1699 = vmax.f32 %v1571, 0.0
        %v1700 = vmax.f32 %v1572, 0.0
        %v1701 = vmax.f32 %v1573, 0.0
        %v1702 = vmax.f32 %v1574, 0.0
        %v1703 = vmax.f32 %v1575, 0.0
        %v1704 = vmax.f32 %v1576, 0.0
        %v1705 = vmax.f32 %v1577, 0.0
        %v1706 = vmax.f32 %v1578, 0.0
        %v1707 = vmax.f32 %v1579, 0.0
        %v1708 = vmax.f32 %v1580, 0.0
        %v1709 = vmax.f32 %v1581, 0.0
        %v1710 = vmax.f32 %v1582, 0.0
        %v1711 = vmax.f32 %v1583, 0.0
        %v1712 = vmax.f32 %v1584, 0.0
        %v1713 = vmax.f32 %v1585, 0.0
        %v1714 = vmax.f32 %v1586, 0.0
        %v1715 = vmax.f32 %v1587, 0.0
        %v1716 = vmax.f32 %v1588, 0.0
        %v1717 = vmax.f32 %v1589, 0.0
        %v1718 = vmax.f32 %v1590, 0.0
        %v1719 = vmax.f32 %v1591, 0.0
        %v1720 = vmax.f32 %v1592, 0.0
        %v1721 = vmax.f32 %v1593, 0.0
        %v1722 = vmax.f32 %v1594, 0.0
        %v1723 = vmax.f32 %v1595, 0.0
        %v1724 = vmax.f32 %v1596, 0.0
        %v1725 = vmax.f32 %v1597, 0.0
        %v1726 = vmax.f32 %v1598, 0.0
        %v1727 = vmax.f32 %v1599, 0.0
        %v1728 = vmax.f32 %v1600, 0.0
        %v1729 = vmax.f32 %v1601, 0.0
        %v1730 = vmax.f32 %v1602, 0.0
        %v1731 = vmax.f32 %v1603, 0.0
        %v1732 = vmax.f32 %v1604, 0.0
        %v1733 = vmax.f32 %v1605, 0.0
        %v1734 = vmax.f32 %v1606, 0.0
        %v1735 = vmax.f32 %v1607, 0.0
        %v1736 = vmax.f32 %v1608, 0.0
        %v1737 = vmax.f32 %v1609, 0.0
        %v1738 = vmax.f32 %v1610, 0.0
        %v1739 = vmax.f32 %v1611, 0.0
        %v1740 = vmax.f32 %v1612, 0.0
        %v1741 = vmax.f32 %v1613, 0.0
        %v1742 = vmax.f32 %v1614, 0.0
        %v1743 = vmax.f32 %v1615, 0.0
        %v1744 = vmax.f32 %v1616, 0.0
        %v1745 = vmax.f32 %v1617, 0.0
        %v1746 = vmax.f32 %v1618, 0.0
        %v1747 = vmax.f32 %v1619, 0.0
        %v1748 = vmax.f32 %v1620, 0.0
        %v1749 = vmax.f32 %v1621, 0.0
        %v1750 = vmax.f32 %v1622, 0.0
        %v1751 = vmax.f32 %v1623, 0.0
        %v1752 = vmax.f32 %v1624, 0.0
        %v1753 = vmax.f32 %v1625, 0.0
        %v1754 = vmax.f32 %v1626, 0.0
        %v1755 = vmax.f32 %v1627, 0.0
        %v1756 = vmax.f32 %v1628, 0.0
        %v1757 = vmax.f32 %v1629, 0.0
        %v1758 = vmax.f32 %v1630, 0.0
        %v1759 = vpack.c.bf16 %v1632, %v1631
        %v1760 = vpack.c.bf16 %v1634, %v1633
        %v1761 = vpack.c.bf16 %v1636, %v1635
        %v1762 = vpack.c.bf16 %v1638, %v1637
        %v1763 = vpack.c.bf16 %v1640, %v1639
        %v1764 = vpack.c.bf16 %v1642, %v1641
        %v1765 = vpack.c.bf16 %v1644, %v1643
        %v1766 = vpack.c.bf16 %v1646, %v1645
        %v1767 = vpack.c.bf16 %v1648, %v1647
        %v1768 = vpack.c.bf16 %v1650, %v1649
        %v1769 = vpack.c.bf16 %v1652, %v1651
        %v1770 = vpack.c.bf16 %v1654, %v1653
        %v1771 = vpack.c.bf16 %v1656, %v1655
        %v1772 = vpack.c.bf16 %v1658, %v1657
        %v1773 = vpack.c.bf16 %v1660, %v1659
        %v1774 = vpack.c.bf16 %v1662, %v1661
        %v1775 = vpack.c.bf16 %v1664, %v1663
        %v1776 = vpack.c.bf16 %v1666, %v1665
        %v1777 = vpack.c.bf16 %v1668, %v1667
        %v1778 = vpack.c.bf16 %v1670, %v1669
        %v1779 = vpack.c.bf16 %v1672, %v1671
        %v1780 = vpack.c.bf16 %v1674, %v1673
        %v1781 = vpack.c.bf16 %v1676, %v1675
        %v1782 = vpack.c.bf16 %v1678, %v1677
        %v1783 = vpack.c.bf16 %v1680, %v1679
        %v1784 = vpack.c.bf16 %v1682, %v1681
        %v1785 = vpack.c.bf16 %v1684, %v1683
        %v1786 = vpack.c.bf16 %v1686, %v1685
        %v1787 = vpack.c.bf16 %v1688, %v1687
        %v1788 = vpack.c.bf16 %v1690, %v1689
        %v1789 = vpack.c.bf16 %v1692, %v1691
        %v1790 = vpack.c.bf16 %v1694, %v1693
        %v1791 = vpack.c.bf16 %v1696, %v1695
        %v1792 = vpack.c.bf16 %v1698, %v1697
        %v1793 = vpack.c.bf16 %v1700, %v1699
        %v1794 = vpack.c.bf16 %v1702, %v1701
        %v1795 = vpack.c.bf16 %v1704, %v1703
        %v1796 = vpack.c.bf16 %v1706, %v1705
        %v1797 = vpack.c.bf16 %v1708, %v1707
        %v1798 = vpack.c.bf16 %v1710, %v1709
        %v1799 = vpack.c.bf16 %v1712, %v1711
        %v1800 = vpack.c.bf16 %v1714, %v1713
        %v1801 = vpack.c.bf16 %v1716, %v1715
        %v1802 = vpack.c.bf16 %v1718, %v1717
        %v1803 = vpack.c.bf16 %v1720, %v1719
        %v1804 = vpack.c.bf16 %v1722, %v1721
        %v1805 = vpack.c.bf16 %v1724, %v1723
        %v1806 = vpack.c.bf16 %v1726, %v1725
        %v1807 = vpack.c.bf16 %v1728, %v1727
        %v1808 = vpack.c.bf16 %v1730, %v1729
        %v1809 = vpack.c.bf16 %v1732, %v1731
        %v1810 = vpack.c.bf16 %v1734, %v1733
        %v1811 = vpack.c.bf16 %v1736, %v1735
        %v1812 = vpack.c.bf16 %v1738, %v1737
        %v1813 = vpack.c.bf16 %v1740, %v1739
        %v1814 = vpack.c.bf16 %v1742, %v1741
        %v1815 = vpack.c.bf16 %v1744, %v1743
        %v1816 = vpack.c.bf16 %v1746, %v1745
        %v1817 = vpack.c.bf16 %v1748, %v1747
        %v1818 = vpack.c.bf16 %v1750, %v1749
        %v1819 = vpack.c.bf16 %v1752, %v1751
        %v1820 = vpack.c.bf16 %v1754, %v1753
        %v1821 = vpack.c.bf16 %v1756, %v1755
        %v1822 = vpack.c.bf16 %v1758, %v1757
        %v1823 = vld [vmem:[%s6] sm:$0xf]
        %v1824 = vld [vmem:[%s6 + $0x4] sm:$0xf]
        %v1825 = vld [vmem:[%s6 + $0x8] sm:$0xf]
        %v1826 = vld [vmem:[%s6 + $0xc] sm:$0xf]
        %v1827 = vld [vmem:[%s7] sm:$0x1]
        %v1829 = vperm.slane %v1827, 0
        %v1835 = vunpack.c.l.b16 %v1823
        %v1836 = vunpack.c.l.b16 %v1824
        %v1837 = vunpack.c.l.b16 %v1825
        %v1838 = vunpack.c.l.b16 %v1826
        %v1839 = vpack.c.b16 %v1836, %v1835
        %v1840 = vpack.c.b16 %v1838, %v1837
        %v1844 = vsel %vm824, %v1759, 0
        %v1847 = vsel %vm824, %v1760, 0
        %v1850 = vsel %vm824, %v1761, 0
        %v1853 = vsel %vm824, %v1762, 0
        %v1856 = vsel %vm824, %v1763, 0
        %v1859 = vsel %vm824, %v1764, 0
        %v1862 = vsel %vm824, %v1765, 0
        %v1865 = vsel %vm824, %v1766, 0
        %v1868 = vsel %vm824, %v1767, 0
        %v1871 = vsel %vm824, %v1768, 0
        %v1874 = vsel %vm824, %v1769, 0
        %v1877 = vsel %vm824, %v1770, 0
        %v1880 = vsel %vm824, %v1771, 0
        %v1883 = vsel %vm824, %v1772, 0
        %v1886 = vsel %vm824, %v1773, 0
        %v1889 = vsel %vm824, %v1774, 0
        %v1892 = vsel %vm824, %v1775, 0
        %v1895 = vsel %vm824, %v1776, 0
        %v1898 = vsel %vm824, %v1777, 0
        %v1901 = vsel %vm824, %v1778, 0
        %v1904 = vsel %vm824, %v1779, 0
        %v1907 = vsel %vm824, %v1780, 0
        %v1910 = vsel %vm824, %v1781, 0
        %v1913 = vsel %vm824, %v1782, 0
        %v1916 = vsel %vm824, %v1783, 0
        %v1919 = vsel %vm824, %v1784, 0
        %v1922 = vsel %vm824, %v1785, 0
        %v1925 = vsel %vm824, %v1786, 0
        %v1928 = vsel %vm824, %v1787, 0
        %v1931 = vsel %vm824, %v1788, 0
        %v1934 = vsel %vm824, %v1789, 0
        %v1937 = vsel %vm824, %v1790, 0
        %v1940 = vsel %vm824, %v1791, 0
        %v1943 = vsel %vm824, %v1792, 0
        %v1946 = vsel %vm824, %v1793, 0
        %v1949 = vsel %vm824, %v1794, 0
        %v1952 = vsel %vm824, %v1795, 0
        %v1955 = vsel %vm824, %v1796, 0
        %v1958 = vsel %vm824, %v1797, 0
        %v1961 = vsel %vm824, %v1798, 0
        %v1964 = vsel %vm824, %v1799, 0
        %v1967 = vsel %vm824, %v1800, 0
        %v1970 = vsel %vm824, %v1801, 0
        %v1973 = vsel %vm824, %v1802, 0
        %v1976 = vsel %vm824, %v1803, 0
        %v1979 = vsel %vm824, %v1804, 0
        %v1982 = vsel %vm824, %v1805, 0
        %v1985 = vsel %vm824, %v1806, 0
        %v1988 = vsel %vm824, %v1807, 0
        %v1991 = vsel %vm824, %v1808, 0
        %v1994 = vsel %vm824, %v1809, 0
        %v1997 = vsel %vm824, %v1810, 0
        %v2000 = vsel %vm824, %v1811, 0
        %v2003 = vsel %vm824, %v1812, 0
        %v2006 = vsel %vm824, %v1813, 0
        %v2009 = vsel %vm824, %v1814, 0
        %v2012 = vsel %vm824, %v1815, 0
        %v2015 = vsel %vm824, %v1816, 0
        %v2018 = vsel %vm824, %v1817, 0
        %v2021 = vsel %vm824, %v1818, 0
        %v2024 = vsel %vm824, %v1819, 0
        %v2027 = vsel %vm824, %v1820, 0
        %v2030 = vsel %vm824, %v1821, 0
        %v2033 = vsel %vm824, %v1822, 0
        %2035 = vmatpush.bf16.msra.mxu0 0
        %2036 = vmatpush.bf16.msra.mxu0 0
        %2037 = vmatpush.bf16.msra.mxu0 0
        %2038 = vmatpush.bf16.msra.mxu0 0
        %2039 = vmatpush.bf16.msra.mxu0 0
        %2040 = vmatpush.bf16.msra.mxu0 0
        %2041 = vmatpush.bf16.msra.mxu0 %v1840
        %2042 = vmatpush.bf16.msra.mxu0 %v1839
        %2043 = vmatmul.bf16.gmra.mxu0 %v1844
        %v2044 = vpop.f32.mrf.mxu0
        %v2045 = vadd.f32 %v1829, %v2044
        %v2046 = vpop.f32.mrf.mxu0
        %v2047 = vadd.f32 %v1829, %v2046
        %2048 = vmatmul.bf16.gmra.mxu0 %v1847
        %v2049 = vpop.f32.mrf.mxu0
        %v2050 = vadd.f32 %v1829, %v2049
        %v2051 = vpop.f32.mrf.mxu0
        %v2052 = vadd.f32 %v1829, %v2051
        %2053 = vmatmul.bf16.gmra.mxu0 %v1850
        %v2054 = vpop.f32.mrf.mxu0
        %v2055 = vadd.f32 %v1829, %v2054
        %v2056 = vpop.f32.mrf.mxu0
        %v2057 = vadd.f32 %v1829, %v2056
        %2058 = vmatmul.bf16.gmra.mxu0 %v1853
        %v2059 = vpop.f32.mrf.mxu0
        %v2060 = vadd.f32 %v1829, %v2059
        %v2061 = vpop.f32.mrf.mxu0
        %v2062 = vadd.f32 %v1829, %v2061
        %2063 = vmatmul.bf16.gmra.mxu0 %v1856
        %v2064 = vpop.f32.mrf.mxu0
        %v2065 = vadd.f32 %v1829, %v2064
        %v2066 = vpop.f32.mrf.mxu0
        %v2067 = vadd.f32 %v1829, %v2066
        %2068 = vmatmul.bf16.gmra.mxu0 %v1859
        %v2069 = vpop.f32.mrf.mxu0
        %v2070 = vadd.f32 %v1829, %v2069
        %v2071 = vpop.f32.mrf.mxu0
        %v2072 = vadd.f32 %v1829, %v2071
        %2073 = vmatmul.bf16.gmra.mxu0 %v1862
        %v2074 = vpop.f32.mrf.mxu0
        %v2075 = vadd.f32 %v1829, %v2074
        %v2076 = vpop.f32.mrf.mxu0
        %v2077 = vadd.f32 %v1829, %v2076
        %2078 = vmatmul.bf16.gmra.mxu0 %v1865
        %v2079 = vpop.f32.mrf.mxu0
        %v2080 = vadd.f32 %v1829, %v2079
        %v2081 = vpop.f32.mrf.mxu0
        %v2082 = vadd.f32 %v1829, %v2081
        %2083 = vmatmul.bf16.gmra.mxu0 %v1868
        %v2084 = vpop.f32.mrf.mxu0
        %v2085 = vadd.f32 %v1829, %v2084
        %v2086 = vpop.f32.mrf.mxu0
        %v2087 = vadd.f32 %v1829, %v2086
        %2088 = vmatmul.bf16.gmra.mxu0 %v1871
        %v2089 = vpop.f32.mrf.mxu0
        %v2090 = vadd.f32 %v1829, %v2089
        %v2091 = vpop.f32.mrf.mxu0
        %v2092 = vadd.f32 %v1829, %v2091
        %2093 = vmatmul.bf16.gmra.mxu0 %v1874
        %v2094 = vpop.f32.mrf.mxu0
        %v2095 = vadd.f32 %v1829, %v2094
        %v2096 = vpop.f32.mrf.mxu0
        %v2097 = vadd.f32 %v1829, %v2096
        %2098 = vmatmul.bf16.gmra.mxu0 %v1877
        %v2099 = vpop.f32.mrf.mxu0
        %v2100 = vadd.f32 %v1829, %v2099
        %v2101 = vpop.f32.mrf.mxu0
        %v2102 = vadd.f32 %v1829, %v2101
        %2103 = vmatmul.bf16.gmra.mxu0 %v1880
        %v2104 = vpop.f32.mrf.mxu0
        %v2105 = vadd.f32 %v1829, %v2104
        %v2106 = vpop.f32.mrf.mxu0
        %v2107 = vadd.f32 %v1829, %v2106
        %2108 = vmatmul.bf16.gmra.mxu0 %v1883
        %v2109 = vpop.f32.mrf.mxu0
        %v2110 = vadd.f32 %v1829, %v2109
        %v2111 = vpop.f32.mrf.mxu0
        %v2112 = vadd.f32 %v1829, %v2111
        %2113 = vmatmul.bf16.gmra.mxu0 %v1886
        %v2114 = vpop.f32.mrf.mxu0
        %v2115 = vadd.f32 %v1829, %v2114
        %v2116 = vpop.f32.mrf.mxu0
        %v2117 = vadd.f32 %v1829, %v2116
        %2118 = vmatmul.bf16.gmra.mxu0 %v1889
        %v2119 = vpop.f32.mrf.mxu0
        %v2120 = vadd.f32 %v1829, %v2119
        %v2121 = vpop.f32.mrf.mxu0
        %v2122 = vadd.f32 %v1829, %v2121
        %2123 = vmatmul.bf16.gmra.mxu0 %v1892
        %v2124 = vpop.f32.mrf.mxu0
        %v2125 = vadd.f32 %v1829, %v2124
        %v2126 = vpop.f32.mrf.mxu0
        %v2127 = vadd.f32 %v1829, %v2126
        %2128 = vmatmul.bf16.gmra.mxu0 %v1895
        %v2129 = vpop.f32.mrf.mxu0
        %v2130 = vadd.f32 %v1829, %v2129
        %v2131 = vpop.f32.mrf.mxu0
        %v2132 = vadd.f32 %v1829, %v2131
        %2133 = vmatmul.bf16.gmra.mxu0 %v1898
        %v2134 = vpop.f32.mrf.mxu0
        %v2135 = vadd.f32 %v1829, %v2134
        %v2136 = vpop.f32.mrf.mxu0
        %v2137 = vadd.f32 %v1829, %v2136
        %2138 = vmatmul.bf16.gmra.mxu0 %v1901
        %v2139 = vpop.f32.mrf.mxu0
        %v2140 = vadd.f32 %v1829, %v2139
        %v2141 = vpop.f32.mrf.mxu0
        %v2142 = vadd.f32 %v1829, %v2141
        %2143 = vmatmul.bf16.gmra.mxu0 %v1904
        %v2144 = vpop.f32.mrf.mxu0
        %v2145 = vadd.f32 %v1829, %v2144
        %v2146 = vpop.f32.mrf.mxu0
        %v2147 = vadd.f32 %v1829, %v2146
        %2148 = vmatmul.bf16.gmra.mxu0 %v1907
        %v2149 = vpop.f32.mrf.mxu0
        %v2150 = vadd.f32 %v1829, %v2149
        %v2151 = vpop.f32.mrf.mxu0
        %v2152 = vadd.f32 %v1829, %v2151
        %2153 = vmatmul.bf16.gmra.mxu0 %v1910
        %v2154 = vpop.f32.mrf.mxu0
        %v2155 = vadd.f32 %v1829, %v2154
        %v2156 = vpop.f32.mrf.mxu0
        %v2157 = vadd.f32 %v1829, %v2156
        %2158 = vmatmul.bf16.gmra.mxu0 %v1913
        %v2159 = vpop.f32.mrf.mxu0
        %v2160 = vadd.f32 %v1829, %v2159
        %v2161 = vpop.f32.mrf.mxu0
        %v2162 = vadd.f32 %v1829, %v2161
        %2163 = vmatmul.bf16.gmra.mxu0 %v1916
        %v2164 = vpop.f32.mrf.mxu0
        %v2165 = vadd.f32 %v1829, %v2164
        %v2166 = vpop.f32.mrf.mxu0
        %v2167 = vadd.f32 %v1829, %v2166
        %2168 = vmatmul.bf16.gmra.mxu0 %v1919
        %v2169 = vpop.f32.mrf.mxu0
        %v2170 = vadd.f32 %v1829, %v2169
        %v2171 = vpop.f32.mrf.mxu0
        %v2172 = vadd.f32 %v1829, %v2171
        %2173 = vmatmul.bf16.gmra.mxu0 %v1922
        %v2174 = vpop.f32.mrf.mxu0
        %v2175 = vadd.f32 %v1829, %v2174
        %v2176 = vpop.f32.mrf.mxu0
        %v2177 = vadd.f32 %v1829, %v2176
        %2178 = vmatmul.bf16.gmra.mxu0 %v1925
        %v2179 = vpop.f32.mrf.mxu0
        %v2180 = vadd.f32 %v1829, %v2179
        %v2181 = vpop.f32.mrf.mxu0
        %v2182 = vadd.f32 %v1829, %v2181
        %2183 = vmatmul.bf16.gmra.mxu0 %v1928
        %v2184 = vpop.f32.mrf.mxu0
        %v2185 = vadd.f32 %v1829, %v2184
        %v2186 = vpop.f32.mrf.mxu0
        %v2187 = vadd.f32 %v1829, %v2186
        %2188 = vmatmul.bf16.gmra.mxu0 %v1931
        %v2189 = vpop.f32.mrf.mxu0
        %v2190 = vadd.f32 %v1829, %v2189
        %v2191 = vpop.f32.mrf.mxu0
        %v2192 = vadd.f32 %v1829, %v2191
        %2193 = vmatmul.bf16.gmra.mxu0 %v1934
        %v2194 = vpop.f32.mrf.mxu0
        %v2195 = vadd.f32 %v1829, %v2194
        %v2196 = vpop.f32.mrf.mxu0
        %v2197 = vadd.f32 %v1829, %v2196
        %2198 = vmatmul.bf16.gmra.mxu0 %v1937
        %v2199 = vpop.f32.mrf.mxu0
        %v2200 = vadd.f32 %v1829, %v2199
        %v2201 = vpop.f32.mrf.mxu0
        %v2202 = vadd.f32 %v1829, %v2201
        %2203 = vmatmul.bf16.gmra.mxu0 %v1940
        %v2204 = vpop.f32.mrf.mxu0
        %v2205 = vadd.f32 %v1829, %v2204
        %v2206 = vpop.f32.mrf.mxu0
        %v2207 = vadd.f32 %v1829, %v2206
        %2208 = vmatmul.bf16.gmra.mxu0 %v1943
        %v2209 = vpop.f32.mrf.mxu0
        %v2210 = vadd.f32 %v1829, %v2209
        %v2211 = vpop.f32.mrf.mxu0
        %v2212 = vadd.f32 %v1829, %v2211
        %2213 = vmatmul.bf16.gmra.mxu0 %v1946
        %v2214 = vpop.f32.mrf.mxu0
        %v2215 = vadd.f32 %v1829, %v2214
        %v2216 = vpop.f32.mrf.mxu0
        %v2217 = vadd.f32 %v1829, %v2216
        %2218 = vmatmul.bf16.gmra.mxu0 %v1949
        %v2219 = vpop.f32.mrf.mxu0
        %v2220 = vadd.f32 %v1829, %v2219
        %v2221 = vpop.f32.mrf.mxu0
        %v2222 = vadd.f32 %v1829, %v2221
        %2223 = vmatmul.bf16.gmra.mxu0 %v1952
        %v2224 = vpop.f32.mrf.mxu0
        %v2225 = vadd.f32 %v1829, %v2224
        %v2226 = vpop.f32.mrf.mxu0
        %v2227 = vadd.f32 %v1829, %v2226
        %2228 = vmatmul.bf16.gmra.mxu0 %v1955
        %v2229 = vpop.f32.mrf.mxu0
        %v2230 = vadd.f32 %v1829, %v2229
        %v2231 = vpop.f32.mrf.mxu0
        %v2232 = vadd.f32 %v1829, %v2231
        %2233 = vmatmul.bf16.gmra.mxu0 %v1958
        %v2234 = vpop.f32.mrf.mxu0
        %v2235 = vadd.f32 %v1829, %v2234
        %v2236 = vpop.f32.mrf.mxu0
        %v2237 = vadd.f32 %v1829, %v2236
        %2238 = vmatmul.bf16.gmra.mxu0 %v1961
        %v2239 = vpop.f32.mrf.mxu0
        %v2240 = vadd.f32 %v1829, %v2239
        %v2241 = vpop.f32.mrf.mxu0
        %v2242 = vadd.f32 %v1829, %v2241
        %2243 = vmatmul.bf16.gmra.mxu0 %v1964
        %v2244 = vpop.f32.mrf.mxu0
        %v2245 = vadd.f32 %v1829, %v2244
        %v2246 = vpop.f32.mrf.mxu0
        %v2247 = vadd.f32 %v1829, %v2246
        %2248 = vmatmul.bf16.gmra.mxu0 %v1967
        %v2249 = vpop.f32.mrf.mxu0
        %v2250 = vadd.f32 %v1829, %v2249
        %v2251 = vpop.f32.mrf.mxu0
        %v2252 = vadd.f32 %v1829, %v2251
        %2253 = vmatmul.bf16.gmra.mxu0 %v1970
        %v2254 = vpop.f32.mrf.mxu0
        %v2255 = vadd.f32 %v1829, %v2254
        %v2256 = vpop.f32.mrf.mxu0
        %v2257 = vadd.f32 %v1829, %v2256
        %2258 = vmatmul.bf16.gmra.mxu0 %v1973
        %v2259 = vpop.f32.mrf.mxu0
        %v2260 = vadd.f32 %v1829, %v2259
        %v2261 = vpop.f32.mrf.mxu0
        %v2262 = vadd.f32 %v1829, %v2261
        %2263 = vmatmul.bf16.gmra.mxu0 %v1976
        %v2264 = vpop.f32.mrf.mxu0
        %v2265 = vadd.f32 %v1829, %v2264
        %v2266 = vpop.f32.mrf.mxu0
        %v2267 = vadd.f32 %v1829, %v2266
        %2268 = vmatmul.bf16.gmra.mxu0 %v1979
        %v2269 = vpop.f32.mrf.mxu0
        %v2270 = vadd.f32 %v1829, %v2269
        %v2271 = vpop.f32.mrf.mxu0
        %v2272 = vadd.f32 %v1829, %v2271
        %2273 = vmatmul.bf16.gmra.mxu0 %v1982
        %v2274 = vpop.f32.mrf.mxu0
        %v2275 = vadd.f32 %v1829, %v2274
        %v2276 = vpop.f32.mrf.mxu0
        %v2277 = vadd.f32 %v1829, %v2276
        %2278 = vmatmul.bf16.gmra.mxu0 %v1985
        %v2279 = vpop.f32.mrf.mxu0
        %v2280 = vadd.f32 %v1829, %v2279
        %v2281 = vpop.f32.mrf.mxu0
        %v2282 = vadd.f32 %v1829, %v2281
        %2283 = vmatmul.bf16.gmra.mxu0 %v1988
        %v2284 = vpop.f32.mrf.mxu0
        %v2285 = vadd.f32 %v1829, %v2284
        %v2286 = vpop.f32.mrf.mxu0
        %v2287 = vadd.f32 %v1829, %v2286
        %2288 = vmatmul.bf16.gmra.mxu0 %v1991
        %v2289 = vpop.f32.mrf.mxu0
        %v2290 = vadd.f32 %v1829, %v2289
        %v2291 = vpop.f32.mrf.mxu0
        %v2292 = vadd.f32 %v1829, %v2291
        %2293 = vmatmul.bf16.gmra.mxu0 %v1994
        %v2294 = vpop.f32.mrf.mxu0
        %v2295 = vadd.f32 %v1829, %v2294
        %v2296 = vpop.f32.mrf.mxu0
        %v2297 = vadd.f32 %v1829, %v2296
        %2298 = vmatmul.bf16.gmra.mxu0 %v1997
        %v2299 = vpop.f32.mrf.mxu0
        %v2300 = vadd.f32 %v1829, %v2299
        %v2301 = vpop.f32.mrf.mxu0
        %v2302 = vadd.f32 %v1829, %v2301
        %2303 = vmatmul.bf16.gmra.mxu0 %v2000
        %v2304 = vpop.f32.mrf.mxu0
        %v2305 = vadd.f32 %v1829, %v2304
        %v2306 = vpop.f32.mrf.mxu0
        %v2307 = vadd.f32 %v1829, %v2306
        %2308 = vmatmul.bf16.gmra.mxu0 %v2003
        %v2309 = vpop.f32.mrf.mxu0
        %v2310 = vadd.f32 %v1829, %v2309
        %v2311 = vpop.f32.mrf.mxu0
        %v2312 = vadd.f32 %v1829, %v2311
        %2313 = vmatmul.bf16.gmra.mxu0 %v2006
        %v2314 = vpop.f32.mrf.mxu0
        %v2315 = vadd.f32 %v1829, %v2314
        %v2316 = vpop.f32.mrf.mxu0
        %v2317 = vadd.f32 %v1829, %v2316
        %2318 = vmatmul.bf16.gmra.mxu0 %v2009
        %v2319 = vpop.f32.mrf.mxu0
        %v2320 = vadd.f32 %v1829, %v2319
        %v2321 = vpop.f32.mrf.mxu0
        %v2322 = vadd.f32 %v1829, %v2321
        %2323 = vmatmul.bf16.gmra.mxu0 %v2012
        %v2324 = vpop.f32.mrf.mxu0
        %v2325 = vadd.f32 %v1829, %v2324
        %v2326 = vpop.f32.mrf.mxu0
        %v2327 = vadd.f32 %v1829, %v2326
        %2328 = vmatmul.bf16.gmra.mxu0 %v2015
        %v2329 = vpop.f32.mrf.mxu0
        %v2330 = vadd.f32 %v1829, %v2329
        %v2331 = vpop.f32.mrf.mxu0
        %v2332 = vadd.f32 %v1829, %v2331
        %2333 = vmatmul.bf16.gmra.mxu0 %v2018
        %v2334 = vpop.f32.mrf.mxu0
        %v2335 = vadd.f32 %v1829, %v2334
        %v2336 = vpop.f32.mrf.mxu0
        %v2337 = vadd.f32 %v1829, %v2336
        %2338 = vmatmul.bf16.gmra.mxu0 %v2021
        %v2339 = vpop.f32.mrf.mxu0
        %v2340 = vadd.f32 %v1829, %v2339
        %v2341 = vpop.f32.mrf.mxu0
        %v2342 = vadd.f32 %v1829, %v2341
        %2343 = vmatmul.bf16.gmra.mxu0 %v2024
        %v2344 = vpop.f32.mrf.mxu0
        %v2345 = vadd.f32 %v1829, %v2344
        %v2346 = vpop.f32.mrf.mxu0
        %v2347 = vadd.f32 %v1829, %v2346
        %2348 = vmatmul.bf16.gmra.mxu0 %v2027
        %v2349 = vpop.f32.mrf.mxu0
        %v2350 = vadd.f32 %v1829, %v2349
        %v2351 = vpop.f32.mrf.mxu0
        %v2352 = vadd.f32 %v1829, %v2351
        %2353 = vmatmul.bf16.gmra.mxu0 %v2030
        %v2354 = vpop.f32.mrf.mxu0
        %v2355 = vadd.f32 %v1829, %v2354
        %v2356 = vpop.f32.mrf.mxu0
        %v2357 = vadd.f32 %v1829, %v2356
        %2358 = vmatmul.bf16.gmra.mxu0 %v2033
        %v2359 = vpop.f32.mrf.mxu0
        %v2360 = vadd.f32 %v1829, %v2359
        %v2361 = vpop.f32.mrf.mxu0
        %v2362 = vadd.f32 %v1829, %v2361
        %2363 = vdwg.mxu0
        %v2364 = vmax.f32 %v2045, 0.0
        %v2365 = vmax.f32 %v2047, 0.0
        %v2366 = vmax.f32 %v2050, 0.0
        %v2367 = vmax.f32 %v2052, 0.0
        %v2368 = vmax.f32 %v2055, 0.0
        %v2369 = vmax.f32 %v2057, 0.0
        %v2370 = vmax.f32 %v2060, 0.0
        %v2371 = vmax.f32 %v2062, 0.0
        %v2372 = vmax.f32 %v2065, 0.0
        %v2373 = vmax.f32 %v2067, 0.0
        %v2374 = vmax.f32 %v2070, 0.0
        %v2375 = vmax.f32 %v2072, 0.0
        %v2376 = vmax.f32 %v2075, 0.0
        %v2377 = vmax.f32 %v2077, 0.0
        %v2378 = vmax.f32 %v2080, 0.0
        %v2379 = vmax.f32 %v2082, 0.0
        %v2380 = vmax.f32 %v2085, 0.0
        %v2381 = vmax.f32 %v2087, 0.0
        %v2382 = vmax.f32 %v2090, 0.0
        %v2383 = vmax.f32 %v2092, 0.0
        %v2384 = vmax.f32 %v2095, 0.0
        %v2385 = vmax.f32 %v2097, 0.0
        %v2386 = vmax.f32 %v2100, 0.0
        %v2387 = vmax.f32 %v2102, 0.0
        %v2388 = vmax.f32 %v2105, 0.0
        %v2389 = vmax.f32 %v2107, 0.0
        %v2390 = vmax.f32 %v2110, 0.0
        %v2391 = vmax.f32 %v2112, 0.0
        %v2392 = vmax.f32 %v2115, 0.0
        %v2393 = vmax.f32 %v2117, 0.0
        %v2394 = vmax.f32 %v2120, 0.0
        %v2395 = vmax.f32 %v2122, 0.0
        %v2396 = vmax.f32 %v2125, 0.0
        %v2397 = vmax.f32 %v2127, 0.0
        %v2398 = vmax.f32 %v2130, 0.0
        %v2399 = vmax.f32 %v2132, 0.0
        %v2400 = vmax.f32 %v2135, 0.0
        %v2401 = vmax.f32 %v2137, 0.0
        %v2402 = vmax.f32 %v2140, 0.0
        %v2403 = vmax.f32 %v2142, 0.0
        %v2404 = vmax.f32 %v2145, 0.0
        %v2405 = vmax.f32 %v2147, 0.0
        %v2406 = vmax.f32 %v2150, 0.0
        %v2407 = vmax.f32 %v2152, 0.0
        %v2408 = vmax.f32 %v2155, 0.0
        %v2409 = vmax.f32 %v2157, 0.0
        %v2410 = vmax.f32 %v2160, 0.0
        %v2411 = vmax.f32 %v2162, 0.0
        %v2412 = vmax.f32 %v2165, 0.0
        %v2413 = vmax.f32 %v2167, 0.0
        %v2414 = vmax.f32 %v2170, 0.0
        %v2415 = vmax.f32 %v2172, 0.0
        %v2416 = vmax.f32 %v2175, 0.0
        %v2417 = vmax.f32 %v2177, 0.0
        %v2418 = vmax.f32 %v2180, 0.0
        %v2419 = vmax.f32 %v2182, 0.0
        %v2420 = vmax.f32 %v2185, 0.0
        %v2421 = vmax.f32 %v2187, 0.0
        %v2422 = vmax.f32 %v2190, 0.0
        %v2423 = vmax.f32 %v2192, 0.0
        %v2424 = vmax.f32 %v2195, 0.0
        %v2425 = vmax.f32 %v2197, 0.0
        %v2426 = vmax.f32 %v2200, 0.0
        %v2427 = vmax.f32 %v2202, 0.0
        %v2428 = vmax.f32 %v2205, 0.0
        %v2429 = vmax.f32 %v2207, 0.0
        %v2430 = vmax.f32 %v2210, 0.0
        %v2431 = vmax.f32 %v2212, 0.0
        %v2432 = vmax.f32 %v2215, 0.0
        %v2433 = vmax.f32 %v2217, 0.0
        %v2434 = vmax.f32 %v2220, 0.0
        %v2435 = vmax.f32 %v2222, 0.0
        %v2436 = vmax.f32 %v2225, 0.0
        %v2437 = vmax.f32 %v2227, 0.0
        %v2438 = vmax.f32 %v2230, 0.0
        %v2439 = vmax.f32 %v2232, 0.0
        %v2440 = vmax.f32 %v2235, 0.0
        %v2441 = vmax.f32 %v2237, 0.0
        %v2442 = vmax.f32 %v2240, 0.0
        %v2443 = vmax.f32 %v2242, 0.0
        %v2444 = vmax.f32 %v2245, 0.0
        %v2445 = vmax.f32 %v2247, 0.0
        %v2446 = vmax.f32 %v2250, 0.0
        %v2447 = vmax.f32 %v2252, 0.0
        %v2448 = vmax.f32 %v2255, 0.0
        %v2449 = vmax.f32 %v2257, 0.0
        %v2450 = vmax.f32 %v2260, 0.0
        %v2451 = vmax.f32 %v2262, 0.0
        %v2452 = vmax.f32 %v2265, 0.0
        %v2453 = vmax.f32 %v2267, 0.0
        %v2454 = vmax.f32 %v2270, 0.0
        %v2455 = vmax.f32 %v2272, 0.0
        %v2456 = vmax.f32 %v2275, 0.0
        %v2457 = vmax.f32 %v2277, 0.0
        %v2458 = vmax.f32 %v2280, 0.0
        %v2459 = vmax.f32 %v2282, 0.0
        %v2460 = vmax.f32 %v2285, 0.0
        %v2461 = vmax.f32 %v2287, 0.0
        %v2462 = vmax.f32 %v2290, 0.0
        %v2463 = vmax.f32 %v2292, 0.0
        %v2464 = vmax.f32 %v2295, 0.0
        %v2465 = vmax.f32 %v2297, 0.0
        %v2466 = vmax.f32 %v2300, 0.0
        %v2467 = vmax.f32 %v2302, 0.0
        %v2468 = vmax.f32 %v2305, 0.0
        %v2469 = vmax.f32 %v2307, 0.0
        %v2470 = vmax.f32 %v2310, 0.0
        %v2471 = vmax.f32 %v2312, 0.0
        %v2472 = vmax.f32 %v2315, 0.0
        %v2473 = vmax.f32 %v2317, 0.0
        %v2474 = vmax.f32 %v2320, 0.0
        %v2475 = vmax.f32 %v2322, 0.0
        %v2476 = vmax.f32 %v2325, 0.0
        %v2477 = vmax.f32 %v2327, 0.0
        %v2478 = vmax.f32 %v2330, 0.0
        %v2479 = vmax.f32 %v2332, 0.0
        %v2480 = vmax.f32 %v2335, 0.0
        %v2481 = vmax.f32 %v2337, 0.0
        %v2482 = vmax.f32 %v2340, 0.0
        %v2483 = vmax.f32 %v2342, 0.0
        %v2484 = vmax.f32 %v2345, 0.0
        %v2485 = vmax.f32 %v2347, 0.0
        %v2486 = vmax.f32 %v2350, 0.0
        %v2487 = vmax.f32 %v2352, 0.0
        %v2488 = vmax.f32 %v2355, 0.0
        %v2489 = vmax.f32 %v2357, 0.0
        %v2490 = vmax.f32 %v2360, 0.0
        %v2491 = vmax.f32 %v2362, 0.0
        %v2492 = vpack.c.bf16 %v2365, %v2364
        %v2493 = vpack.c.bf16 %v2367, %v2366
        %v2494 = vpack.c.bf16 %v2369, %v2368
        %v2495 = vpack.c.bf16 %v2371, %v2370
        %v2496 = vpack.c.bf16 %v2373, %v2372
        %v2497 = vpack.c.bf16 %v2375, %v2374
        %v2498 = vpack.c.bf16 %v2377, %v2376
        %v2499 = vpack.c.bf16 %v2379, %v2378
        %v2500 = vpack.c.bf16 %v2381, %v2380
        %v2501 = vpack.c.bf16 %v2383, %v2382
        %v2502 = vpack.c.bf16 %v2385, %v2384
        %v2503 = vpack.c.bf16 %v2387, %v2386
        %v2504 = vpack.c.bf16 %v2389, %v2388
        %v2505 = vpack.c.bf16 %v2391, %v2390
        %v2506 = vpack.c.bf16 %v2393, %v2392
        %v2507 = vpack.c.bf16 %v2395, %v2394
        %v2508 = vpack.c.bf16 %v2397, %v2396
        %v2509 = vpack.c.bf16 %v2399, %v2398
        %v2510 = vpack.c.bf16 %v2401, %v2400
        %v2511 = vpack.c.bf16 %v2403, %v2402
        %v2512 = vpack.c.bf16 %v2405, %v2404
        %v2513 = vpack.c.bf16 %v2407, %v2406
        %v2514 = vpack.c.bf16 %v2409, %v2408
        %v2515 = vpack.c.bf16 %v2411, %v2410
        %v2516 = vpack.c.bf16 %v2413, %v2412
        %v2517 = vpack.c.bf16 %v2415, %v2414
        %v2518 = vpack.c.bf16 %v2417, %v2416
        %v2519 = vpack.c.bf16 %v2419, %v2418
        %v2520 = vpack.c.bf16 %v2421, %v2420
        %v2521 = vpack.c.bf16 %v2423, %v2422
        %v2522 = vpack.c.bf16 %v2425, %v2424
        %v2523 = vpack.c.bf16 %v2427, %v2426
        %v2524 = vpack.c.bf16 %v2429, %v2428
        %v2525 = vpack.c.bf16 %v2431, %v2430
        %v2526 = vpack.c.bf16 %v2433, %v2432
        %v2527 = vpack.c.bf16 %v2435, %v2434
        %v2528 = vpack.c.bf16 %v2437, %v2436
        %v2529 = vpack.c.bf16 %v2439, %v2438
        %v2530 = vpack.c.bf16 %v2441, %v2440
        %v2531 = vpack.c.bf16 %v2443, %v2442
        %v2532 = vpack.c.bf16 %v2445, %v2444
        %v2533 = vpack.c.bf16 %v2447, %v2446
        %v2534 = vpack.c.bf16 %v2449, %v2448
        %v2535 = vpack.c.bf16 %v2451, %v2450
        %v2536 = vpack.c.bf16 %v2453, %v2452
        %v2537 = vpack.c.bf16 %v2455, %v2454
        %v2538 = vpack.c.bf16 %v2457, %v2456
        %v2539 = vpack.c.bf16 %v2459, %v2458
        %v2540 = vpack.c.bf16 %v2461, %v2460
        %v2541 = vpack.c.bf16 %v2463, %v2462
        %v2542 = vpack.c.bf16 %v2465, %v2464
        %v2543 = vpack.c.bf16 %v2467, %v2466
        %v2544 = vpack.c.bf16 %v2469, %v2468
        %v2545 = vpack.c.bf16 %v2471, %v2470
        %v2546 = vpack.c.bf16 %v2473, %v2472
        %v2547 = vpack.c.bf16 %v2475, %v2474
        %v2548 = vpack.c.bf16 %v2477, %v2476
        %v2549 = vpack.c.bf16 %v2479, %v2478
        %v2550 = vpack.c.bf16 %v2481, %v2480
        %v2551 = vpack.c.bf16 %v2483, %v2482
        %v2552 = vpack.c.bf16 %v2485, %v2484
        %v2553 = vpack.c.bf16 %v2487, %v2486
        %v2554 = vpack.c.bf16 %v2489, %v2488
        %v2555 = vpack.c.bf16 %v2491, %v2490
        %v2556 = vld [vmem:[%s8] sm:$0xf]
        %v2557 = vld [vmem:[%s8 + $0x4] sm:$0xf]
        %v2558 = vld [vmem:[%s8 + $0x8] sm:$0xf]
        %v2559 = vld [vmem:[%s8 + $0xc] sm:$0xf]
        %v2560 = vld [vmem:[%s9] sm:$0x1]
        %v2562 = vperm.slane %v2560, 0
        %v2568 = vunpack.c.l.b16 %v2556
        %v2569 = vunpack.c.l.b16 %v2557
        %v2570 = vunpack.c.l.b16 %v2558
        %v2571 = vunpack.c.l.b16 %v2559
        %v2572 = vpack.c.b16 %v2569, %v2568
        %v2573 = vpack.c.b16 %v2571, %v2570
        %v2577 = vsel %vm824, %v2492, 0
        %v2580 = vsel %vm824, %v2493, 0
        %v2583 = vsel %vm824, %v2494, 0
        %v2586 = vsel %vm824, %v2495, 0
        %v2589 = vsel %vm824, %v2496, 0
        %v2592 = vsel %vm824, %v2497, 0
        %v2595 = vsel %vm824, %v2498, 0
        %v2598 = vsel %vm824, %v2499, 0
        %v2601 = vsel %vm824, %v2500, 0
        %v2604 = vsel %vm824, %v2501, 0
        %v2607 = vsel %vm824, %v2502, 0
        %v2610 = vsel %vm824, %v2503, 0
        %v2613 = vsel %vm824, %v2504, 0
        %v2616 = vsel %vm824, %v2505, 0
        %v2619 = vsel %vm824, %v2506, 0
        %v2622 = vsel %vm824, %v2507, 0
        %v2625 = vsel %vm824, %v2508, 0
        %v2628 = vsel %vm824, %v2509, 0
        %v2631 = vsel %vm824, %v2510, 0
        %v2634 = vsel %vm824, %v2511, 0
        %v2637 = vsel %vm824, %v2512, 0
        %v2640 = vsel %vm824, %v2513, 0
        %v2643 = vsel %vm824, %v2514, 0
        %v2646 = vsel %vm824, %v2515, 0
        %v2649 = vsel %vm824, %v2516, 0
        %v2652 = vsel %vm824, %v2517, 0
        %v2655 = vsel %vm824, %v2518, 0
        %v2658 = vsel %vm824, %v2519, 0
        %v2661 = vsel %vm824, %v2520, 0
        %v2664 = vsel %vm824, %v2521, 0
        %v2667 = vsel %vm824, %v2522, 0
        %v2670 = vsel %vm824, %v2523, 0
        %v2673 = vsel %vm824, %v2524, 0
        %v2676 = vsel %vm824, %v2525, 0
        %v2679 = vsel %vm824, %v2526, 0
        %v2682 = vsel %vm824, %v2527, 0
        %v2685 = vsel %vm824, %v2528, 0
        %v2688 = vsel %vm824, %v2529, 0
        %v2691 = vsel %vm824, %v2530, 0
        %v2694 = vsel %vm824, %v2531, 0
        %v2697 = vsel %vm824, %v2532, 0
        %v2700 = vsel %vm824, %v2533, 0
        %v2703 = vsel %vm824, %v2534, 0
        %v2706 = vsel %vm824, %v2535, 0
        %v2709 = vsel %vm824, %v2536, 0
        %v2712 = vsel %vm824, %v2537, 0
        %v2715 = vsel %vm824, %v2538, 0
        %v2718 = vsel %vm824, %v2539, 0
        %v2721 = vsel %vm824, %v2540, 0
        %v2724 = vsel %vm824, %v2541, 0
        %v2727 = vsel %vm824, %v2542, 0
        %v2730 = vsel %vm824, %v2543, 0
        %v2733 = vsel %vm824, %v2544, 0
        %v2736 = vsel %vm824, %v2545, 0
        %v2739 = vsel %vm824, %v2546, 0
        %v2742 = vsel %vm824, %v2547, 0
        %v2745 = vsel %vm824, %v2548, 0
        %v2748 = vsel %vm824, %v2549, 0
        %v2751 = vsel %vm824, %v2550, 0
        %v2754 = vsel %vm824, %v2551, 0
        %v2757 = vsel %vm824, %v2552, 0
        %v2760 = vsel %vm824, %v2553, 0
        %v2763 = vsel %vm824, %v2554, 0
        %v2766 = vsel %vm824, %v2555, 0
        %2768 = vmatpush.bf16.msra.mxu0 0
        %2769 = vmatpush.bf16.msra.mxu0 0
        %2770 = vmatpush.bf16.msra.mxu0 0
        %2771 = vmatpush.bf16.msra.mxu0 0
        %2772 = vmatpush.bf16.msra.mxu0 0
        %2773 = vmatpush.bf16.msra.mxu0 0
        %2774 = vmatpush.bf16.msra.mxu0 %v2573
        %2775 = vmatpush.bf16.msra.mxu0 %v2572
        %2776 = vmatmul.bf16.gmra.mxu0 %v2577
        %v2777 = vpop.f32.mrf.mxu0
        %v2778 = vadd.f32 %v2562, %v2777
        %v2779 = vpop.f32.mrf.mxu0
        %v2780 = vadd.f32 %v2562, %v2779
        %2781 = vmatmul.bf16.gmra.mxu0 %v2580
        %v2782 = vpop.f32.mrf.mxu0
        %v2783 = vadd.f32 %v2562, %v2782
        %v2784 = vpop.f32.mrf.mxu0
        %v2785 = vadd.f32 %v2562, %v2784
        %2786 = vmatmul.bf16.gmra.mxu0 %v2583
        %v2787 = vpop.f32.mrf.mxu0
        %v2788 = vadd.f32 %v2562, %v2787
        %v2789 = vpop.f32.mrf.mxu0
        %v2790 = vadd.f32 %v2562, %v2789
        %2791 = vmatmul.bf16.gmra.mxu0 %v2586
        %v2792 = vpop.f32.mrf.mxu0
        %v2793 = vadd.f32 %v2562, %v2792
        %v2794 = vpop.f32.mrf.mxu0
        %v2795 = vadd.f32 %v2562, %v2794
        %2796 = vmatmul.bf16.gmra.mxu0 %v2589
        %v2797 = vpop.f32.mrf.mxu0
        %v2798 = vadd.f32 %v2562, %v2797
        %v2799 = vpop.f32.mrf.mxu0
        %v2800 = vadd.f32 %v2562, %v2799
        %2801 = vmatmul.bf16.gmra.mxu0 %v2592
        %v2802 = vpop.f32.mrf.mxu0
        %v2803 = vadd.f32 %v2562, %v2802
        %v2804 = vpop.f32.mrf.mxu0
        %v2805 = vadd.f32 %v2562, %v2804
        %2806 = vmatmul.bf16.gmra.mxu0 %v2595
        %v2807 = vpop.f32.mrf.mxu0
        %v2808 = vadd.f32 %v2562, %v2807
        %v2809 = vpop.f32.mrf.mxu0
        %v2810 = vadd.f32 %v2562, %v2809
        %2811 = vmatmul.bf16.gmra.mxu0 %v2598
        %v2812 = vpop.f32.mrf.mxu0
        %v2813 = vadd.f32 %v2562, %v2812
        %v2814 = vpop.f32.mrf.mxu0
        %v2815 = vadd.f32 %v2562, %v2814
        %2816 = vmatmul.bf16.gmra.mxu0 %v2601
        %v2817 = vpop.f32.mrf.mxu0
        %v2818 = vadd.f32 %v2562, %v2817
        %v2819 = vpop.f32.mrf.mxu0
        %v2820 = vadd.f32 %v2562, %v2819
        %2821 = vmatmul.bf16.gmra.mxu0 %v2604
        %v2822 = vpop.f32.mrf.mxu0
        %v2823 = vadd.f32 %v2562, %v2822
        %v2824 = vpop.f32.mrf.mxu0
        %v2825 = vadd.f32 %v2562, %v2824
        %2826 = vmatmul.bf16.gmra.mxu0 %v2607
        %v2827 = vpop.f32.mrf.mxu0
        %v2828 = vadd.f32 %v2562, %v2827
        %v2829 = vpop.f32.mrf.mxu0
        %v2830 = vadd.f32 %v2562, %v2829
        %2831 = vmatmul.bf16.gmra.mxu0 %v2610
        %v2832 = vpop.f32.mrf.mxu0
        %v2833 = vadd.f32 %v2562, %v2832
        %v2834 = vpop.f32.mrf.mxu0
        %v2835 = vadd.f32 %v2562, %v2834
        %2836 = vmatmul.bf16.gmra.mxu0 %v2613
        %v2837 = vpop.f32.mrf.mxu0
        %v2838 = vadd.f32 %v2562, %v2837
        %v2839 = vpop.f32.mrf.mxu0
        %v2840 = vadd.f32 %v2562, %v2839
        %2841 = vmatmul.bf16.gmra.mxu0 %v2616
        %v2842 = vpop.f32.mrf.mxu0
        %v2843 = vadd.f32 %v2562, %v2842
        %v2844 = vpop.f32.mrf.mxu0
        %v2845 = vadd.f32 %v2562, %v2844
        %2846 = vmatmul.bf16.gmra.mxu0 %v2619
        %v2847 = vpop.f32.mrf.mxu0
        %v2848 = vadd.f32 %v2562, %v2847
        %v2849 = vpop.f32.mrf.mxu0
        %v2850 = vadd.f32 %v2562, %v2849
        %2851 = vmatmul.bf16.gmra.mxu0 %v2622
        %v2852 = vpop.f32.mrf.mxu0
        %v2853 = vadd.f32 %v2562, %v2852
        %v2854 = vpop.f32.mrf.mxu0
        %v2855 = vadd.f32 %v2562, %v2854
        %2856 = vmatmul.bf16.gmra.mxu0 %v2625
        %v2857 = vpop.f32.mrf.mxu0
        %v2858 = vadd.f32 %v2562, %v2857
        %v2859 = vpop.f32.mrf.mxu0
        %v2860 = vadd.f32 %v2562, %v2859
        %2861 = vmatmul.bf16.gmra.mxu0 %v2628
        %v2862 = vpop.f32.mrf.mxu0
        %v2863 = vadd.f32 %v2562, %v2862
        %v2864 = vpop.f32.mrf.mxu0
        %v2865 = vadd.f32 %v2562, %v2864
        %2866 = vmatmul.bf16.gmra.mxu0 %v2631
        %v2867 = vpop.f32.mrf.mxu0
        %v2868 = vadd.f32 %v2562, %v2867
        %v2869 = vpop.f32.mrf.mxu0
        %v2870 = vadd.f32 %v2562, %v2869
        %2871 = vmatmul.bf16.gmra.mxu0 %v2634
        %v2872 = vpop.f32.mrf.mxu0
        %v2873 = vadd.f32 %v2562, %v2872
        %v2874 = vpop.f32.mrf.mxu0
        %v2875 = vadd.f32 %v2562, %v2874
        %2876 = vmatmul.bf16.gmra.mxu0 %v2637
        %v2877 = vpop.f32.mrf.mxu0
        %v2878 = vadd.f32 %v2562, %v2877
        %v2879 = vpop.f32.mrf.mxu0
        %v2880 = vadd.f32 %v2562, %v2879
        %2881 = vmatmul.bf16.gmra.mxu0 %v2640
        %v2882 = vpop.f32.mrf.mxu0
        %v2883 = vadd.f32 %v2562, %v2882
        %v2884 = vpop.f32.mrf.mxu0
        %v2885 = vadd.f32 %v2562, %v2884
        %2886 = vmatmul.bf16.gmra.mxu0 %v2643
        %v2887 = vpop.f32.mrf.mxu0
        %v2888 = vadd.f32 %v2562, %v2887
        %v2889 = vpop.f32.mrf.mxu0
        %v2890 = vadd.f32 %v2562, %v2889
        %2891 = vmatmul.bf16.gmra.mxu0 %v2646
        %v2892 = vpop.f32.mrf.mxu0
        %v2893 = vadd.f32 %v2562, %v2892
        %v2894 = vpop.f32.mrf.mxu0
        %v2895 = vadd.f32 %v2562, %v2894
        %2896 = vmatmul.bf16.gmra.mxu0 %v2649
        %v2897 = vpop.f32.mrf.mxu0
        %v2898 = vadd.f32 %v2562, %v2897
        %v2899 = vpop.f32.mrf.mxu0
        %v2900 = vadd.f32 %v2562, %v2899
        %2901 = vmatmul.bf16.gmra.mxu0 %v2652
        %v2902 = vpop.f32.mrf.mxu0
        %v2903 = vadd.f32 %v2562, %v2902
        %v2904 = vpop.f32.mrf.mxu0
        %v2905 = vadd.f32 %v2562, %v2904
        %2906 = vmatmul.bf16.gmra.mxu0 %v2655
        %v2907 = vpop.f32.mrf.mxu0
        %v2908 = vadd.f32 %v2562, %v2907
        %v2909 = vpop.f32.mrf.mxu0
        %v2910 = vadd.f32 %v2562, %v2909
        %2911 = vmatmul.bf16.gmra.mxu0 %v2658
        %v2912 = vpop.f32.mrf.mxu0
        %v2913 = vadd.f32 %v2562, %v2912
        %v2914 = vpop.f32.mrf.mxu0
        %v2915 = vadd.f32 %v2562, %v2914
        %2916 = vmatmul.bf16.gmra.mxu0 %v2661
        %v2917 = vpop.f32.mrf.mxu0
        %v2918 = vadd.f32 %v2562, %v2917
        %v2919 = vpop.f32.mrf.mxu0
        %v2920 = vadd.f32 %v2562, %v2919
        %2921 = vmatmul.bf16.gmra.mxu0 %v2664
        %v2922 = vpop.f32.mrf.mxu0
        %v2923 = vadd.f32 %v2562, %v2922
        %v2924 = vpop.f32.mrf.mxu0
        %v2925 = vadd.f32 %v2562, %v2924
        %2926 = vmatmul.bf16.gmra.mxu0 %v2667
        %v2927 = vpop.f32.mrf.mxu0
        %v2928 = vadd.f32 %v2562, %v2927
        %v2929 = vpop.f32.mrf.mxu0
        %v2930 = vadd.f32 %v2562, %v2929
        %2931 = vmatmul.bf16.gmra.mxu0 %v2670
        %v2932 = vpop.f32.mrf.mxu0
        %v2933 = vadd.f32 %v2562, %v2932
        %v2934 = vpop.f32.mrf.mxu0
        %v2935 = vadd.f32 %v2562, %v2934
        %2936 = vmatmul.bf16.gmra.mxu0 %v2673
        %v2937 = vpop.f32.mrf.mxu0
        %v2938 = vadd.f32 %v2562, %v2937
        %v2939 = vpop.f32.mrf.mxu0
        %v2940 = vadd.f32 %v2562, %v2939
        %2941 = vmatmul.bf16.gmra.mxu0 %v2676
        %v2942 = vpop.f32.mrf.mxu0
        %v2943 = vadd.f32 %v2562, %v2942
        %v2944 = vpop.f32.mrf.mxu0
        %v2945 = vadd.f32 %v2562, %v2944
        %2946 = vmatmul.bf16.gmra.mxu0 %v2679
        %v2947 = vpop.f32.mrf.mxu0
        %v2948 = vadd.f32 %v2562, %v2947
        %v2949 = vpop.f32.mrf.mxu0
        %v2950 = vadd.f32 %v2562, %v2949
        %2951 = vmatmul.bf16.gmra.mxu0 %v2682
        %v2952 = vpop.f32.mrf.mxu0
        %v2953 = vadd.f32 %v2562, %v2952
        %v2954 = vpop.f32.mrf.mxu0
        %v2955 = vadd.f32 %v2562, %v2954
        %2956 = vmatmul.bf16.gmra.mxu0 %v2685
        %v2957 = vpop.f32.mrf.mxu0
        %v2958 = vadd.f32 %v2562, %v2957
        %v2959 = vpop.f32.mrf.mxu0
        %v2960 = vadd.f32 %v2562, %v2959
        %2961 = vmatmul.bf16.gmra.mxu0 %v2688
        %v2962 = vpop.f32.mrf.mxu0
        %v2963 = vadd.f32 %v2562, %v2962
        %v2964 = vpop.f32.mrf.mxu0
        %v2965 = vadd.f32 %v2562, %v2964
        %2966 = vmatmul.bf16.gmra.mxu0 %v2691
        %v2967 = vpop.f32.mrf.mxu0
        %v2968 = vadd.f32 %v2562, %v2967
        %v2969 = vpop.f32.mrf.mxu0
        %v2970 = vadd.f32 %v2562, %v2969
        %2971 = vmatmul.bf16.gmra.mxu0 %v2694
        %v2972 = vpop.f32.mrf.mxu0
        %v2973 = vadd.f32 %v2562, %v2972
        %v2974 = vpop.f32.mrf.mxu0
        %v2975 = vadd.f32 %v2562, %v2974
        %2976 = vmatmul.bf16.gmra.mxu0 %v2697
        %v2977 = vpop.f32.mrf.mxu0
        %v2978 = vadd.f32 %v2562, %v2977
        %v2979 = vpop.f32.mrf.mxu0
        %v2980 = vadd.f32 %v2562, %v2979
        %2981 = vmatmul.bf16.gmra.mxu0 %v2700
        %v2982 = vpop.f32.mrf.mxu0
        %v2983 = vadd.f32 %v2562, %v2982
        %v2984 = vpop.f32.mrf.mxu0
        %v2985 = vadd.f32 %v2562, %v2984
        %2986 = vmatmul.bf16.gmra.mxu0 %v2703
        %v2987 = vpop.f32.mrf.mxu0
        %v2988 = vadd.f32 %v2562, %v2987
        %v2989 = vpop.f32.mrf.mxu0
        %v2990 = vadd.f32 %v2562, %v2989
        %2991 = vmatmul.bf16.gmra.mxu0 %v2706
        %v2992 = vpop.f32.mrf.mxu0
        %v2993 = vadd.f32 %v2562, %v2992
        %v2994 = vpop.f32.mrf.mxu0
        %v2995 = vadd.f32 %v2562, %v2994
        %2996 = vmatmul.bf16.gmra.mxu0 %v2709
        %v2997 = vpop.f32.mrf.mxu0
        %v2998 = vadd.f32 %v2562, %v2997
        %v2999 = vpop.f32.mrf.mxu0
        %v3000 = vadd.f32 %v2562, %v2999
        %3001 = vmatmul.bf16.gmra.mxu0 %v2712
        %v3002 = vpop.f32.mrf.mxu0
        %v3003 = vadd.f32 %v2562, %v3002
        %v3004 = vpop.f32.mrf.mxu0
        %v3005 = vadd.f32 %v2562, %v3004
        %3006 = vmatmul.bf16.gmra.mxu0 %v2715
        %v3007 = vpop.f32.mrf.mxu0
        %v3008 = vadd.f32 %v2562, %v3007
        %v3009 = vpop.f32.mrf.mxu0
        %v3010 = vadd.f32 %v2562, %v3009
        %3011 = vmatmul.bf16.gmra.mxu0 %v2718
        %v3012 = vpop.f32.mrf.mxu0
        %v3013 = vadd.f32 %v2562, %v3012
        %v3014 = vpop.f32.mrf.mxu0
        %v3015 = vadd.f32 %v2562, %v3014
        %3016 = vmatmul.bf16.gmra.mxu0 %v2721
        %v3017 = vpop.f32.mrf.mxu0
        %v3018 = vadd.f32 %v2562, %v3017
        %v3019 = vpop.f32.mrf.mxu0
        %v3020 = vadd.f32 %v2562, %v3019
        %3021 = vmatmul.bf16.gmra.mxu0 %v2724
        %v3022 = vpop.f32.mrf.mxu0
        %v3023 = vadd.f32 %v2562, %v3022
        %v3024 = vpop.f32.mrf.mxu0
        %v3025 = vadd.f32 %v2562, %v3024
        %3026 = vmatmul.bf16.gmra.mxu0 %v2727
        %v3027 = vpop.f32.mrf.mxu0
        %v3028 = vadd.f32 %v2562, %v3027
        %v3029 = vpop.f32.mrf.mxu0
        %v3030 = vadd.f32 %v2562, %v3029
        %3031 = vmatmul.bf16.gmra.mxu0 %v2730
        %v3032 = vpop.f32.mrf.mxu0
        %v3033 = vadd.f32 %v2562, %v3032
        %v3034 = vpop.f32.mrf.mxu0
        %v3035 = vadd.f32 %v2562, %v3034
        %3036 = vmatmul.bf16.gmra.mxu0 %v2733
        %v3037 = vpop.f32.mrf.mxu0
        %v3038 = vadd.f32 %v2562, %v3037
        %v3039 = vpop.f32.mrf.mxu0
        %v3040 = vadd.f32 %v2562, %v3039
        %3041 = vmatmul.bf16.gmra.mxu0 %v2736
        %v3042 = vpop.f32.mrf.mxu0
        %v3043 = vadd.f32 %v2562, %v3042
        %v3044 = vpop.f32.mrf.mxu0
        %v3045 = vadd.f32 %v2562, %v3044
        %3046 = vmatmul.bf16.gmra.mxu0 %v2739
        %v3047 = vpop.f32.mrf.mxu0
        %v3048 = vadd.f32 %v2562, %v3047
        %v3049 = vpop.f32.mrf.mxu0
        %v3050 = vadd.f32 %v2562, %v3049
        %3051 = vmatmul.bf16.gmra.mxu0 %v2742
        %v3052 = vpop.f32.mrf.mxu0
        %v3053 = vadd.f32 %v2562, %v3052
        %v3054 = vpop.f32.mrf.mxu0
        %v3055 = vadd.f32 %v2562, %v3054
        %3056 = vmatmul.bf16.gmra.mxu0 %v2745
        %v3057 = vpop.f32.mrf.mxu0
        %v3058 = vadd.f32 %v2562, %v3057
        %v3059 = vpop.f32.mrf.mxu0
        %v3060 = vadd.f32 %v2562, %v3059
        %3061 = vmatmul.bf16.gmra.mxu0 %v2748
        %v3062 = vpop.f32.mrf.mxu0
        %v3063 = vadd.f32 %v2562, %v3062
        %v3064 = vpop.f32.mrf.mxu0
        %v3065 = vadd.f32 %v2562, %v3064
        %3066 = vmatmul.bf16.gmra.mxu0 %v2751
        %v3067 = vpop.f32.mrf.mxu0
        %v3068 = vadd.f32 %v2562, %v3067
        %v3069 = vpop.f32.mrf.mxu0
        %v3070 = vadd.f32 %v2562, %v3069
        %3071 = vmatmul.bf16.gmra.mxu0 %v2754
        %v3072 = vpop.f32.mrf.mxu0
        %v3073 = vadd.f32 %v2562, %v3072
        %v3074 = vpop.f32.mrf.mxu0
        %v3075 = vadd.f32 %v2562, %v3074
        %3076 = vmatmul.bf16.gmra.mxu0 %v2757
        %v3077 = vpop.f32.mrf.mxu0
        %v3078 = vadd.f32 %v2562, %v3077
        %v3079 = vpop.f32.mrf.mxu0
        %v3080 = vadd.f32 %v2562, %v3079
        %3081 = vmatmul.bf16.gmra.mxu0 %v2760
        %v3082 = vpop.f32.mrf.mxu0
        %v3083 = vadd.f32 %v2562, %v3082
        %v3084 = vpop.f32.mrf.mxu0
        %v3085 = vadd.f32 %v2562, %v3084
        %3086 = vmatmul.bf16.gmra.mxu0 %v2763
        %v3087 = vpop.f32.mrf.mxu0
        %v3088 = vadd.f32 %v2562, %v3087
        %v3089 = vpop.f32.mrf.mxu0
        %v3090 = vadd.f32 %v2562, %v3089
        %3091 = vmatmul.bf16.gmra.mxu0 %v2766
        %v3092 = vpop.f32.mrf.mxu0
        %v3093 = vadd.f32 %v2562, %v3092
        %v3094 = vpop.f32.mrf.mxu0
        %v3095 = vadd.f32 %v2562, %v3094
        %3096 = vdwg.mxu0
        %v3097 = vmax.f32 %v2778, 0.0
        %v3098 = vmax.f32 %v2780, 0.0
        %v3099 = vmax.f32 %v2783, 0.0
        %v3100 = vmax.f32 %v2785, 0.0
        %v3101 = vmax.f32 %v2788, 0.0
        %v3102 = vmax.f32 %v2790, 0.0
        %v3103 = vmax.f32 %v2793, 0.0
        %v3104 = vmax.f32 %v2795, 0.0
        %v3105 = vmax.f32 %v2798, 0.0
        %v3106 = vmax.f32 %v2800, 0.0
        %v3107 = vmax.f32 %v2803, 0.0
        %v3108 = vmax.f32 %v2805, 0.0
        %v3109 = vmax.f32 %v2808, 0.0
        %v3110 = vmax.f32 %v2810, 0.0
        %v3111 = vmax.f32 %v2813, 0.0
        %v3112 = vmax.f32 %v2815, 0.0
        %v3113 = vmax.f32 %v2818, 0.0
        %v3114 = vmax.f32 %v2820, 0.0
        %v3115 = vmax.f32 %v2823, 0.0
        %v3116 = vmax.f32 %v2825, 0.0
        %v3117 = vmax.f32 %v2828, 0.0
        %v3118 = vmax.f32 %v2830, 0.0
        %v3119 = vmax.f32 %v2833, 0.0
        %v3120 = vmax.f32 %v2835, 0.0
        %v3121 = vmax.f32 %v2838, 0.0
        %v3122 = vmax.f32 %v2840, 0.0
        %v3123 = vmax.f32 %v2843, 0.0
        %v3124 = vmax.f32 %v2845, 0.0
        %v3125 = vmax.f32 %v2848, 0.0
        %v3126 = vmax.f32 %v2850, 0.0
        %v3127 = vmax.f32 %v2853, 0.0
        %v3128 = vmax.f32 %v2855, 0.0
        %v3129 = vmax.f32 %v2858, 0.0
        %v3130 = vmax.f32 %v2860, 0.0
        %v3131 = vmax.f32 %v2863, 0.0
        %v3132 = vmax.f32 %v2865, 0.0
        %v3133 = vmax.f32 %v2868, 0.0
        %v3134 = vmax.f32 %v2870, 0.0
        %v3135 = vmax.f32 %v2873, 0.0
        %v3136 = vmax.f32 %v2875, 0.0
        %v3137 = vmax.f32 %v2878, 0.0
        %v3138 = vmax.f32 %v2880, 0.0
        %v3139 = vmax.f32 %v2883, 0.0
        %v3140 = vmax.f32 %v2885, 0.0
        %v3141 = vmax.f32 %v2888, 0.0
        %v3142 = vmax.f32 %v2890, 0.0
        %v3143 = vmax.f32 %v2893, 0.0
        %v3144 = vmax.f32 %v2895, 0.0
        %v3145 = vmax.f32 %v2898, 0.0
        %v3146 = vmax.f32 %v2900, 0.0
        %v3147 = vmax.f32 %v2903, 0.0
        %v3148 = vmax.f32 %v2905, 0.0
        %v3149 = vmax.f32 %v2908, 0.0
        %v3150 = vmax.f32 %v2910, 0.0
        %v3151 = vmax.f32 %v2913, 0.0
        %v3152 = vmax.f32 %v2915, 0.0
        %v3153 = vmax.f32 %v2918, 0.0
        %v3154 = vmax.f32 %v2920, 0.0
        %v3155 = vmax.f32 %v2923, 0.0
        %v3156 = vmax.f32 %v2925, 0.0
        %v3157 = vmax.f32 %v2928, 0.0
        %v3158 = vmax.f32 %v2930, 0.0
        %v3159 = vmax.f32 %v2933, 0.0
        %v3160 = vmax.f32 %v2935, 0.0
        %v3161 = vmax.f32 %v2938, 0.0
        %v3162 = vmax.f32 %v2940, 0.0
        %v3163 = vmax.f32 %v2943, 0.0
        %v3164 = vmax.f32 %v2945, 0.0
        %v3165 = vmax.f32 %v2948, 0.0
        %v3166 = vmax.f32 %v2950, 0.0
        %v3167 = vmax.f32 %v2953, 0.0
        %v3168 = vmax.f32 %v2955, 0.0
        %v3169 = vmax.f32 %v2958, 0.0
        %v3170 = vmax.f32 %v2960, 0.0
        %v3171 = vmax.f32 %v2963, 0.0
        %v3172 = vmax.f32 %v2965, 0.0
        %v3173 = vmax.f32 %v2968, 0.0
        %v3174 = vmax.f32 %v2970, 0.0
        %v3175 = vmax.f32 %v2973, 0.0
        %v3176 = vmax.f32 %v2975, 0.0
        %v3177 = vmax.f32 %v2978, 0.0
        %v3178 = vmax.f32 %v2980, 0.0
        %v3179 = vmax.f32 %v2983, 0.0
        %v3180 = vmax.f32 %v2985, 0.0
        %v3181 = vmax.f32 %v2988, 0.0
        %v3182 = vmax.f32 %v2990, 0.0
        %v3183 = vmax.f32 %v2993, 0.0
        %v3184 = vmax.f32 %v2995, 0.0
        %v3185 = vmax.f32 %v2998, 0.0
        %v3186 = vmax.f32 %v3000, 0.0
        %v3187 = vmax.f32 %v3003, 0.0
        %v3188 = vmax.f32 %v3005, 0.0
        %v3189 = vmax.f32 %v3008, 0.0
        %v3190 = vmax.f32 %v3010, 0.0
        %v3191 = vmax.f32 %v3013, 0.0
        %v3192 = vmax.f32 %v3015, 0.0
        %v3193 = vmax.f32 %v3018, 0.0
        %v3194 = vmax.f32 %v3020, 0.0
        %v3195 = vmax.f32 %v3023, 0.0
        %v3196 = vmax.f32 %v3025, 0.0
        %v3197 = vmax.f32 %v3028, 0.0
        %v3198 = vmax.f32 %v3030, 0.0
        %v3199 = vmax.f32 %v3033, 0.0
        %v3200 = vmax.f32 %v3035, 0.0
        %v3201 = vmax.f32 %v3038, 0.0
        %v3202 = vmax.f32 %v3040, 0.0
        %v3203 = vmax.f32 %v3043, 0.0
        %v3204 = vmax.f32 %v3045, 0.0
        %v3205 = vmax.f32 %v3048, 0.0
        %v3206 = vmax.f32 %v3050, 0.0
        %v3207 = vmax.f32 %v3053, 0.0
        %v3208 = vmax.f32 %v3055, 0.0
        %v3209 = vmax.f32 %v3058, 0.0
        %v3210 = vmax.f32 %v3060, 0.0
        %v3211 = vmax.f32 %v3063, 0.0
        %v3212 = vmax.f32 %v3065, 0.0
        %v3213 = vmax.f32 %v3068, 0.0
        %v3214 = vmax.f32 %v3070, 0.0
        %v3215 = vmax.f32 %v3073, 0.0
        %v3216 = vmax.f32 %v3075, 0.0
        %v3217 = vmax.f32 %v3078, 0.0
        %v3218 = vmax.f32 %v3080, 0.0
        %v3219 = vmax.f32 %v3083, 0.0
        %v3220 = vmax.f32 %v3085, 0.0
        %v3221 = vmax.f32 %v3088, 0.0
        %v3222 = vmax.f32 %v3090, 0.0
        %v3223 = vmax.f32 %v3093, 0.0
        %v3224 = vmax.f32 %v3095, 0.0
        %v3225 = vsub.f32 %v3097, %v3161
        %v3226 = vsub.f32 %v3098, %v3162
        %v3227 = vsub.f32 %v3099, %v3163
        %v3228 = vsub.f32 %v3100, %v3164
        %v3229 = vsub.f32 %v3101, %v3165
        %v3230 = vsub.f32 %v3102, %v3166
        %v3231 = vsub.f32 %v3103, %v3167
        %v3232 = vsub.f32 %v3104, %v3168
        %v3233 = vsub.f32 %v3105, %v3169
        %v3234 = vsub.f32 %v3106, %v3170
        %v3235 = vsub.f32 %v3107, %v3171
        %v3236 = vsub.f32 %v3108, %v3172
        %v3237 = vsub.f32 %v3109, %v3173
        %v3238 = vsub.f32 %v3110, %v3174
        %v3239 = vsub.f32 %v3111, %v3175
        %v3240 = vsub.f32 %v3112, %v3176
        %v3241 = vsub.f32 %v3113, %v3177
        %v3242 = vsub.f32 %v3114, %v3178
        %v3243 = vsub.f32 %v3115, %v3179
        %v3244 = vsub.f32 %v3116, %v3180
        %v3245 = vsub.f32 %v3117, %v3181
        %v3246 = vsub.f32 %v3118, %v3182
        %v3247 = vsub.f32 %v3119, %v3183
        %v3248 = vsub.f32 %v3120, %v3184
        %v3249 = vsub.f32 %v3121, %v3185
        %v3250 = vsub.f32 %v3122, %v3186
        %v3251 = vsub.f32 %v3123, %v3187
        %v3252 = vsub.f32 %v3124, %v3188
        %v3253 = vsub.f32 %v3125, %v3189
        %v3254 = vsub.f32 %v3126, %v3190
        %v3255 = vsub.f32 %v3127, %v3191
        %v3256 = vsub.f32 %v3128, %v3192
        %v3257 = vsub.f32 %v3129, %v3193
        %v3258 = vsub.f32 %v3130, %v3194
        %v3259 = vsub.f32 %v3131, %v3195
        %v3260 = vsub.f32 %v3132, %v3196
        %v3261 = vsub.f32 %v3133, %v3197
        %v3262 = vsub.f32 %v3134, %v3198
        %v3263 = vsub.f32 %v3135, %v3199
        %v3264 = vsub.f32 %v3136, %v3200
        %v3265 = vsub.f32 %v3137, %v3201
        %v3266 = vsub.f32 %v3138, %v3202
        %v3267 = vsub.f32 %v3139, %v3203
        %v3268 = vsub.f32 %v3140, %v3204
        %v3269 = vsub.f32 %v3141, %v3205
        %v3270 = vsub.f32 %v3142, %v3206
        %v3271 = vsub.f32 %v3143, %v3207
        %v3272 = vsub.f32 %v3144, %v3208
        %v3273 = vsub.f32 %v3145, %v3209
        %v3274 = vsub.f32 %v3146, %v3210
        %v3275 = vsub.f32 %v3147, %v3211
        %v3276 = vsub.f32 %v3148, %v3212
        %v3277 = vsub.f32 %v3149, %v3213
        %v3278 = vsub.f32 %v3150, %v3214
        %v3279 = vsub.f32 %v3151, %v3215
        %v3280 = vsub.f32 %v3152, %v3216
        %v3281 = vsub.f32 %v3153, %v3217
        %v3282 = vsub.f32 %v3154, %v3218
        %v3283 = vsub.f32 %v3155, %v3219
        %v3284 = vsub.f32 %v3156, %v3220
        %v3285 = vsub.f32 %v3157, %v3221
        %v3286 = vsub.f32 %v3158, %v3222
        %v3287 = vsub.f32 %v3159, %v3223
        %v3288 = vsub.f32 %v3160, %v3224
        %v3289 = vld [vmem:[#allocation2] sm:$0x1]
        %v3290 = vld [vmem:[%s479] sm:$0xf]
        %v3292 = vperm.slane %v3290, 0
        %v3293 = vperm.slane %v3290, 1
        %v3294 = vperm.slane %v3290, 2
        %v3295 = vperm.slane %v3290, 3
        %3300 = vmatpush.msra.mxu0 %v3240
        %3301 = vmatpush.msra.mxu0 %v3239
        %3302 = vmatpush.msra.mxu0 %v3238
        %3303 = vmatpush.msra.mxu0 %v3237
        %3304 = vmatpush.msra.mxu0 %v3236
        %3305 = vmatpush.msra.mxu0 %v3235
        %3306 = vmatpush.msra.mxu0 %v3234
        %3307 = vmatpush.msra.mxu0 %v3233
        %3308 = vmatpush.msra.mxu0 %v3232
        %3309 = vmatpush.msra.mxu0 %v3231
        %3310 = vmatpush.msra.mxu0 %v3230
        %3311 = vmatpush.msra.mxu0 %v3229
        %3312 = vmatpush.msra.mxu0 %v3228
        %3313 = vmatpush.msra.mxu0 %v3227
        %3314 = vmatpush.msra.mxu0 %v3226
        %3315 = vmatpush.msra.mxu0 %v3225
        %3316 = vmatmul.f32.gmra.mxu0 %v3292
        %v3317 = vpop.f32.mrf.mxu0
        %v3318 = vadd.f32 0.0, %v3317
        %3319 = vdwg.mxu0
        %3320 = vmatpush.msra.mxu0 %v3256
        %3321 = vmatpush.msra.mxu0 %v3255
        %3322 = vmatpush.msra.mxu0 %v3254
        %3323 = vmatpush.msra.mxu0 %v3253
        %3324 = vmatpush.msra.mxu0 %v3252
        %3325 = vmatpush.msra.mxu0 %v3251
        %3326 = vmatpush.msra.mxu0 %v3250
        %3327 = vmatpush.msra.mxu0 %v3249
        %3328 = vmatpush.msra.mxu0 %v3248
        %3329 = vmatpush.msra.mxu0 %v3247
        %3330 = vmatpush.msra.mxu0 %v3246
        %3331 = vmatpush.msra.mxu0 %v3245
        %3332 = vmatpush.msra.mxu0 %v3244
        %3333 = vmatpush.msra.mxu0 %v3243
        %3334 = vmatpush.msra.mxu0 %v3242
        %3335 = vmatpush.msra.mxu0 %v3241
        %3336 = vmatmul.f32.gmra.mxu0 %v3293
        %v3337 = vpop.f32.mrf.mxu0
        %v3338 = vadd.f32 %v3318, %v3337
        %3339 = vdwg.mxu0
        %3340 = vmatpush.msra.mxu0 %v3272
        %3341 = vmatpush.msra.mxu0 %v3271
        %3342 = vmatpush.msra.mxu0 %v3270
        %3343 = vmatpush.msra.mxu0 %v3269
        %3344 = vmatpush.msra.mxu0 %v3268
        %3345 = vmatpush.msra.mxu0 %v3267
        %3346 = vmatpush.msra.mxu0 %v3266
        %3347 = vmatpush.msra.mxu0 %v3265
        %3348 = vmatpush.msra.mxu0 %v3264
        %3349 = vmatpush.msra.mxu0 %v3263
        %3350 = vmatpush.msra.mxu0 %v3262
        %3351 = vmatpush.msra.mxu0 %v3261
        %3352 = vmatpush.msra.mxu0 %v3260
        %3353 = vmatpush.msra.mxu0 %v3259
        %3354 = vmatpush.msra.mxu0 %v3258
        %3355 = vmatpush.msra.mxu0 %v3257
        %3356 = vmatmul.f32.gmra.mxu0 %v3294
        %v3357 = vpop.f32.mrf.mxu0
        %v3358 = vadd.f32 %v3338, %v3357
        %3359 = vdwg.mxu0
        %3360 = vmatpush.msra.mxu0 %v3288
        %3361 = vmatpush.msra.mxu0 %v3287
        %3362 = vmatpush.msra.mxu0 %v3286
        %3363 = vmatpush.msra.mxu0 %v3285
        %3364 = vmatpush.msra.mxu0 %v3284
        %3365 = vmatpush.msra.mxu0 %v3283
        %3366 = vmatpush.msra.mxu0 %v3282
        %3367 = vmatpush.msra.mxu0 %v3281
        %3368 = vmatpush.msra.mxu0 %v3280
        %3369 = vmatpush.msra.mxu0 %v3279
        %3370 = vmatpush.msra.mxu0 %v3278
        %3371 = vmatpush.msra.mxu0 %v3277
        %3372 = vmatpush.msra.mxu0 %v3276
        %3373 = vmatpush.msra.mxu0 %v3275
        %3374 = vmatpush.msra.mxu0 %v3274
        %3375 = vmatpush.msra.mxu0 %v3273
        %3376 = vmatmul.f32.gmra.mxu0 %v3295
        %v3377 = vpop.f32.mrf.mxu0
        %v3378 = vadd.f32 %v3358, %v3377
        %3379 = vdwg.mxu0
        %v3380 = vadd.f32 %v3289, %v3378
        %vm3381 = vcmask 253952
        %3382 = vst.msk [vmem:[#allocation2] sm:$0x1] %vm3381, %v3380
        // Predicated region
        $region69: #{tpu_custom_call.1} parent=63 // pred_check
          %p3383 = pneg %p482
        $region70: #{tpu_custom_call.1} parent=63 // pred_check_branch
          %3385 = sbr.rel (%p3383) target = $region72
        $region71: #{tpu_custom_call.1} parent=63 // pred_region
          %v3386 = vld [vmem:[#allocation2] sm:$0x1]
          %v3387 = vld [vmem:[%s10] sm:$0xff]
          %v3388 = vld [vmem:[%s10 + $0x8] sm:$0xff]
          %v3389 = vld [vmem:[%s10 + $0x10] sm:$0xff]
          %v3390 = vld [vmem:[%s10 + $0x18] sm:$0xff]
          %v3392 = vsel %vm824, %v3386, 0
          %3394 = vmatpush.msra.mxu0 0.0
          %3395 = vmatpush.msra.mxu0 0.0
          %3396 = vmatpush.msra.mxu0 0.0
          %3397 = vmatpush.msra.mxu0 0.0
          %3398 = vmatpush.msra.mxu0 0.0
          %3399 = vmatpush.msra.mxu0 0.0
          %3400 = vmatpush.msra.mxu0 0.0
          %3401 = vmatpush.msra.mxu0 0.0
          %3402 = vmatpush.msra.mxu0 0.0
          %3403 = vmatpush.msra.mxu0 0.0
          %3404 = vmatpush.msra.mxu0 0.0
          %3405 = vmatpush.msra.mxu0 0.0
          %3406 = vmatpush.msra.mxu0 %v3390
          %3407 = vmatpush.msra.mxu0 %v3389
          %3408 = vmatpush.msra.mxu0 %v3388
          %3409 = vmatpush.msra.mxu0 %v3387
          %3410 = vmatmul.f32.gmra.mxu0 %v3392
          %v3411 = vpop.f32.mrf.mxu0
          %v3412 = vadd.f32 0.0, %v3411
          %3413 = vdwg.mxu0
          %vm3414 = vcmask 16384
          %3415 = vst.msk [vmem:[%s451] sm:$0x1] %vm3414, %v3412
        $region72: #{tpu_custom_call.1} parent=63 // pred_fallthru
          _
        %s3416 = sand.u32 %s297, 1
        %s3417 = scalar_lea.sflag [#allocation4], %s3416
        %s3418 = sand.u32 %s297, 1
        %s3419 = scalar_lea.vmem [#allocation3], %s3418
        // Predicated region
        $region73: #{tpu_custom_call.1} parent=63 // pred_check
          %p3420 = pneg %p307
        $region74: #{tpu_custom_call.1} parent=63 // pred_check_branch
          %3422 = sbr.rel (%p3420) target = $region76
        $region75: #{tpu_custom_call.1} parent=63 // pred_region
          %3424 = vsyncadd %s3417, 0
          %s3425 = scalar_lea.hbm %s11, %s29
          %s3427 = sshll.u32 %s3419, 4
          %s3428 = int_to_ptr.vmem [resolvable:$true] %s3427
          %s3429 = sshll.u32 %s3425, 4
          %s3430 = int_to_ptr.hbm [resolvable:$true] %s3429
          %3432 = dma.vmem_to_hbm [thread:$0]  %s3428, 16, %s3430, %s3417
        $region76: #{tpu_custom_call.1} parent=63 // pred_fallthru
          _
      $region64: #{tpu_custom_call.1} parent=5 // pred_fallthru
        _
      %p3433 = scmp.le.s32.totalorder 2, %s20
      // Predicated region
      $region77: #{tpu_custom_call.1} parent=5 // pred_check
        %p3434 = pneg %p3433
      $region78: #{tpu_custom_call.1} parent=5 // pred_check_branch
        %3436 = sbr.rel (%p3434) target = $region80
      $region79: #{tpu_custom_call.1} parent=5 // pred_region
        %s3437 = ssub.s32 %s20, 2
        // Predicated region
        $region81: #{tpu_custom_call.1} parent=79 // pred_check
          %p3438 = pneg %p313
        $region82: #{tpu_custom_call.1} parent=79 // pred_check_branch
          %3440 = sbr.rel (%p3438) target = $region84
        $region83: #{tpu_custom_call.1} parent=79 // pred_region
          %s3441 = sand.u32 %s298, 1
          %s3442 = scalar_lea.sflag [#allocation4], %s3441
          %s3443 = sand.u32 %s298, 1
          %s3444 = scalar_lea.vmem [#allocation3], %s3443
          %3446 = dma.done %s3442, 16
        $region84: #{tpu_custom_call.1} parent=79 // pred_fallthru
          _
      $region80: #{tpu_custom_call.1} parent=5 // pred_fallthru
        _
    $region6: #{tpu_custom_call.1} parent=1 // loop_footer
      %s24 = sadd.s32 1, %s20
    $region7: #{tpu_custom_call.1} parent=1 // loop_footer_branch
      %19 = sbr.rel target = $region3
    $region8: #{tpu_custom_call.1} parent=1 // loop_exit
      _
    %3447 = vsyncpa [#allocation4], 1
    %s3448 = scalar_lea.sflag [#allocation4], 1
    %3449 = vsyncpa %s3448, 1

</llo_original>
